<compile_context>
chip_gen: v7x
topology: tpu7x:2x2x1
jax: 0.10.0
libtpu: 0.0.40
codegen_flags: <defaults>
</compile_context>

<pallas_src>
import jax
import jax.numpy as jnp
from jax import lax
from jax.experimental import pallas as pl
from jax.experimental.pallas import tpu as pltpu  # noqa: F401  (kept for TPU-specific tuning hooks)

# ------------------------------ config --------------------------------------
B = 2             # batch
S_SRC = 8         # source sequence length
S_TGT = 8         # target sequence length
D_EMB = 16        # enc_d_emb == dec_d_emb
D_HID = 32        # enc_d_hid == dec_d_hid (required by the attention math)
ENC_N_LAYER = 1   # kernel hardcodes a single encoder RNN layer
DEC_N_LAYER = 2   # kernel hardcodes two decoder attention-RNN layers
N_VOCAB_ENC = 37
N_VOCAB_DEC = 41
IS_BIDIR = False  # unidirectional encoder
V_PAD = 128       # vocab padded to 128 lanes for the single lane-dense store
NEG_INF = -1e30

SB = S_SRC * B
TB = S_TGT * B


# ------------------- packed parameter-slab layout (static) -------------------
def _build_layout():
    entries = [
        # ---- weights (pre-transposed to x @ W layout; folds applied) ----
        ("eemb_w1", N_VOCAB_ENC, D_HID),       # enc_emb @ enc_w1
        ("ew2", D_HID, D_HID),
        ("ewih", D_HID, D_HID),
        ("ewhh", D_HID, D_HID),
        ("demb_w1", N_VOCAB_DEC, D_HID),       # dec_emb @ dec_w1
        ("dw2", D_HID, D_HID),
        ("g_w1", D_HID * (IS_BIDIR + 1), D_HID * DEC_N_LAYER),
        ("g_w2", D_HID * DEC_N_LAYER, D_HID * DEC_N_LAYER),
        ("wih0", D_HID, D_HID),                # layer-0 input->hidden (hoisted)
        ("w0cat", 2 * D_HID, D_HID),           # [Wc0; Whh0]
        ("w1cat", 3 * D_HID, D_HID),           # [Wih1; Wc1; Whh1]
        ("h_w1", D_HID, D_HID),
        ("h_w2o", D_HID, V_PAD),               # h_w2 @ (tied emb.T, lane-padded)
        # ---- constant block-"diagonal" additive attention mask ----
        ("attn_mask", B, SB),
        # ---- biases (folded where applicable) ----
        ("eb1", 1, D_HID), ("eb2", 1, D_HID), ("ebrnn", 1, D_HID),
        ("db1", 1, D_HID), ("db2", 1, D_HID),
        ("g_b1", 1, D_HID * DEC_N_LAYER), ("g_b2", 1, D_HID * DEC_N_LAYER),
        ("bc0", 1, D_HID), ("bc1", 1, D_HID),
        ("h_b1", 1, D_HID), ("h_b2o", 1, V_PAD),
    ]
    layout = {}
    off = 0
    for name, r, c in entries:
        layout[name] = (off, r, c)
        off += ((r + 7) // 8) * 8              # 8-sublane aligned rows
    return layout, off


W_LAYOUT, W_ROWS = _build_layout()


# --------------------------- fused forward kernel ----------------------------
def _attn_rnn_fused_kernel(ids_ref, w_ref, o_ref):
    f32 = jnp.float32
    H = D_HID

    def mm(a, b):
        return jnp.dot(a, b, preferred_element_type=f32)

    def wld(name):
        r0, r, c = W_LAYOUT[name]
        return w_ref[r0:r0 + r, 0:c]

    # packed integer inputs: [src (time-major) | tgt (time-major) | src_len]
    src_ids = ids_ref[0:SB, :]                  # (SB,1)
    tgt_ids = ids_ref[SB:SB + TB, :]            # (TB,1)
    srclen = ids_ref[SB + TB:SB + TB + B, :]    # (B,1)

    # ================================ encoder ================================
    # embedding lookup as one-hot matmul; embedding @ first-linear pre-folded.
    oh_src = jnp.where(
        lax.broadcasted_iota(jnp.int32, (SB, N_VOCAB_ENC), 1) == src_ids,
        1.0, 0.0).astype(f32)
    x = jnp.maximum(mm(oh_src, wld("eemb_w1")) + wld("eb1"), 0.0)
    x = jnp.maximum(mm(x, wld("ew2")) + wld("eb2"), 0.0)             # (SB,H)

    # single-layer Elman RNN (tanh), zero initial hidden; x@W_ih hoisted.
    xih = mm(x, wld("ewih")) + wld("ebrnn")                          # (SB,H)
    ewhh = wld("ewhh")
    h = jnp.tanh(xih[0:B, :])                    # h_{-1} = 0  =>  h@Whh = 0
    enc_states = [h]
    for t in range(1, S_SRC):                    # fully unrolled
        h = jnp.tanh(xih[t * B:(t + 1) * B, :] + mm(h, ewhh))
        enc_states.append(h)
    enc_full = jnp.concatenate(enc_states, axis=0)                   # (SB,H)
    enc_t = enc_full.T                           # (H,SB) — transpose hoisted once

    # enc_hid = enc_out[b, src_len[b]-1] via one-hot selection matmul (MXU)
    col = lax.broadcasted_iota(jnp.int32, (B, SB), 1)
    row = lax.broadcasted_iota(jnp.int32, (B, SB), 0)
    want = (srclen - 1) * B + row
    sel = jnp.where(col == want, 1.0, 0.0).astype(f32)
    enc_hid = mm(sel, enc_full)                                      # (B,H)

    # ========================= decoder: enc_to_hid ===========================
    g = jnp.maximum(mm(enc_hid, wld("g_w1")) + wld("g_b1"), 0.0)
    g = jnp.maximum(mm(g, wld("g_w2")) + wld("g_b2"), 0.0)           # (B, L*H)
    # torch .reshape(L,B,H): layer-l initial hidden = row l of g split into two
    # H-lane halves (valid because B == DEC_N_LAYER == 2).  Pure value slices.
    h0 = jnp.concatenate([g[0:1, 0:H], g[0:1, H:2 * H]], axis=0)     # layer-0 h
    h1 = jnp.concatenate([g[1:2, 0:H], g[1:2, H:2 * H]], axis=0)     # layer-1 h

    # ========================= decoder: emb_to_hid ===========================
    oh_tgt = jnp.where(
        lax.broadcasted_iota(jnp.int32, (TB, N_VOCAB_DEC), 1) == tgt_ids,
        1.0, 0.0).astype(f32)
    y = jnp.maximum(mm(oh_tgt, wld("demb_w1")) + wld("db1"), 0.0)
    y = jnp.maximum(mm(y, wld("dw2")) + wld("db2"), 0.0)             # (TB,H)

    # ============================ AttnRNNBlock ===============================
    # Wavefront-interleaved: layer1[t] depends only on layer0[t] and layer1[t-1],
    # so both chains live in one unrolled step and hide each other's latencies.
    tih0 = mm(y, wld("wih0"))                    # layer-0 input->hidden hoisted
    w0cat = wld("w0cat")                         # [Wc0; Whh0]       (2H,H)
    w1cat = wld("w1cat")                         # [Wih1; Wc1; Whh1] (3H,H)
    bc0 = wld("bc0")
    bc1 = wld("bc1")
    mask = wld("attn_mask")                      # (B,SB) additive, batch-diagonal

    def attend(hh):
        # |score| <= H because h and enc are tanh outputs -> exp cannot overflow,
        # so the max-subtraction is dropped from the serial path; the divide goes
        # to the EUP via approximate reciprocal.
        sc = mm(hh, enc_t) + mask                                    # (B,SB)
        p = jnp.exp(sc)
        p = p * pl.reciprocal(jnp.sum(p, axis=-1, keepdims=True), approx=True)
        return mm(p, enc_full)                                       # (B,H)

    dec_states = []
    for t in range(S_TGT):                       # fully unrolled
        # ---- layer 0, step t ----
        attn0 = attend(h0)
        h0 = jnp.tanh(tih0[t * B:(t + 1) * B, :]
                      + mm(jnp.concatenate([attn0, h0], axis=1), w0cat) + bc0)
        # ---- layer 1, step t (attention uses h1 from step t-1) ----
        attn1 = attend(h1)
        h1 = jnp.tanh(mm(jnp.concatenate([h0, attn1, h1], axis=1), w1cat) + bc1)
        dec_states.append(h1)
    dec_out = jnp.concatenate(dec_states, axis=0)                    # (TB,H)

    # ============ hid_to_emb + (folded) tied vocab projection ================
    z = jnp.maximum(mm(dec_out, wld("h_w1")) + wld("h_b1"), 0.0)
    # single HBM-visible store: lane-dense (TB, 128)
    o_ref[...] = mm(z, wld("h_w2o")) + wld("h_b2o")


# ------------------------------ parameters ----------------------------------
def _linear_init(key, d_in, d_out):
    k1, k2 = jax.random.split(key)
    lim = 1.0 / jnp.sqrt(jnp.float32(d_in))
    w_t = jax.random.uniform(k1, (d_in, d_out), jnp.float32, -lim, lim)
    b = jax.random.uniform(k2, (1, d_out), jnp.float32, -lim, lim)
    return w_t, b


def _rnn_init(key, d_in, h):
    k1, k2, k3, k4 = jax.random.split(key, 4)
    lim = 1.0 / jnp.sqrt(jnp.float32(h))
    w_ih_t = jax.random.uniform(k1, (d_in, h), jnp.float32, -lim, lim)
    w_hh_t = jax.random.uniform(k2, (h, h), jnp.float32, -lim, lim)
    b = (jax.random.uniform(k3, (1, h), jnp.float32, -lim, lim)
         + jax.random.uniform(k4, (1, h), jnp.float32, -lim, lim))   # b_ih + b_hh
    return w_ih_t, w_hh_t, b


def init_params(key):
    """Build the single packed (W_ROWS, 128) f32 parameter slab (folds applied)."""
    ks = jax.random.split(key, 20)

    # encoder
    enc_emb = 0.02 * jax.random.normal(ks[0], (N_VOCAB_ENC, D_EMB), jnp.float32)
    enc_emb = enc_emb.at[0].set(0.0)                         # padding_idx=0
    enc_w1, eb1 = _linear_init(ks[1], D_EMB, D_HID)
    ew2, eb2 = _linear_init(ks[2], D_HID, D_HID)
    ewih, ewhh, ebrnn = _rnn_init(ks[3], D_HID, D_HID)

    # decoder
    dec_emb = 0.02 * jax.random.normal(ks[6], (N_VOCAB_DEC, D_EMB), jnp.float32)
    dec_emb = dec_emb.at[0].set(0.0)                         # padding_idx=0
    dec_w1, db1 = _linear_init(ks[7], D_EMB, D_HID)
    dw2, db2 = _linear_init(ks[8], D_HID, D_HID)
    g_w1, g_b1 = _linear_init(ks[9], D_HID * (IS_BIDIR + 1), D_HID * DEC_N_LAYER)
    g_w2, g_b2 = _linear_init(ks[10], D_HID * DEC_N_LAYER, D_HID * DEC_N_LAYER)
    attn_w, attn_b = _linear_init(ks[11], D_HID, D_HID)      # AttnRNNBlock.W
    wih0, whh0, b0 = _rnn_init(ks[12], D_HID, D_HID)
    wih1, whh1, b1 = _rnn_init(ks[13], D_HID, D_HID)
    h_w1, h_b1 = _linear_init(ks[16], D_HID, D_HID)
    h_w2, h_b2 = _linear_init(ks[17], D_HID, D_EMB)

    # ----------------------------- folds ------------------------------------
    # embedding @ first linear (dropout only in between -> identity at inference)
    eemb_w1 = enc_emb @ enc_w1                               # (V_enc, H)
    demb_w1 = dec_emb @ dec_w1                               # (V_dec, H)
    # attention linear folded through each layer's RNN input projection, and the
    # two serial cell matmuls fused into one concatenated weight:
    #   layer0 input  = [attn, h]            @ [Wc0; Whh0]
    #   layer1 input  = [layer0_out, attn, h] @ [Wih1; Wc1; Whh1]
    wc0 = attn_w @ wih0
    bc0 = attn_b @ wih0 + b0
    w0cat = jnp.concatenate([wc0, whh0], axis=0)             # (2H, H)
    wc1 = attn_w @ wih1
    bc1 = attn_b @ wih1 + b1
    w1cat = jnp.concatenate([wih1, wc1, whh1], axis=0)       # (3H, H)
    # hid_to_emb second linear folded into the tied (lane-padded) vocab proj
    out_proj = jnp.zeros((D_EMB, V_PAD), jnp.float32).at[:, :N_VOCAB_DEC].set(dec_emb.T)
    h_w2o = h_w2 @ out_proj                                  # (H, 128)
    h_b2o = h_b2 @ out_proj                                  # (1, 128)

    # additive attention mask for time-major flattened enc_out: column j is
    # encoder row (t=j//B, b=j%B); batch b attends only to its own rows
    # (softmax over all S source positions, matching the reference).
    colb = jnp.arange(SB)[None, :] % B
    rowb = jnp.arange(B)[:, None]
    attn_mask = jnp.where(colb == rowb, 0.0, NEG_INF).astype(jnp.float32)

    vals = {
        "eemb_w1": eemb_w1, "ew2": ew2, "ewih": ewih, "ewhh": ewhh,
        "demb_w1": demb_w1, "dw2": dw2, "g_w1": g_w1, "g_w2": g_w2,
        "wih0": wih0, "w0cat": w0cat, "w1cat": w1cat,
        "h_w1": h_w1, "h_w2o": h_w2o, "attn_mask": attn_mask,
        "eb1": eb1, "eb2": eb2, "ebrnn": ebrnn,
        "db1": db1, "db2": db2, "g_b1": g_b1, "g_b2": g_b2,
        "bc0": bc0, "bc1": bc1, "h_b1": h_b1, "h_b2o": h_b2o,
    }
    slab = jnp.zeros((W_ROWS, V_PAD), jnp.float32)
    for name, (r0, r, c) in W_LAYOUT.items():
        v = vals[name]
        assert v.shape == (r, c), (name, v.shape, (r, c))
        slab = slab.at[r0:r0 + r, 0:c].set(v)
    return slab


# ------------------------------ full forward ---------------------------------
def attn_rnn_model_forward(wslab, src, src_len, tgt):
    Bb, S = src.shape
    T = tgt.shape[1]
    assert (Bb, S, T) == (B, S_SRC, S_TGT)

    # one packed int32 input: time-major src ids | time-major tgt ids | src_len
    ids = jnp.concatenate([
        src.T.reshape(S * Bb, 1),
        tgt.T.reshape(T * Bb, 1),
        src_len.reshape(Bb, 1),
    ], axis=0).astype(jnp.int32)                              # (SB+TB+B, 1)

    out_pad = pl.pallas_call(
        _attn_rnn_fused_kernel,
        out_shape=jax.ShapeDtypeStruct((T * Bb, V_PAD), jnp.float32),
    )(ids, wslab)

    # strip vocab padding and go back to (B, T, V)
    logits = out_pad[:, :N_VOCAB_DEC].reshape(T, Bb, N_VOCAB_DEC)
    return logits.transpose(1, 0, 2)


# ---------------------------------- main -------------------------------------
if __name__ == "__main__":
    key = jax.random.PRNGKey(0)
    kp, ks_, kt, kl = jax.random.split(key, 4)
    wslab = init_params(kp)

    src = jax.random.randint(ks_, (B, S_SRC), 1, N_VOCAB_ENC, dtype=jnp.int32)
    tgt = jax.random.randint(kt, (B, S_TGT), 1, N_VOCAB_DEC, dtype=jnp.int32)
    src_len = jax.random.randint(kl, (B,), 1, S_SRC + 1, dtype=jnp.int32)

    fwd = jax.jit(attn_rnn_model_forward)
    out = jax.block_until_ready(fwd(wslab, src, src_len, tgt))
    assert out.shape == (B, S_TGT, N_VOCAB_DEC), out.shape
    assert out.dtype == jnp.float32
    assert bool(jnp.all(jnp.isfinite(out)))
    print("KERNEL_OK")
</pallas_src>

<mosaic_0001>
module attributes {stable_mosaic.version = 11 : i64} {
  func.func @_attn_rnn_fused_kernel(%arg0: memref<34x1xi32, #tpu.memory_space<vmem>>, %arg1: memref<664x128xf32, #tpu.memory_space<vmem>>, %arg2: memref<16x128xf32, #tpu.memory_space<vmem>>) attributes {dimension_semantics = [], scalar_prefetch = 0 : i64, scratch_operands = 0 : i64, tpu.core_type = #tpu.core_type<tc>} {
    %c0 = arith.constant 0 : index
    %c0_0 = arith.constant 0 : index
    %0 = vector.load %arg0[%c0, %c0_0] : memref<34x1xi32, #tpu.memory_space<vmem>>, vector<16x1xi32>
    %c16 = arith.constant 16 : index
    %c0_1 = arith.constant 0 : index
    %1 = vector.load %arg0[%c16, %c0_1] : memref<34x1xi32, #tpu.memory_space<vmem>>, vector<16x1xi32>
    %c32 = arith.constant 32 : index
    %c0_2 = arith.constant 0 : index
    %2 = vector.load %arg0[%c32, %c0_2] : memref<34x1xi32, #tpu.memory_space<vmem>>, vector<2x1xi32>
    %3 = tpu.iota {dimensions = array<i32: 1>} : vector<16x37xi32>
    %4 = vector.broadcast %0 : vector<16x1xi32> to vector<16x37xi32>
    %5 = arith.cmpi eq, %3, %4 : vector<16x37xi32>
    %cst = arith.constant 1.000000e+00 : f32
    %cst_3 = arith.constant 0.000000e+00 : f32
    %6 = vector.broadcast %cst : f32 to vector<16x37xf32>
    %7 = vector.broadcast %cst_3 : f32 to vector<16x37xf32>
    %8 = arith.select %5, %6, %7 : vector<16x37xi1>, vector<16x37xf32>
    %c0_4 = arith.constant 0 : index
    %c0_5 = arith.constant 0 : index
    %9 = vector.load %arg1[%c0_4, %c0_5] : memref<664x128xf32, #tpu.memory_space<vmem>>, vector<37x32xf32>
    %cst_6 = arith.constant dense<0.000000e+00> : vector<16x32xf32>
    %10 = tpu.matmul %8, %9, %cst_6 {dimension_numbers = #tpu.dot_dimension_numbers<[1], [0], [0], [1], [0, 0, 1, 1], [], []>} : vector<16x37xf32>, vector<37x32xf32>, vector<16x32xf32> -> vector<16x32xf32>
    %c576 = arith.constant 576 : index
    %c0_7 = arith.constant 0 : index
    %11 = vector.load %arg1[%c576, %c0_7] : memref<664x128xf32, #tpu.memory_space<vmem>>, vector<1x32xf32>
    %12 = vector.broadcast %11 : vector<1x32xf32> to vector<16x32xf32>
    %13 = arith.addf %10, %12 : vector<16x32xf32>
    %cst_8 = arith.constant 0.000000e+00 : f32
    %14 = vector.broadcast %cst_8 : f32 to vector<16x32xf32>
    %15 = arith.maximumf %13, %14 : vector<16x32xf32>
    %c40 = arith.constant 40 : index
    %c0_9 = arith.constant 0 : index
    %16 = vector.load %arg1[%c40, %c0_9] : memref<664x128xf32, #tpu.memory_space<vmem>>, vector<32x32xf32>
    %cst_10 = arith.constant dense<0.000000e+00> : vector<16x32xf32>
    %17 = tpu.matmul %15, %16, %cst_10 {dimension_numbers = #tpu.dot_dimension_numbers<[1], [0], [0], [1], [0, 0, 1, 1], [], []>} : vector<16x32xf32>, vector<32x32xf32>, vector<16x32xf32> -> vector<16x32xf32>
    %c584 = arith.constant 584 : index
    %c0_11 = arith.constant 0 : index
    %18 = vector.load %arg1[%c584, %c0_11] : memref<664x128xf32, #tpu.memory_space<vmem>>, vector<1x32xf32>
    %19 = vector.broadcast %18 : vector<1x32xf32> to vector<16x32xf32>
    %20 = arith.addf %17, %19 : vector<16x32xf32>
    %cst_12 = arith.constant 0.000000e+00 : f32
    %21 = vector.broadcast %cst_12 : f32 to vector<16x32xf32>
    %22 = arith.maximumf %20, %21 : vector<16x32xf32>
    %c72 = arith.constant 72 : index
    %c0_13 = arith.constant 0 : index
    %23 = vector.load %arg1[%c72, %c0_13] : memref<664x128xf32, #tpu.memory_space<vmem>>, vector<32x32xf32>
    %cst_14 = arith.constant dense<0.000000e+00> : vector<16x32xf32>
    %24 = tpu.matmul %22, %23, %cst_14 {dimension_numbers = #tpu.dot_dimension_numbers<[1], [0], [0], [1], [0, 0, 1, 1], [], []>} : vector<16x32xf32>, vector<32x32xf32>, vector<16x32xf32> -> vector<16x32xf32>
    %c592 = arith.constant 592 : index
    %c0_15 = arith.constant 0 : index
    %25 = vector.load %arg1[%c592, %c0_15] : memref<664x128xf32, #tpu.memory_space<vmem>>, vector<1x32xf32>
    %26 = vector.broadcast %25 : vector<1x32xf32> to vector<16x32xf32>
    %27 = arith.addf %24, %26 : vector<16x32xf32>
    %c104 = arith.constant 104 : index
    %c0_16 = arith.constant 0 : index
    %28 = vector.load %arg1[%c104, %c0_16] : memref<664x128xf32, #tpu.memory_space<vmem>>, vector<32x32xf32>
    %29 = vector.extract_strided_slice %27 {offsets = [0, 0], sizes = [2, 32], strides = [1, 1]} : vector<16x32xf32> to vector<2x32xf32>
    %30 = math.tanh %29 : vector<2x32xf32>
    %31 = vector.extract_strided_slice %27 {offsets = [2, 0], sizes = [2, 32], strides = [1, 1]} : vector<16x32xf32> to vector<2x32xf32>
    %cst_17 = arith.constant dense<0.000000e+00> : vector<2x32xf32>
    %32 = tpu.matmul %30, %28, %cst_17 {dimension_numbers = #tpu.dot_dimension_numbers<[1], [0], [0], [1], [0, 0, 1, 1], [], []>} : vector<2x32xf32>, vector<32x32xf32>, vector<2x32xf32> -> vector<2x32xf32>
    %33 = arith.addf %31, %32 : vector<2x32xf32>
    %34 = math.tanh %33 : vector<2x32xf32>
    %35 = vector.extract_strided_slice %27 {offsets = [4, 0], sizes = [2, 32], strides = [1, 1]} : vector<16x32xf32> to vector<2x32xf32>
    %cst_18 = arith.constant dense<0.000000e+00> : vector<2x32xf32>
    %36 = tpu.matmul %34, %28, %cst_18 {dimension_numbers = #tpu.dot_dimension_numbers<[1], [0], [0], [1], [0, 0, 1, 1], [], []>} : vector<2x32xf32>, vector<32x32xf32>, vector<2x32xf32> -> vector<2x32xf32>
    %37 = arith.addf %35, %36 : vector<2x32xf32>
    %38 = math.tanh %37 : vector<2x32xf32>
    %39 = vector.extract_strided_slice %27 {offsets = [6, 0], sizes = [2, 32], strides = [1, 1]} : vector<16x32xf32> to vector<2x32xf32>
    %cst_19 = arith.constant dense<0.000000e+00> : vector<2x32xf32>
    %40 = tpu.matmul %38, %28, %cst_19 {dimension_numbers = #tpu.dot_dimension_numbers<[1], [0], [0], [1], [0, 0, 1, 1], [], []>} : vector<2x32xf32>, vector<32x32xf32>, vector<2x32xf32> -> vector<2x32xf32>
    %41 = arith.addf %39, %40 : vector<2x32xf32>
    %42 = math.tanh %41 : vector<2x32xf32>
    %43 = vector.extract_strided_slice %27 {offsets = [8, 0], sizes = [2, 32], strides = [1, 1]} : vector<16x32xf32> to vector<2x32xf32>
    %cst_20 = arith.constant dense<0.000000e+00> : vector<2x32xf32>
    %44 = tpu.matmul %42, %28, %cst_20 {dimension_numbers = #tpu.dot_dimension_numbers<[1], [0], [0], [1], [0, 0, 1, 1], [], []>} : vector<2x32xf32>, vector<32x32xf32>, vector<2x32xf32> -> vector<2x32xf32>
    %45 = arith.addf %43, %44 : vector<2x32xf32>
    %46 = math.tanh %45 : vector<2x32xf32>
    %47 = vector.extract_strided_slice %27 {offsets = [10, 0], sizes = [2, 32], strides = [1, 1]} : vector<16x32xf32> to vector<2x32xf32>
    %cst_21 = arith.constant dense<0.000000e+00> : vector<2x32xf32>
    %48 = tpu.matmul %46, %28, %cst_21 {dimension_numbers = #tpu.dot_dimension_numbers<[1], [0], [0], [1], [0, 0, 1, 1], [], []>} : vector<2x32xf32>, vector<32x32xf32>, vector<2x32xf32> -> vector<2x32xf32>
    %49 = arith.addf %47, %48 : vector<2x32xf32>
    %50 = math.tanh %49 : vector<2x32xf32>
    %51 = vector.extract_strided_slice %27 {offsets = [12, 0], sizes = [2, 32], strides = [1, 1]} : vector<16x32xf32> to vector<2x32xf32>
    %cst_22 = arith.constant dense<0.000000e+00> : vector<2x32xf32>
    %52 = tpu.matmul %50, %28, %cst_22 {dimension_numbers = #tpu.dot_dimension_numbers<[1], [0], [0], [1], [0, 0, 1, 1], [], []>} : vector<2x32xf32>, vector<32x32xf32>, vector<2x32xf32> -> vector<2x32xf32>
    %53 = arith.addf %51, %52 : vector<2x32xf32>
    %54 = math.tanh %53 : vector<2x32xf32>
    %55 = vector.extract_strided_slice %27 {offsets = [14, 0], sizes = [2, 32], strides = [1, 1]} : vector<16x32xf32> to vector<2x32xf32>
    %cst_23 = arith.constant dense<0.000000e+00> : vector<2x32xf32>
    %56 = tpu.matmul %54, %28, %cst_23 {dimension_numbers = #tpu.dot_dimension_numbers<[1], [0], [0], [1], [0, 0, 1, 1], [], []>} : vector<2x32xf32>, vector<32x32xf32>, vector<2x32xf32> -> vector<2x32xf32>
    %57 = arith.addf %55, %56 : vector<2x32xf32>
    %58 = math.tanh %57 : vector<2x32xf32>
    %59 = tpu.concatenate %30, %34, %38, %42, %46, %50, %54, %58 in 0 : vector<2x32xf32>, vector<2x32xf32>, vector<2x32xf32>, vector<2x32xf32>, vector<2x32xf32>, vector<2x32xf32>, vector<2x32xf32>, vector<2x32xf32> -> vector<16x32xf32>
    %60 = tpu.transpose %59, [1, 0] : vector<16x32xf32> -> vector<32x16xf32>
    %61 = tpu.iota {dimensions = array<i32: 1>} : vector<2x16xi32>
    %62 = tpu.iota {dimensions = array<i32: 0>} : vector<2x16xi32>
    %c1_i32 = arith.constant 1 : i32
    %63 = vector.broadcast %c1_i32 : i32 to vector<2x1xi32>
    %64 = arith.subi %2, %63 : vector<2x1xi32>
    %c2_i32 = arith.constant 2 : i32
    %65 = vector.broadcast %c2_i32 : i32 to vector<2x1xi32>
    %66 = arith.muli %64, %65 : vector<2x1xi32>
    %67 = vector.broadcast %66 : vector<2x1xi32> to vector<2x16xi32>
    %68 = arith.addi %67, %62 : vector<2x16xi32>
    %69 = arith.cmpi eq, %61, %68 : vector<2x16xi32>
    %cst_24 = arith.constant 1.000000e+00 : f32
    %cst_25 = arith.constant 0.000000e+00 : f32
    %70 = vector.broadcast %cst_24 : f32 to vector<2x16xf32>
    %71 = vector.broadcast %cst_25 : f32 to vector<2x16xf32>
    %72 = arith.select %69, %70, %71 : vector<2x16xi1>, vector<2x16xf32>
    %cst_26 = arith.constant dense<0.000000e+00> : vector<2x32xf32>
    %73 = tpu.matmul %72, %59, %cst_26 {dimension_numbers = #tpu.dot_dimension_numbers<[1], [0], [0], [1], [0, 0, 1, 1], [], []>} : vector<2x16xf32>, vector<16x32xf32>, vector<2x32xf32> -> vector<2x32xf32>
    %c216 = arith.constant 216 : index
    %c0_27 = arith.constant 0 : index
    %74 = vector.load %arg1[%c216, %c0_27] : memref<664x128xf32, #tpu.memory_space<vmem>>, vector<32x64xf32>
    %cst_28 = arith.constant dense<0.000000e+00> : vector<2x64xf32>
    %75 = tpu.matmul %73, %74, %cst_28 {dimension_numbers = #tpu.dot_dimension_numbers<[1], [0], [0], [1], [0, 0, 1, 1], [], []>} : vector<2x32xf32>, vector<32x64xf32>, vector<2x64xf32> -> vector<2x64xf32>
    %c616 = arith.constant 616 : index
    %c0_29 = arith.constant 0 : index
    %76 = vector.load %arg1[%c616, %c0_29] : memref<664x128xf32, #tpu.memory_space<vmem>>, vector<1x64xf32>
    %77 = vector.broadcast %76 : vector<1x64xf32> to vector<2x64xf32>
    %78 = arith.addf %75, %77 : vector<2x64xf32>
    %cst_30 = arith.constant 0.000000e+00 : f32
    %79 = vector.broadcast %cst_30 : f32 to vector<2x64xf32>
    %80 = arith.maximumf %78, %79 : vector<2x64xf32>
    %c248 = arith.constant 248 : index
    %c0_31 = arith.constant 0 : index
    %81 = vector.load %arg1[%c248, %c0_31] : memref<664x128xf32, #tpu.memory_space<vmem>>, vector<64x64xf32>
    %cst_32 = arith.constant dense<0.000000e+00> : vector<2x64xf32>
    %82 = tpu.matmul %80, %81, %cst_32 {dimension_numbers = #tpu.dot_dimension_numbers<[1], [0], [0], [1], [0, 0, 1, 1], [], []>} : vector<2x64xf32>, vector<64x64xf32>, vector<2x64xf32> -> vector<2x64xf32>
    %c624 = arith.constant 624 : index
    %c0_33 = arith.constant 0 : index
    %83 = vector.load %arg1[%c624, %c0_33] : memref<664x128xf32, #tpu.memory_space<vmem>>, vector<1x64xf32>
    %84 = vector.broadcast %83 : vector<1x64xf32> to vector<2x64xf32>
    %85 = arith.addf %82, %84 : vector<2x64xf32>
    %cst_34 = arith.constant 0.000000e+00 : f32
    %86 = vector.broadcast %cst_34 : f32 to vector<2x64xf32>
    %87 = arith.maximumf %85, %86 : vector<2x64xf32>
    %88 = vector.extract_strided_slice %87 {offsets = [0, 0], sizes = [1, 32], strides = [1, 1]} : vector<2x64xf32> to vector<1x32xf32>
    %89 = vector.extract_strided_slice %87 {offsets = [0, 32], sizes = [1, 32], strides = [1, 1]} : vector<2x64xf32> to vector<1x32xf32>
    %90 = tpu.concatenate %88, %89 in 0 : vector<1x32xf32>, vector<1x32xf32> -> vector<2x32xf32>
    %91 = vector.extract_strided_slice %87 {offsets = [1, 0], sizes = [1, 32], strides = [1, 1]} : vector<2x64xf32> to vector<1x32xf32>
    %92 = vector.extract_strided_slice %87 {offsets = [1, 32], sizes = [1, 32], strides = [1, 1]} : vector<2x64xf32> to vector<1x32xf32>
    %93 = tpu.concatenate %91, %92 in 0 : vector<1x32xf32>, vector<1x32xf32> -> vector<2x32xf32>
    %94 = tpu.iota {dimensions = array<i32: 1>} : vector<16x41xi32>
    %95 = vector.broadcast %1 : vector<16x1xi32> to vector<16x41xi32>
    %96 = arith.cmpi eq, %94, %95 : vector<16x41xi32>
    %cst_35 = arith.constant 1.000000e+00 : f32
    %cst_36 = arith.constant 0.000000e+00 : f32
    %97 = vector.broadcast %cst_35 : f32 to vector<16x41xf32>
    %98 = vector.broadcast %cst_36 : f32 to vector<16x41xf32>
    %99 = arith.select %96, %97, %98 : vector<16x41xi1>, vector<16x41xf32>
    %c136 = arith.constant 136 : index
    %c0_37 = arith.constant 0 : index
    %100 = vector.load %arg1[%c136, %c0_37] : memref<664x128xf32, #tpu.memory_space<vmem>>, vector<41x32xf32>
    %cst_38 = arith.constant dense<0.000000e+00> : vector<16x32xf32>
    %101 = tpu.matmul %99, %100, %cst_38 {dimension_numbers = #tpu.dot_dimension_numbers<[1], [0], [0], [1], [0, 0, 1, 1], [], []>} : vector<16x41xf32>, vector<41x32xf32>, vector<16x32xf32> -> vector<16x32xf32>
    %c600 = arith.constant 600 : index
    %c0_39 = arith.constant 0 : index
    %102 = vector.load %arg1[%c600, %c0_39] : memref<664x128xf32, #tpu.memory_space<vmem>>, vector<1x32xf32>
    %103 = vector.broadcast %102 : vector<1x32xf32> to vector<16x32xf32>
    %104 = arith.addf %101, %103 : vector<16x32xf32>
    %cst_40 = arith.constant 0.000000e+00 : f32
    %105 = vector.broadcast %cst_40 : f32 to vector<16x32xf32>
    %106 = arith.maximumf %104, %105 : vector<16x32xf32>
    %c184 = arith.constant 184 : index
    %c0_41 = arith.constant 0 : index
    %107 = vector.load %arg1[%c184, %c0_41] : memref<664x128xf32, #tpu.memory_space<vmem>>, vector<32x32xf32>
    %cst_42 = arith.constant dense<0.000000e+00> : vector<16x32xf32>
    %108 = tpu.matmul %106, %107, %cst_42 {dimension_numbers = #tpu.dot_dimension_numbers<[1], [0], [0], [1], [0, 0, 1, 1], [], []>} : vector<16x32xf32>, vector<32x32xf32>, vector<16x32xf32> -> vector<16x32xf32>
    %c608 = arith.constant 608 : index
    %c0_43 = arith.constant 0 : index
    %109 = vector.load %arg1[%c608, %c0_43] : memref<664x128xf32, #tpu.memory_space<vmem>>, vector<1x32xf32>
    %110 = vector.broadcast %109 : vector<1x32xf32> to vector<16x32xf32>
    %111 = arith.addf %108, %110 : vector<16x32xf32>
    %cst_44 = arith.constant 0.000000e+00 : f32
    %112 = vector.broadcast %cst_44 : f32 to vector<16x32xf32>
    %113 = arith.maximumf %111, %112 : vector<16x32xf32>
    %c312 = arith.constant 312 : index
    %c0_45 = arith.constant 0 : index
    %114 = vector.load %arg1[%c312, %c0_45] : memref<664x128xf32, #tpu.memory_space<vmem>>, vector<32x32xf32>
    %cst_46 = arith.constant dense<0.000000e+00> : vector<16x32xf32>
    %115 = tpu.matmul %113, %114, %cst_46 {dimension_numbers = #tpu.dot_dimension_numbers<[1], [0], [0], [1], [0, 0, 1, 1], [], []>} : vector<16x32xf32>, vector<32x32xf32>, vector<16x32xf32> -> vector<16x32xf32>
    %c344 = arith.constant 344 : index
    %c0_47 = arith.constant 0 : index
    %116 = vector.load %arg1[%c344, %c0_47] : memref<664x128xf32, #tpu.memory_space<vmem>>, vector<64x32xf32>
    %c408 = arith.constant 408 : index
    %c0_48 = arith.constant 0 : index
    %117 = vector.load %arg1[%c408, %c0_48] : memref<664x128xf32, #tpu.memory_space<vmem>>, vector<96x32xf32>
    %c632 = arith.constant 632 : index
    %c0_49 = arith.constant 0 : index
    %118 = vector.load %arg1[%c632, %c0_49] : memref<664x128xf32, #tpu.memory_space<vmem>>, vector<1x32xf32>
    %c640 = arith.constant 640 : index
    %c0_50 = arith.constant 0 : index
    %119 = vector.load %arg1[%c640, %c0_50] : memref<664x128xf32, #tpu.memory_space<vmem>>, vector<1x32xf32>
    %c568 = arith.constant 568 : index
    %c0_51 = arith.constant 0 : index
    %120 = vector.load %arg1[%c568, %c0_51] : memref<664x128xf32, #tpu.memory_space<vmem>>, vector<2x16xf32>
    %cst_52 = arith.constant dense<0.000000e+00> : vector<2x16xf32>
    %121 = tpu.matmul %90, %60, %cst_52 {dimension_numbers = #tpu.dot_dimension_numbers<[1], [0], [0], [1], [0, 0, 1, 1], [], []>} : vector<2x32xf32>, vector<32x16xf32>, vector<2x16xf32> -> vector<2x16xf32>
    %122 = arith.addf %121, %120 : vector<2x16xf32>
    %123 = math.exp %122 : vector<2x16xf32>
    %cst_53 = arith.constant dense<0.000000e+00> : vector<2xf32>
    %124 = vector.multi_reduction <add>, %123, %cst_53 [1] : vector<2x16xf32> to vector<2xf32>
    %125 = vector.shape_cast %124 : vector<2xf32> to vector<2x1xf32>
    %126 = tpu.reciprocal %125 {approx = true} : vector<2x1xf32> -> vector<2x1xf32>
    %127 = vector.broadcast %126 : vector<2x1xf32> to vector<2x16xf32>
    %128 = arith.mulf %123, %127 : vector<2x16xf32>
    %cst_54 = arith.constant dense<0.000000e+00> : vector<2x32xf32>
    %129 = tpu.matmul %128, %59, %cst_54 {dimension_numbers = #tpu.dot_dimension_numbers<[1], [0], [0], [1], [0, 0, 1, 1], [], []>} : vector<2x16xf32>, vector<16x32xf32>, vector<2x32xf32> -> vector<2x32xf32>
    %130 = vector.extract_strided_slice %115 {offsets = [0, 0], sizes = [2, 32], strides = [1, 1]} : vector<16x32xf32> to vector<2x32xf32>
    %131 = tpu.concatenate %129, %90 in 1 : vector<2x32xf32>, vector<2x32xf32> -> vector<2x64xf32>
    %cst_55 = arith.constant dense<0.000000e+00> : vector<2x32xf32>
    %132 = tpu.matmul %131, %116, %cst_55 {dimension_numbers = #tpu.dot_dimension_numbers<[1], [0], [0], [1], [0, 0, 1, 1], [], []>} : vector<2x64xf32>, vector<64x32xf32>, vector<2x32xf32> -> vector<2x32xf32>
    %133 = arith.addf %130, %132 : vector<2x32xf32>
    %134 = vector.broadcast %118 : vector<1x32xf32> to vector<2x32xf32>
    %135 = arith.addf %133, %134 : vector<2x32xf32>
    %136 = math.tanh %135 : vector<2x32xf32>
    %cst_56 = arith.constant dense<0.000000e+00> : vector<2x16xf32>
    %137 = tpu.matmul %93, %60, %cst_56 {dimension_numbers = #tpu.dot_dimension_numbers<[1], [0], [0], [1], [0, 0, 1, 1], [], []>} : vector<2x32xf32>, vector<32x16xf32>, vector<2x16xf32> -> vector<2x16xf32>
    %138 = arith.addf %137, %120 : vector<2x16xf32>
    %139 = math.exp %138 : vector<2x16xf32>
    %cst_57 = arith.constant dense<0.000000e+00> : vector<2xf32>
    %140 = vector.multi_reduction <add>, %139, %cst_57 [1] : vector<2x16xf32> to vector<2xf32>
    %141 = vector.shape_cast %140 : vector<2xf32> to vector<2x1xf32>
    %142 = tpu.reciprocal %141 {approx = true} : vector<2x1xf32> -> vector<2x1xf32>
    %143 = vector.broadcast %142 : vector<2x1xf32> to vector<2x16xf32>
    %144 = arith.mulf %139, %143 : vector<2x16xf32>
    %cst_58 = arith.constant dense<0.000000e+00> : vector<2x32xf32>
    %145 = tpu.matmul %144, %59, %cst_58 {dimension_numbers = #tpu.dot_dimension_numbers<[1], [0], [0], [1], [0, 0, 1, 1], [], []>} : vector<2x16xf32>, vector<16x32xf32>, vector<2x32xf32> -> vector<2x32xf32>
    %146 = tpu.concatenate %136, %145, %93 in 1 : vector<2x32xf32>, vector<2x32xf32>, vector<2x32xf32> -> vector<2x96xf32>
    %cst_59 = arith.constant dense<0.000000e+00> : vector<2x32xf32>
    %147 = tpu.matmul %146, %117, %cst_59 {dimension_numbers = #tpu.dot_dimension_numbers<[1], [0], [0], [1], [0, 0, 1, 1], [], []>} : vector<2x96xf32>, vector<96x32xf32>, vector<2x32xf32> -> vector<2x32xf32>
    %148 = vector.broadcast %119 : vector<1x32xf32> to vector<2x32xf32>
    %149 = arith.addf %147, %148 : vector<2x32xf32>
    %150 = math.tanh %149 : vector<2x32xf32>
    %cst_60 = arith.constant dense<0.000000e+00> : vector<2x16xf32>
    %151 = tpu.matmul %136, %60, %cst_60 {dimension_numbers = #tpu.dot_dimension_numbers<[1], [0], [0], [1], [0, 0, 1, 1], [], []>} : vector<2x32xf32>, vector<32x16xf32>, vector<2x16xf32> -> vector<2x16xf32>
    %152 = arith.addf %151, %120 : vector<2x16xf32>
    %153 = math.exp %152 : vector<2x16xf32>
    %cst_61 = arith.constant dense<0.000000e+00> : vector<2xf32>
    %154 = vector.multi_reduction <add>, %153, %cst_61 [1] : vector<2x16xf32> to vector<2xf32>
    %155 = vector.shape_cast %154 : vector<2xf32> to vector<2x1xf32>
    %156 = tpu.reciprocal %155 {approx = true} : vector<2x1xf32> -> vector<2x1xf32>
    %157 = vector.broadcast %156 : vector<2x1xf32> to vector<2x16xf32>
    %158 = arith.mulf %153, %157 : vector<2x16xf32>
    %cst_62 = arith.constant dense<0.000000e+00> : vector<2x32xf32>
    %159 = tpu.matmul %158, %59, %cst_62 {dimension_numbers = #tpu.dot_dimension_numbers<[1], [0], [0], [1], [0, 0, 1, 1], [], []>} : vector<2x16xf32>, vector<16x32xf32>, vector<2x32xf32> -> vector<2x32xf32>
    %160 = vector.extract_strided_slice %115 {offsets = [2, 0], sizes = [2, 32], strides = [1, 1]} : vector<16x32xf32> to vector<2x32xf32>
    %161 = tpu.concatenate %159, %136 in 1 : vector<2x32xf32>, vector<2x32xf32> -> vector<2x64xf32>
    %cst_63 = arith.constant dense<0.000000e+00> : vector<2x32xf32>
    %162 = tpu.matmul %161, %116, %cst_63 {dimension_numbers = #tpu.dot_dimension_numbers<[1], [0], [0], [1], [0, 0, 1, 1], [], []>} : vector<2x64xf32>, vector<64x32xf32>, vector<2x32xf32> -> vector<2x32xf32>
    %163 = arith.addf %160, %162 : vector<2x32xf32>
    %164 = vector.broadcast %118 : vector<1x32xf32> to vector<2x32xf32>
    %165 = arith.addf %163, %164 : vector<2x32xf32>
    %166 = math.tanh %165 : vector<2x32xf32>
    %cst_64 = arith.constant dense<0.000000e+00> : vector<2x16xf32>
    %167 = tpu.matmul %150, %60, %cst_64 {dimension_numbers = #tpu.dot_dimension_numbers<[1], [0], [0], [1], [0, 0, 1, 1], [], []>} : vector<2x32xf32>, vector<32x16xf32>, vector<2x16xf32> -> vector<2x16xf32>
    %168 = arith.addf %167, %120 : vector<2x16xf32>
    %169 = math.exp %168 : vector<2x16xf32>
    %cst_65 = arith.constant dense<0.000000e+00> : vector<2xf32>
    %170 = vector.multi_reduction <add>, %169, %cst_65 [1] : vector<2x16xf32> to vector<2xf32>
    %171 = vector.shape_cast %170 : vector<2xf32> to vector<2x1xf32>
    %172 = tpu.reciprocal %171 {approx = true} : vector<2x1xf32> -> vector<2x1xf32>
    %173 = vector.broadcast %172 : vector<2x1xf32> to vector<2x16xf32>
    %174 = arith.mulf %169, %173 : vector<2x16xf32>
    %cst_66 = arith.constant dense<0.000000e+00> : vector<2x32xf32>
    %175 = tpu.matmul %174, %59, %cst_66 {dimension_numbers = #tpu.dot_dimension_numbers<[1], [0], [0], [1], [0, 0, 1, 1], [], []>} : vector<2x16xf32>, vector<16x32xf32>, vector<2x32xf32> -> vector<2x32xf32>
    %176 = tpu.concatenate %166, %175, %150 in 1 : vector<2x32xf32>, vector<2x32xf32>, vector<2x32xf32> -> vector<2x96xf32>
    %cst_67 = arith.constant dense<0.000000e+00> : vector<2x32xf32>
    %177 = tpu.matmul %176, %117, %cst_67 {dimension_numbers = #tpu.dot_dimension_numbers<[1], [0], [0], [1], [0, 0, 1, 1], [], []>} : vector<2x96xf32>, vector<96x32xf32>, vector<2x32xf32> -> vector<2x32xf32>
    %178 = vector.broadcast %119 : vector<1x32xf32> to vector<2x32xf32>
    %179 = arith.addf %177, %178 : vector<2x32xf32>
    %180 = math.tanh %179 : vector<2x32xf32>
    %cst_68 = arith.constant dense<0.000000e+00> : vector<2x16xf32>
    %181 = tpu.matmul %166, %60, %cst_68 {dimension_numbers = #tpu.dot_dimension_numbers<[1], [0], [0], [1], [0, 0, 1, 1], [], []>} : vector<2x32xf32>, vector<32x16xf32>, vector<2x16xf32> -> vector<2x16xf32>
    %182 = arith.addf %181, %120 : vector<2x16xf32>
    %183 = math.exp %182 : vector<2x16xf32>
    %cst_69 = arith.constant dense<0.000000e+00> : vector<2xf32>
    %184 = vector.multi_reduction <add>, %183, %cst_69 [1] : vector<2x16xf32> to vector<2xf32>
    %185 = vector.shape_cast %184 : vector<2xf32> to vector<2x1xf32>
    %186 = tpu.reciprocal %185 {approx = true} : vector<2x1xf32> -> vector<2x1xf32>
    %187 = vector.broadcast %186 : vector<2x1xf32> to vector<2x16xf32>
    %188 = arith.mulf %183, %187 : vector<2x16xf32>
    %cst_70 = arith.constant dense<0.000000e+00> : vector<2x32xf32>
    %189 = tpu.matmul %188, %59, %cst_70 {dimension_numbers = #tpu.dot_dimension_numbers<[1], [0], [0], [1], [0, 0, 1, 1], [], []>} : vector<2x16xf32>, vector<16x32xf32>, vector<2x32xf32> -> vector<2x32xf32>
    %190 = vector.extract_strided_slice %115 {offsets = [4, 0], sizes = [2, 32], strides = [1, 1]} : vector<16x32xf32> to vector<2x32xf32>
    %191 = tpu.concatenate %189, %166 in 1 : vector<2x32xf32>, vector<2x32xf32> -> vector<2x64xf32>
    %cst_71 = arith.constant dense<0.000000e+00> : vector<2x32xf32>
    %192 = tpu.matmul %191, %116, %cst_71 {dimension_numbers = #tpu.dot_dimension_numbers<[1], [0], [0], [1], [0, 0, 1, 1], [], []>} : vector<2x64xf32>, vector<64x32xf32>, vector<2x32xf32> -> vector<2x32xf32>
    %193 = arith.addf %190, %192 : vector<2x32xf32>
    %194 = vector.broadcast %118 : vector<1x32xf32> to vector<2x32xf32>
    %195 = arith.addf %193, %194 : vector<2x32xf32>
    %196 = math.tanh %195 : vector<2x32xf32>
    %cst_72 = arith.constant dense<0.000000e+00> : vector<2x16xf32>
    %197 = tpu.matmul %180, %60, %cst_72 {dimension_numbers = #tpu.dot_dimension_numbers<[1], [0], [0], [1], [0, 0, 1, 1], [], []>} : vector<2x32xf32>, vector<32x16xf32>, vector<2x16xf32> -> vector<2x16xf32>
    %198 = arith.addf %197, %120 : vector<2x16xf32>
    %199 = math.exp %198 : vector<2x16xf32>
    %cst_73 = arith.constant dense<0.000000e+00> : vector<2xf32>
    %200 = vector.multi_reduction <add>, %199, %cst_73 [1] : vector<2x16xf32> to vector<2xf32>
    %201 = vector.shape_cast %200 : vector<2xf32> to vector<2x1xf32>
    %202 = tpu.reciprocal %201 {approx = true} : vector<2x1xf32> -> vector<2x1xf32>
    %203 = vector.broadcast %202 : vector<2x1xf32> to vector<2x16xf32>
    %204 = arith.mulf %199, %203 : vector<2x16xf32>
    %cst_74 = arith.constant dense<0.000000e+00> : vector<2x32xf32>
    %205 = tpu.matmul %204, %59, %cst_74 {dimension_numbers = #tpu.dot_dimension_numbers<[1], [0], [0], [1], [0, 0, 1, 1], [], []>} : vector<2x16xf32>, vector<16x32xf32>, vector<2x32xf32> -> vector<2x32xf32>
    %206 = tpu.concatenate %196, %205, %180 in 1 : vector<2x32xf32>, vector<2x32xf32>, vector<2x32xf32> -> vector<2x96xf32>
    %cst_75 = arith.constant dense<0.000000e+00> : vector<2x32xf32>
    %207 = tpu.matmul %206, %117, %cst_75 {dimension_numbers = #tpu.dot_dimension_numbers<[1], [0], [0], [1], [0, 0, 1, 1], [], []>} : vector<2x96xf32>, vector<96x32xf32>, vector<2x32xf32> -> vector<2x32xf32>
    %208 = vector.broadcast %119 : vector<1x32xf32> to vector<2x32xf32>
    %209 = arith.addf %207, %208 : vector<2x32xf32>
    %210 = math.tanh %209 : vector<2x32xf32>
    %cst_76 = arith.constant dense<0.000000e+00> : vector<2x16xf32>
    %211 = tpu.matmul %196, %60, %cst_76 {dimension_numbers = #tpu.dot_dimension_numbers<[1], [0], [0], [1], [0, 0, 1, 1], [], []>} : vector<2x32xf32>, vector<32x16xf32>, vector<2x16xf32> -> vector<2x16xf32>
    %212 = arith.addf %211, %120 : vector<2x16xf32>
    %213 = math.exp %212 : vector<2x16xf32>
    %cst_77 = arith.constant dense<0.000000e+00> : vector<2xf32>
    %214 = vector.multi_reduction <add>, %213, %cst_77 [1] : vector<2x16xf32> to vector<2xf32>
    %215 = vector.shape_cast %214 : vector<2xf32> to vector<2x1xf32>
    %216 = tpu.reciprocal %215 {approx = true} : vector<2x1xf32> -> vector<2x1xf32>
    %217 = vector.broadcast %216 : vector<2x1xf32> to vector<2x16xf32>
    %218 = arith.mulf %213, %217 : vector<2x16xf32>
    %cst_78 = arith.constant dense<0.000000e+00> : vector<2x32xf32>
    %219 = tpu.matmul %218, %59, %cst_78 {dimension_numbers = #tpu.dot_dimension_numbers<[1], [0], [0], [1], [0, 0, 1, 1], [], []>} : vector<2x16xf32>, vector<16x32xf32>, vector<2x32xf32> -> vector<2x32xf32>
    %220 = vector.extract_strided_slice %115 {offsets = [6, 0], sizes = [2, 32], strides = [1, 1]} : vector<16x32xf32> to vector<2x32xf32>
    %221 = tpu.concatenate %219, %196 in 1 : vector<2x32xf32>, vector<2x32xf32> -> vector<2x64xf32>
    %cst_79 = arith.constant dense<0.000000e+00> : vector<2x32xf32>
    %222 = tpu.matmul %221, %116, %cst_79 {dimension_numbers = #tpu.dot_dimension_numbers<[1], [0], [0], [1], [0, 0, 1, 1], [], []>} : vector<2x64xf32>, vector<64x32xf32>, vector<2x32xf32> -> vector<2x32xf32>
    %223 = arith.addf %220, %222 : vector<2x32xf32>
    %224 = vector.broadcast %118 : vector<1x32xf32> to vector<2x32xf32>
    %225 = arith.addf %223, %224 : vector<2x32xf32>
    %226 = math.tanh %225 : vector<2x32xf32>
    %cst_80 = arith.constant dense<0.000000e+00> : vector<2x16xf32>
    %227 = tpu.matmul %210, %60, %cst_80 {dimension_numbers = #tpu.dot_dimension_numbers<[1], [0], [0], [1], [0, 0, 1, 1], [], []>} : vector<2x32xf32>, vector<32x16xf32>, vector<2x16xf32> -> vector<2x16xf32>
    %228 = arith.addf %227, %120 : vector<2x16xf32>
    %229 = math.exp %228 : vector<2x16xf32>
    %cst_81 = arith.constant dense<0.000000e+00> : vector<2xf32>
    %230 = vector.multi_reduction <add>, %229, %cst_81 [1] : vector<2x16xf32> to vector<2xf32>
    %231 = vector.shape_cast %230 : vector<2xf32> to vector<2x1xf32>
    %232 = tpu.reciprocal %231 {approx = true} : vector<2x1xf32> -> vector<2x1xf32>
    %233 = vector.broadcast %232 : vector<2x1xf32> to vector<2x16xf32>
    %234 = arith.mulf %229, %233 : vector<2x16xf32>
    %cst_82 = arith.constant dense<0.000000e+00> : vector<2x32xf32>
    %235 = tpu.matmul %234, %59, %cst_82 {dimension_numbers = #tpu.dot_dimension_numbers<[1], [0], [0], [1], [0, 0, 1, 1], [], []>} : vector<2x16xf32>, vector<16x32xf32>, vector<2x32xf32> -> vector<2x32xf32>
    %236 = tpu.concatenate %226, %235, %210 in 1 : vector<2x32xf32>, vector<2x32xf32>, vector<2x32xf32> -> vector<2x96xf32>
    %cst_83 = arith.constant dense<0.000000e+00> : vector<2x32xf32>
    %237 = tpu.matmul %236, %117, %cst_83 {dimension_numbers = #tpu.dot_dimension_numbers<[1], [0], [0], [1], [0, 0, 1, 1], [], []>} : vector<2x96xf32>, vector<96x32xf32>, vector<2x32xf32> -> vector<2x32xf32>
    %238 = vector.broadcast %119 : vector<1x32xf32> to vector<2x32xf32>
    %239 = arith.addf %237, %238 : vector<2x32xf32>
    %240 = math.tanh %239 : vector<2x32xf32>
    %cst_84 = arith.constant dense<0.000000e+00> : vector<2x16xf32>
    %241 = tpu.matmul %226, %60, %cst_84 {dimension_numbers = #tpu.dot_dimension_numbers<[1], [0], [0], [1], [0, 0, 1, 1], [], []>} : vector<2x32xf32>, vector<32x16xf32>, vector<2x16xf32> -> vector<2x16xf32>
    %242 = arith.addf %241, %120 : vector<2x16xf32>
    %243 = math.exp %242 : vector<2x16xf32>
    %cst_85 = arith.constant dense<0.000000e+00> : vector<2xf32>
    %244 = vector.multi_reduction <add>, %243, %cst_85 [1] : vector<2x16xf32> to vector<2xf32>
    %245 = vector.shape_cast %244 : vector<2xf32> to vector<2x1xf32>
    %246 = tpu.reciprocal %245 {approx = true} : vector<2x1xf32> -> vector<2x1xf32>
    %247 = vector.broadcast %246 : vector<2x1xf32> to vector<2x16xf32>
    %248 = arith.mulf %243, %247 : vector<2x16xf32>
    %cst_86 = arith.constant dense<0.000000e+00> : vector<2x32xf32>
    %249 = tpu.matmul %248, %59, %cst_86 {dimension_numbers = #tpu.dot_dimension_numbers<[1], [0], [0], [1], [0, 0, 1, 1], [], []>} : vector<2x16xf32>, vector<16x32xf32>, vector<2x32xf32> -> vector<2x32xf32>
    %250 = vector.extract_strided_slice %115 {offsets = [8, 0], sizes = [2, 32], strides = [1, 1]} : vector<16x32xf32> to vector<2x32xf32>
    %251 = tpu.concatenate %249, %226 in 1 : vector<2x32xf32>, vector<2x32xf32> -> vector<2x64xf32>
    %cst_87 = arith.constant dense<0.000000e+00> : vector<2x32xf32>
    %252 = tpu.matmul %251, %116, %cst_87 {dimension_numbers = #tpu.dot_dimension_numbers<[1], [0], [0], [1], [0, 0, 1, 1], [], []>} : vector<2x64xf32>, vector<64x32xf32>, vector<2x32xf32> -> vector<2x32xf32>
    %253 = arith.addf %250, %252 : vector<2x32xf32>
    %254 = vector.broadcast %118 : vector<1x32xf32> to vector<2x32xf32>
    %255 = arith.addf %253, %254 : vector<2x32xf32>
    %256 = math.tanh %255 : vector<2x32xf32>
    %cst_88 = arith.constant dense<0.000000e+00> : vector<2x16xf32>
    %257 = tpu.matmul %240, %60, %cst_88 {dimension_numbers = #tpu.dot_dimension_numbers<[1], [0], [0], [1], [0, 0, 1, 1], [], []>} : vector<2x32xf32>, vector<32x16xf32>, vector<2x16xf32> -> vector<2x16xf32>
    %258 = arith.addf %257, %120 : vector<2x16xf32>
    %259 = math.exp %258 : vector<2x16xf32>
    %cst_89 = arith.constant dense<0.000000e+00> : vector<2xf32>
    %260 = vector.multi_reduction <add>, %259, %cst_89 [1] : vector<2x16xf32> to vector<2xf32>
    %261 = vector.shape_cast %260 : vector<2xf32> to vector<2x1xf32>
    %262 = tpu.reciprocal %261 {approx = true} : vector<2x1xf32> -> vector<2x1xf32>
    %263 = vector.broadcast %262 : vector<2x1xf32> to vector<2x16xf32>
    %264 = arith.mulf %259, %263 : vector<2x16xf32>
    %cst_90 = arith.constant dense<0.000000e+00> : vector<2x32xf32>
    %265 = tpu.matmul %264, %59, %cst_90 {dimension_numbers = #tpu.dot_dimension_numbers<[1], [0], [0], [1], [0, 0, 1, 1], [], []>} : vector<2x16xf32>, vector<16x32xf32>, vector<2x32xf32> -> vector<2x32xf32>
    %266 = tpu.concatenate %256, %265, %240 in 1 : vector<2x32xf32>, vector<2x32xf32>, vector<2x32xf32> -> vector<2x96xf32>
    %cst_91 = arith.constant dense<0.000000e+00> : vector<2x32xf32>
    %267 = tpu.matmul %266, %117, %cst_91 {dimension_numbers = #tpu.dot_dimension_numbers<[1], [0], [0], [1], [0, 0, 1, 1], [], []>} : vector<2x96xf32>, vector<96x32xf32>, vector<2x32xf32> -> vector<2x32xf32>
    %268 = vector.broadcast %119 : vector<1x32xf32> to vector<2x32xf32>
    %269 = arith.addf %267, %268 : vector<2x32xf32>
    %270 = math.tanh %269 : vector<2x32xf32>
    %cst_92 = arith.constant dense<0.000000e+00> : vector<2x16xf32>
    %271 = tpu.matmul %256, %60, %cst_92 {dimension_numbers = #tpu.dot_dimension_numbers<[1], [0], [0], [1], [0, 0, 1, 1], [], []>} : vector<2x32xf32>, vector<32x16xf32>, vector<2x16xf32> -> vector<2x16xf32>
    %272 = arith.addf %271, %120 : vector<2x16xf32>
    %273 = math.exp %272 : vector<2x16xf32>
    %cst_93 = arith.constant dense<0.000000e+00> : vector<2xf32>
    %274 = vector.multi_reduction <add>, %273, %cst_93 [1] : vector<2x16xf32> to vector<2xf32>
    %275 = vector.shape_cast %274 : vector<2xf32> to vector<2x1xf32>
    %276 = tpu.reciprocal %275 {approx = true} : vector<2x1xf32> -> vector<2x1xf32>
    %277 = vector.broadcast %276 : vector<2x1xf32> to vector<2x16xf32>
    %278 = arith.mulf %273, %277 : vector<2x16xf32>
    %cst_94 = arith.constant dense<0.000000e+00> : vector<2x32xf32>
    %279 = tpu.matmul %278, %59, %cst_94 {dimension_numbers = #tpu.dot_dimension_numbers<[1], [0], [0], [1], [0, 0, 1, 1], [], []>} : vector<2x16xf32>, vector<16x32xf32>, vector<2x32xf32> -> vector<2x32xf32>
    %280 = vector.extract_strided_slice %115 {offsets = [10, 0], sizes = [2, 32], strides = [1, 1]} : vector<16x32xf32> to vector<2x32xf32>
    %281 = tpu.concatenate %279, %256 in 1 : vector<2x32xf32>, vector<2x32xf32> -> vector<2x64xf32>
    %cst_95 = arith.constant dense<0.000000e+00> : vector<2x32xf32>
    %282 = tpu.matmul %281, %116, %cst_95 {dimension_numbers = #tpu.dot_dimension_numbers<[1], [0], [0], [1], [0, 0, 1, 1], [], []>} : vector<2x64xf32>, vector<64x32xf32>, vector<2x32xf32> -> vector<2x32xf32>
    %283 = arith.addf %280, %282 : vector<2x32xf32>
    %284 = vector.broadcast %118 : vector<1x32xf32> to vector<2x32xf32>
    %285 = arith.addf %283, %284 : vector<2x32xf32>
    %286 = math.tanh %285 : vector<2x32xf32>
    %cst_96 = arith.constant dense<0.000000e+00> : vector<2x16xf32>
    %287 = tpu.matmul %270, %60, %cst_96 {dimension_numbers = #tpu.dot_dimension_numbers<[1], [0], [0], [1], [0, 0, 1, 1], [], []>} : vector<2x32xf32>, vector<32x16xf32>, vector<2x16xf32> -> vector<2x16xf32>
    %288 = arith.addf %287, %120 : vector<2x16xf32>
    %289 = math.exp %288 : vector<2x16xf32>
    %cst_97 = arith.constant dense<0.000000e+00> : vector<2xf32>
    %290 = vector.multi_reduction <add>, %289, %cst_97 [1] : vector<2x16xf32> to vector<2xf32>
    %291 = vector.shape_cast %290 : vector<2xf32> to vector<2x1xf32>
    %292 = tpu.reciprocal %291 {approx = true} : vector<2x1xf32> -> vector<2x1xf32>
    %293 = vector.broadcast %292 : vector<2x1xf32> to vector<2x16xf32>
    %294 = arith.mulf %289, %293 : vector<2x16xf32>
    %cst_98 = arith.constant dense<0.000000e+00> : vector<2x32xf32>
    %295 = tpu.matmul %294, %59, %cst_98 {dimension_numbers = #tpu.dot_dimension_numbers<[1], [0], [0], [1], [0, 0, 1, 1], [], []>} : vector<2x16xf32>, vector<16x32xf32>, vector<2x32xf32> -> vector<2x32xf32>
    %296 = tpu.concatenate %286, %295, %270 in 1 : vector<2x32xf32>, vector<2x32xf32>, vector<2x32xf32> -> vector<2x96xf32>
    %cst_99 = arith.constant dense<0.000000e+00> : vector<2x32xf32>
    %297 = tpu.matmul %296, %117, %cst_99 {dimension_numbers = #tpu.dot_dimension_numbers<[1], [0], [0], [1], [0, 0, 1, 1], [], []>} : vector<2x96xf32>, vector<96x32xf32>, vector<2x32xf32> -> vector<2x32xf32>
    %298 = vector.broadcast %119 : vector<1x32xf32> to vector<2x32xf32>
    %299 = arith.addf %297, %298 : vector<2x32xf32>
    %300 = math.tanh %299 : vector<2x32xf32>
    %cst_100 = arith.constant dense<0.000000e+00> : vector<2x16xf32>
    %301 = tpu.matmul %286, %60, %cst_100 {dimension_numbers = #tpu.dot_dimension_numbers<[1], [0], [0], [1], [0, 0, 1, 1], [], []>} : vector<2x32xf32>, vector<32x16xf32>, vector<2x16xf32> -> vector<2x16xf32>
    %302 = arith.addf %301, %120 : vector<2x16xf32>
    %303 = math.exp %302 : vector<2x16xf32>
    %cst_101 = arith.constant dense<0.000000e+00> : vector<2xf32>
    %304 = vector.multi_reduction <add>, %303, %cst_101 [1] : vector<2x16xf32> to vector<2xf32>
    %305 = vector.shape_cast %304 : vector<2xf32> to vector<2x1xf32>
    %306 = tpu.reciprocal %305 {approx = true} : vector<2x1xf32> -> vector<2x1xf32>
    %307 = vector.broadcast %306 : vector<2x1xf32> to vector<2x16xf32>
    %308 = arith.mulf %303, %307 : vector<2x16xf32>
    %cst_102 = arith.constant dense<0.000000e+00> : vector<2x32xf32>
    %309 = tpu.matmul %308, %59, %cst_102 {dimension_numbers = #tpu.dot_dimension_numbers<[1], [0], [0], [1], [0, 0, 1, 1], [], []>} : vector<2x16xf32>, vector<16x32xf32>, vector<2x32xf32> -> vector<2x32xf32>
    %310 = vector.extract_strided_slice %115 {offsets = [12, 0], sizes = [2, 32], strides = [1, 1]} : vector<16x32xf32> to vector<2x32xf32>
    %311 = tpu.concatenate %309, %286 in 1 : vector<2x32xf32>, vector<2x32xf32> -> vector<2x64xf32>
    %cst_103 = arith.constant dense<0.000000e+00> : vector<2x32xf32>
    %312 = tpu.matmul %311, %116, %cst_103 {dimension_numbers = #tpu.dot_dimension_numbers<[1], [0], [0], [1], [0, 0, 1, 1], [], []>} : vector<2x64xf32>, vector<64x32xf32>, vector<2x32xf32> -> vector<2x32xf32>
    %313 = arith.addf %310, %312 : vector<2x32xf32>
    %314 = vector.broadcast %118 : vector<1x32xf32> to vector<2x32xf32>
    %315 = arith.addf %313, %314 : vector<2x32xf32>
    %316 = math.tanh %315 : vector<2x32xf32>
    %cst_104 = arith.constant dense<0.000000e+00> : vector<2x16xf32>
    %317 = tpu.matmul %300, %60, %cst_104 {dimension_numbers = #tpu.dot_dimension_numbers<[1], [0], [0], [1], [0, 0, 1, 1], [], []>} : vector<2x32xf32>, vector<32x16xf32>, vector<2x16xf32> -> vector<2x16xf32>
    %318 = arith.addf %317, %120 : vector<2x16xf32>
    %319 = math.exp %318 : vector<2x16xf32>
    %cst_105 = arith.constant dense<0.000000e+00> : vector<2xf32>
    %320 = vector.multi_reduction <add>, %319, %cst_105 [1] : vector<2x16xf32> to vector<2xf32>
    %321 = vector.shape_cast %320 : vector<2xf32> to vector<2x1xf32>
    %322 = tpu.reciprocal %321 {approx = true} : vector<2x1xf32> -> vector<2x1xf32>
    %323 = vector.broadcast %322 : vector<2x1xf32> to vector<2x16xf32>
    %324 = arith.mulf %319, %323 : vector<2x16xf32>
    %cst_106 = arith.constant dense<0.000000e+00> : vector<2x32xf32>
    %325 = tpu.matmul %324, %59, %cst_106 {dimension_numbers = #tpu.dot_dimension_numbers<[1], [0], [0], [1], [0, 0, 1, 1], [], []>} : vector<2x16xf32>, vector<16x32xf32>, vector<2x32xf32> -> vector<2x32xf32>
    %326 = tpu.concatenate %316, %325, %300 in 1 : vector<2x32xf32>, vector<2x32xf32>, vector<2x32xf32> -> vector<2x96xf32>
    %cst_107 = arith.constant dense<0.000000e+00> : vector<2x32xf32>
    %327 = tpu.matmul %326, %117, %cst_107 {dimension_numbers = #tpu.dot_dimension_numbers<[1], [0], [0], [1], [0, 0, 1, 1], [], []>} : vector<2x96xf32>, vector<96x32xf32>, vector<2x32xf32> -> vector<2x32xf32>
    %328 = vector.broadcast %119 : vector<1x32xf32> to vector<2x32xf32>
    %329 = arith.addf %327, %328 : vector<2x32xf32>
    %330 = math.tanh %329 : vector<2x32xf32>
    %cst_108 = arith.constant dense<0.000000e+00> : vector<2x16xf32>
    %331 = tpu.matmul %316, %60, %cst_108 {dimension_numbers = #tpu.dot_dimension_numbers<[1], [0], [0], [1], [0, 0, 1, 1], [], []>} : vector<2x32xf32>, vector<32x16xf32>, vector<2x16xf32> -> vector<2x16xf32>
    %332 = arith.addf %331, %120 : vector<2x16xf32>
    %333 = math.exp %332 : vector<2x16xf32>
    %cst_109 = arith.constant dense<0.000000e+00> : vector<2xf32>
    %334 = vector.multi_reduction <add>, %333, %cst_109 [1] : vector<2x16xf32> to vector<2xf32>
    %335 = vector.shape_cast %334 : vector<2xf32> to vector<2x1xf32>
    %336 = tpu.reciprocal %335 {approx = true} : vector<2x1xf32> -> vector<2x1xf32>
    %337 = vector.broadcast %336 : vector<2x1xf32> to vector<2x16xf32>
    %338 = arith.mulf %333, %337 : vector<2x16xf32>
    %cst_110 = arith.constant dense<0.000000e+00> : vector<2x32xf32>
    %339 = tpu.matmul %338, %59, %cst_110 {dimension_numbers = #tpu.dot_dimension_numbers<[1], [0], [0], [1], [0, 0, 1, 1], [], []>} : vector<2x16xf32>, vector<16x32xf32>, vector<2x32xf32> -> vector<2x32xf32>
    %340 = vector.extract_strided_slice %115 {offsets = [14, 0], sizes = [2, 32], strides = [1, 1]} : vector<16x32xf32> to vector<2x32xf32>
    %341 = tpu.concatenate %339, %316 in 1 : vector<2x32xf32>, vector<2x32xf32> -> vector<2x64xf32>
    %cst_111 = arith.constant dense<0.000000e+00> : vector<2x32xf32>
    %342 = tpu.matmul %341, %116, %cst_111 {dimension_numbers = #tpu.dot_dimension_numbers<[1], [0], [0], [1], [0, 0, 1, 1], [], []>} : vector<2x64xf32>, vector<64x32xf32>, vector<2x32xf32> -> vector<2x32xf32>
    %343 = arith.addf %340, %342 : vector<2x32xf32>
    %344 = vector.broadcast %118 : vector<1x32xf32> to vector<2x32xf32>
    %345 = arith.addf %343, %344 : vector<2x32xf32>
    %346 = math.tanh %345 : vector<2x32xf32>
    %cst_112 = arith.constant dense<0.000000e+00> : vector<2x16xf32>
    %347 = tpu.matmul %330, %60, %cst_112 {dimension_numbers = #tpu.dot_dimension_numbers<[1], [0], [0], [1], [0, 0, 1, 1], [], []>} : vector<2x32xf32>, vector<32x16xf32>, vector<2x16xf32> -> vector<2x16xf32>
    %348 = arith.addf %347, %120 : vector<2x16xf32>
    %349 = math.exp %348 : vector<2x16xf32>
    %cst_113 = arith.constant dense<0.000000e+00> : vector<2xf32>
    %350 = vector.multi_reduction <add>, %349, %cst_113 [1] : vector<2x16xf32> to vector<2xf32>
    %351 = vector.shape_cast %350 : vector<2xf32> to vector<2x1xf32>
    %352 = tpu.reciprocal %351 {approx = true} : vector<2x1xf32> -> vector<2x1xf32>
    %353 = vector.broadcast %352 : vector<2x1xf32> to vector<2x16xf32>
    %354 = arith.mulf %349, %353 : vector<2x16xf32>
    %cst_114 = arith.constant dense<0.000000e+00> : vector<2x32xf32>
    %355 = tpu.matmul %354, %59, %cst_114 {dimension_numbers = #tpu.dot_dimension_numbers<[1], [0], [0], [1], [0, 0, 1, 1], [], []>} : vector<2x16xf32>, vector<16x32xf32>, vector<2x32xf32> -> vector<2x32xf32>
    %356 = tpu.concatenate %346, %355, %330 in 1 : vector<2x32xf32>, vector<2x32xf32>, vector<2x32xf32> -> vector<2x96xf32>
    %cst_115 = arith.constant dense<0.000000e+00> : vector<2x32xf32>
    %357 = tpu.matmul %356, %117, %cst_115 {dimension_numbers = #tpu.dot_dimension_numbers<[1], [0], [0], [1], [0, 0, 1, 1], [], []>} : vector<2x96xf32>, vector<96x32xf32>, vector<2x32xf32> -> vector<2x32xf32>
    %358 = vector.broadcast %119 : vector<1x32xf32> to vector<2x32xf32>
    %359 = arith.addf %357, %358 : vector<2x32xf32>
    %360 = math.tanh %359 : vector<2x32xf32>
    %361 = tpu.concatenate %150, %180, %210, %240, %270, %300, %330, %360 in 0 : vector<2x32xf32>, vector<2x32xf32>, vector<2x32xf32>, vector<2x32xf32>, vector<2x32xf32>, vector<2x32xf32>, vector<2x32xf32>, vector<2x32xf32> -> vector<16x32xf32>
    %c504 = arith.constant 504 : index
    %c0_116 = arith.constant 0 : index
    %362 = vector.load %arg1[%c504, %c0_116] : memref<664x128xf32, #tpu.memory_space<vmem>>, vector<32x32xf32>
    %cst_117 = arith.constant dense<0.000000e+00> : vector<16x32xf32>
    %363 = tpu.matmul %361, %362, %cst_117 {dimension_numbers = #tpu.dot_dimension_numbers<[1], [0], [0], [1], [0, 0, 1, 1], [], []>} : vector<16x32xf32>, vector<32x32xf32>, vector<16x32xf32> -> vector<16x32xf32>
    %c648 = arith.constant 648 : index
    %c0_118 = arith.constant 0 : index
    %364 = vector.load %arg1[%c648, %c0_118] : memref<664x128xf32, #tpu.memory_space<vmem>>, vector<1x32xf32>
    %365 = vector.broadcast %364 : vector<1x32xf32> to vector<16x32xf32>
    %366 = arith.addf %363, %365 : vector<16x32xf32>
    %cst_119 = arith.constant 0.000000e+00 : f32
    %367 = vector.broadcast %cst_119 : f32 to vector<16x32xf32>
    %368 = arith.maximumf %366, %367 : vector<16x32xf32>
    %c536 = arith.constant 536 : index
    %c0_120 = arith.constant 0 : index
    %369 = vector.load %arg1[%c536, %c0_120] : memref<664x128xf32, #tpu.memory_space<vmem>>, vector<32x128xf32>
    %cst_121 = arith.constant dense<0.000000e+00> : vector<16x128xf32>
    %370 = tpu.matmul %368, %369, %cst_121 {dimension_numbers = #tpu.dot_dimension_numbers<[1], [0], [0], [1], [0, 0, 1, 1], [], []>} : vector<16x32xf32>, vector<32x128xf32>, vector<16x128xf32> -> vector<16x128xf32>
    %c656 = arith.constant 656 : index
    %c0_122 = arith.constant 0 : index
    %371 = vector.load %arg1[%c656, %c0_122] : memref<664x128xf32, #tpu.memory_space<vmem>>, vector<1x128xf32>
    %372 = vector.broadcast %371 : vector<1x128xf32> to vector<16x128xf32>
    %373 = arith.addf %370, %372 : vector<16x128xf32>
    %c0_123 = arith.constant 0 : index
    %c0_124 = arith.constant 0 : index
    %374 = vector.load %arg2[%c0_123, %c0_124] : memref<16x128xf32, #tpu.memory_space<vmem>>, vector<16x128xf32>
    tpu.vector_store %arg2[%c0_123, %c0_124], %373 {strides = array<i32>} : memref<16x128xf32, #tpu.memory_space<vmem>>, vector<16x128xf32>,
    return
  }
}

</mosaic_0001>

<llo_original>
// kernel: attn_rnn_model_forward.1
$region0: #{attn_rnn_model_forward.1}
  #allocation0 [shape = 'u32[]', space=smem, size = 0x4, offset = 0x4, fixed_abs, tag = 'smem constant byte address 0x4 - core index']
  #allocation1 [shape = 'u32[144,128]{1,0:T(1,128)}', space=vmem, size = 0x12000, scoped, tag = 'internal scratch']
  %s0 = inlined_call_operand.vmem [shape: s32[34,1], index: 0, kind: input, shape index: {}]
  %s1 = inlined_call_operand.hbm [shape: f32[664,128], index: 1, kind: input, shape index: {}]
  %s2 = inlined_call_operand.vmem [shape: f32[16,128], index: 2, kind: output, shape index: {}]
  %s3 = sld [smem:[#allocation0]]
  $region22: #{attn_rnn_model_forward.1} parent=0
    _
  %s5 = ssub.s32 1, %s3
  %s6 = scalar_select 0, %s5, %s3
  $region1: #{attn_rnn_model_forward.1} parent=0
    #allocation2 [shape = 'u8[339968]{0}', space=vmem, size = 0x53000, scoped, tag = 'input window, operand 1, single buffered']
    #allocation3 [shape = 's32[1]{0}', space=sflag, size = 0x4, scoped, tag = 'scoped memory for attn_rnn_model_forward.1']
    %7 = vsyncpa [#allocation3], 0
    // Predicated region
    $region2: #{attn_rnn_model_forward.1} parent=1 // pred_check
      _
    $region3: #{attn_rnn_model_forward.1} parent=1 // pred_check_branch
      %9 = sbr.rel (0) target = $region5
    $region4: #{attn_rnn_model_forward.1} parent=1 // pred_region
      _
    $region5: #{attn_rnn_model_forward.1} parent=1 // pred_fallthru
      _
    // Predicated region
    $region6: #{attn_rnn_model_forward.1} parent=1 // pred_check
      _
    $region7: #{attn_rnn_model_forward.1} parent=1 // pred_check_branch
      %11 = sbr.rel (0) target = $region9
    $region8: #{attn_rnn_model_forward.1} parent=1 // pred_region
      %s13 = ssub.s32 10624, 10624
      %14 = vsyncadd [#allocation3], %s13
      %s15 = sshll.u32 [#allocation2], 4
      %s16 = int_to_ptr.vmem [resolvable:$true] %s15
      %21 = dma.hbm_to_vmem [thread:$0]  %s1, 10624, %s16, [#allocation3], 128, 128, 8
    $region9: #{attn_rnn_model_forward.1} parent=1 // pred_fallthru
      _
    // Predicated region
    $region10: #{attn_rnn_model_forward.1} parent=1 // pred_check
      _
    $region11: #{attn_rnn_model_forward.1} parent=1 // pred_check_branch
      %23 = sbr.rel (0) target = $region13
    $region12: #{attn_rnn_model_forward.1} parent=1 // pred_region
      %24 = dma.done [#allocation3], 10624
    $region13: #{attn_rnn_model_forward.1} parent=1 // pred_fallthru
      _
    %v25 = vld [vmem:[%s0] sm:$0xff]
    %v26 = vld [vmem:[%s0 + $0x8] sm:$0xff]
    %v27 = vld [vmem:[%s0 + $0x10] sm:$0xff]
    %v28 = vld [vmem:[%s0 + $0x18] sm:$0xff]
    %v29 = vld [vmem:[%s0 + $0x20] sm:$0x3]
    %v30 = vlaneseq
    %v31 = vand.u32 %v30, 127
    %32 = vset.pattern.permute.xlu0 0
    %33 = vperm.xlu0 %32, %v25
    %v34 = vpop.permute.xlu0 %33
    %35 = vset.pattern.permute.xlu0 0
    %36 = vperm.xlu0 %35, %v26
    %v37 = vpop.permute.xlu0 %36
    %vm38 = vcmp.eq.s32.totalorder %v31, %v34
    %vm39 = vcmp.eq.s32.totalorder %v31, %v37
    %v40 = vsel %vm38, 1.0, 0.0
    %v41 = vsel %vm39, 1.0, 0.0
    %v42 = vld [vmem:[#allocation2] sm:$0xff]
    %v43 = vld [vmem:[#allocation2 + $0x8] sm:$0xff]
    %v44 = vld [vmem:[#allocation2 + $0x10] sm:$0xff]
    %v45 = vld [vmem:[#allocation2 + $0x18] sm:$0xff]
    %v46 = vld [vmem:[#allocation2 + $0x20] sm:$0x1f]
    %v47 = vld [vmem:[#allocation2 + $0x240] sm:$0x1]
    %v48 = vlaneseq
    %v49 = vshrl.u32 %v48, 7
    %v50 = vsub.s32 0, %v49
    %v51 = vrot.slane %v47, %v50
    %vm52 = vcmask 302080
    %v54 = vsel %vm52, %v40, 0
    %v57 = vsel %vm52, %v41, 0
    %vm59 = vcmask 1044480
    %v61 = vsel %vm59, %v46, 0
    %63 = vmatprep.subr.mxu0 0.0
    %64 = vmatpush1.msra.mxu0 %v42
    %65 = vmatprep.subr.mxu0 0.0
    %66 = vmatpush1.msra.mxu0 %v43
    %67 = vmatprep.subr.mxu0 0.0
    %68 = vmatpush1.msra.mxu0 %v44
    %69 = vmatprep.subr.mxu0 0.0
    %70 = vmatpush1.msra.mxu0 %v45
    %71 = vmatprep.subr.mxu0 0.0
    %72 = vmatpush1.msra.mxu0 %v61
    %73 = vmatprep.subr.mxu0 0.0
    %74 = vmatpush1.msra.mxu0 0.0
    %75 = vmatprep.subr.mxu0 0.0
    %76 = vmatpush1.msra.mxu0 0.0
    %77 = vmatprep.subr.mxu0 0.0
    %78 = vmatpush1.msra.mxu0 0.0
    %79 = vmatprep.subr.mxu0 0.0
    %80 = vmatpush1.msra.mxu0 0.0
    %81 = vmatprep.subr.mxu0 0.0
    %82 = vmatpush1.msra.mxu0 0.0
    %83 = vmatprep.subr.mxu0 0.0
    %84 = vmatpush1.msra.mxu0 0.0
    %85 = vmatprep.subr.mxu0 0.0
    %86 = vmatpush1.msra.mxu0 0.0
    %87 = vmatprep.subr.mxu0 0.0
    %88 = vmatpush1.msra.mxu0 0.0
    %89 = vmatprep.subr.mxu0 0.0
    %90 = vmatpush1.msra.mxu0 0.0
    %91 = vmatprep.subr.mxu0 0.0
    %92 = vmatpush1.msra.mxu0 0.0
    %93 = vmatprep.subr.mxu0 0.0
    %94 = vmatpush1.msra.mxu0 0.0
    %95 = vmatprep.subr.mxu0 0.0
    %96 = vmatpush1.msra.mxu0 0.0
    %97 = vmatprep.subr.mxu0 0.0
    %98 = vmatpush1.msra.mxu0 0.0
    %99 = vmatprep.subr.mxu0 0.0
    %100 = vmatpush1.msra.mxu0 0.0
    %101 = vmatprep.subr.mxu0 0.0
    %102 = vmatpush1.msra.mxu0 0.0
    %103 = vmatprep.subr.mxu0 0.0
    %104 = vmatpush1.msra.mxu0 0.0
    %105 = vmatprep.subr.mxu0 0.0
    %106 = vmatpush1.msra.mxu0 0.0
    %107 = vmatprep.subr.mxu0 0.0
    %108 = vmatpush1.msra.mxu0 0.0
    %109 = vmatprep.subr.mxu0 0.0
    %110 = vmatpush1.msra.mxu0 0.0
    %111 = vmatprep.subr.mxu0 0.0
    %112 = vmatpush1.msra.mxu0 0.0
    %113 = vmatprep.subr.mxu0 0.0
    %114 = vmatpush1.msra.mxu0 0.0
    %115 = vmatprep.subr.mxu0 0.0
    %116 = vmatpush1.msra.mxu0 0.0
    %117 = vmatprep.subr.mxu0 0.0
    %118 = vmatpush1.msra.mxu0 0.0
    %119 = vmatprep.subr.mxu0 0.0
    %120 = vmatpush1.msra.mxu0 0.0
    %121 = vmatprep.subr.mxu0 0.0
    %122 = vmatpush1.msra.mxu0 0.0
    %123 = vmatprep.subr.mxu0 0.0
    %124 = vmatpush1.msra.mxu0 0.0
    %125 = vmatprep.subr.mxu0 0.0
    %126 = vmatpush1.msra.mxu0 0.0
    %127 = vmatprep.mubr.f32.mxu0 0.0
    %128 = vmatmul.mubr.f32.gmra.mrb[0].mxu0 %v54
    %v129 = vpop.f32.mrb[0].mxu0
    %v130 = vadd.f32 %v51, %v129
    %v131 = vpop.f32.mrb[0].mxu0
    %132 = vmatprep.mubr.f32.mxu0 0.0
    %133 = vmatmul.mubr.f32.gmra.mrb[0].mxu0 %v57
    %v134 = vpop.f32.mrb[0].mxu0
    %v135 = vadd.f32 %v51, %v134
    %v136 = vpop.f32.mrb[0].mxu0
    %137 = vdwg.mxu0
    %v138 = vmax.f32 %v130, 0.0
    %v139 = vmax.f32 %v135, 0.0
    %v140 = vld [vmem:[#allocation2 + $0x28] sm:$0xff]
    %v141 = vld [vmem:[#allocation2 + $0x30] sm:$0xff]
    %v142 = vld [vmem:[#allocation2 + $0x38] sm:$0xff]
    %v143 = vld [vmem:[#allocation2 + $0x40] sm:$0xff]
    %v144 = vld [vmem:[#allocation2 + $0x248] sm:$0x1]
    %v145 = vlaneseq
    %v146 = vshrl.u32 %v145, 7
    %v147 = vsub.s32 0, %v146
    %v148 = vrot.slane %v144, %v147
    %vm149 = vcmask 261120
    %v151 = vsel %vm149, %v138, 0
    %v154 = vsel %vm149, %v139, 0
    %156 = vmatprep.subr.mxu0 0.0
    %157 = vmatpush1.msra.mxu0 %v140
    %158 = vmatprep.subr.mxu0 0.0
    %159 = vmatpush1.msra.mxu0 %v141
    %160 = vmatprep.subr.mxu0 0.0
    %161 = vmatpush1.msra.mxu0 %v142
    %162 = vmatprep.subr.mxu0 0.0
    %163 = vmatpush1.msra.mxu0 %v143
    %164 = vmatprep.subr.mxu0 0.0
    %165 = vmatpush1.msra.mxu0 0.0
    %166 = vmatprep.subr.mxu0 0.0
    %167 = vmatpush1.msra.mxu0 0.0
    %168 = vmatprep.subr.mxu0 0.0
    %169 = vmatpush1.msra.mxu0 0.0
    %170 = vmatprep.subr.mxu0 0.0
    %171 = vmatpush1.msra.mxu0 0.0
    %172 = vmatprep.subr.mxu0 0.0
    %173 = vmatpush1.msra.mxu0 0.0
    %174 = vmatprep.subr.mxu0 0.0
    %175 = vmatpush1.msra.mxu0 0.0
    %176 = vmatprep.subr.mxu0 0.0
    %177 = vmatpush1.msra.mxu0 0.0
    %178 = vmatprep.subr.mxu0 0.0
    %179 = vmatpush1.msra.mxu0 0.0
    %180 = vmatprep.subr.mxu0 0.0
    %181 = vmatpush1.msra.mxu0 0.0
    %182 = vmatprep.subr.mxu0 0.0
    %183 = vmatpush1.msra.mxu0 0.0
    %184 = vmatprep.subr.mxu0 0.0
    %185 = vmatpush1.msra.mxu0 0.0
    %186 = vmatprep.subr.mxu0 0.0
    %187 = vmatpush1.msra.mxu0 0.0
    %188 = vmatprep.subr.mxu0 0.0
    %189 = vmatpush1.msra.mxu0 0.0
    %190 = vmatprep.subr.mxu0 0.0
    %191 = vmatpush1.msra.mxu0 0.0
    %192 = vmatprep.subr.mxu0 0.0
    %193 = vmatpush1.msra.mxu0 0.0
    %194 = vmatprep.subr.mxu0 0.0
    %195 = vmatpush1.msra.mxu0 0.0
    %196 = vmatprep.subr.mxu0 0.0
    %197 = vmatpush1.msra.mxu0 0.0
    %198 = vmatprep.subr.mxu0 0.0
    %199 = vmatpush1.msra.mxu0 0.0
    %200 = vmatprep.subr.mxu0 0.0
    %201 = vmatpush1.msra.mxu0 0.0
    %202 = vmatprep.subr.mxu0 0.0
    %203 = vmatpush1.msra.mxu0 0.0
    %204 = vmatprep.subr.mxu0 0.0
    %205 = vmatpush1.msra.mxu0 0.0
    %206 = vmatprep.subr.mxu0 0.0
    %207 = vmatpush1.msra.mxu0 0.0
    %208 = vmatprep.subr.mxu0 0.0
    %209 = vmatpush1.msra.mxu0 0.0
    %210 = vmatprep.subr.mxu0 0.0
    %211 = vmatpush1.msra.mxu0 0.0
    %212 = vmatprep.subr.mxu0 0.0
    %213 = vmatpush1.msra.mxu0 0.0
    %214 = vmatprep.subr.mxu0 0.0
    %215 = vmatpush1.msra.mxu0 0.0
    %216 = vmatprep.subr.mxu0 0.0
    %217 = vmatpush1.msra.mxu0 0.0
    %218 = vmatprep.subr.mxu0 0.0
    %219 = vmatpush1.msra.mxu0 0.0
    %220 = vmatprep.mubr.f32.mxu0 0.0
    %221 = vmatmul.mubr.f32.gmra.mrb[0].mxu0 %v151
    %v222 = vpop.f32.mrb[0].mxu0
    %v223 = vadd.f32 %v148, %v222
    %v224 = vpop.f32.mrb[0].mxu0
    %225 = vmatprep.mubr.f32.mxu0 0.0
    %226 = vmatmul.mubr.f32.gmra.mrb[0].mxu0 %v154
    %v227 = vpop.f32.mrb[0].mxu0
    %v228 = vadd.f32 %v148, %v227
    %v229 = vpop.f32.mrb[0].mxu0
    %230 = vdwg.mxu0
    %v231 = vmax.f32 %v223, 0.0
    %v232 = vmax.f32 %v228, 0.0
    %v233 = vld [vmem:[#allocation2 + $0x48] sm:$0xff]
    %v234 = vld [vmem:[#allocation2 + $0x50] sm:$0xff]
    %v235 = vld [vmem:[#allocation2 + $0x58] sm:$0xff]
    %v236 = vld [vmem:[#allocation2 + $0x60] sm:$0xff]
    %v237 = vld [vmem:[#allocation2 + $0x250] sm:$0x1]
    %v238 = vlaneseq
    %v239 = vshrl.u32 %v238, 7
    %v240 = vsub.s32 0, %v239
    %v241 = vrot.slane %v237, %v240
    %v243 = vsel %vm149, %v231, 0
    %v246 = vsel %vm149, %v232, 0
    %248 = vmatprep.subr.mxu0 0.0
    %249 = vmatpush1.msra.mxu0 %v233
    %250 = vmatprep.subr.mxu0 0.0
    %251 = vmatpush1.msra.mxu0 %v234
    %252 = vmatprep.subr.mxu0 0.0
    %253 = vmatpush1.msra.mxu0 %v235
    %254 = vmatprep.subr.mxu0 0.0
    %255 = vmatpush1.msra.mxu0 %v236
    %256 = vmatprep.subr.mxu0 0.0
    %257 = vmatpush1.msra.mxu0 0.0
    %258 = vmatprep.subr.mxu0 0.0
    %259 = vmatpush1.msra.mxu0 0.0
    %260 = vmatprep.subr.mxu0 0.0
    %261 = vmatpush1.msra.mxu0 0.0
    %262 = vmatprep.subr.mxu0 0.0
    %263 = vmatpush1.msra.mxu0 0.0
    %264 = vmatprep.subr.mxu0 0.0
    %265 = vmatpush1.msra.mxu0 0.0
    %266 = vmatprep.subr.mxu0 0.0
    %267 = vmatpush1.msra.mxu0 0.0
    %268 = vmatprep.subr.mxu0 0.0
    %269 = vmatpush1.msra.mxu0 0.0
    %270 = vmatprep.subr.mxu0 0.0
    %271 = vmatpush1.msra.mxu0 0.0
    %272 = vmatprep.subr.mxu0 0.0
    %273 = vmatpush1.msra.mxu0 0.0
    %274 = vmatprep.subr.mxu0 0.0
    %275 = vmatpush1.msra.mxu0 0.0
    %276 = vmatprep.subr.mxu0 0.0
    %277 = vmatpush1.msra.mxu0 0.0
    %278 = vmatprep.subr.mxu0 0.0
    %279 = vmatpush1.msra.mxu0 0.0
    %280 = vmatprep.subr.mxu0 0.0
    %281 = vmatpush1.msra.mxu0 0.0
    %282 = vmatprep.subr.mxu0 0.0
    %283 = vmatpush1.msra.mxu0 0.0
    %284 = vmatprep.subr.mxu0 0.0
    %285 = vmatpush1.msra.mxu0 0.0
    %286 = vmatprep.subr.mxu0 0.0
    %287 = vmatpush1.msra.mxu0 0.0
    %288 = vmatprep.subr.mxu0 0.0
    %289 = vmatpush1.msra.mxu0 0.0
    %290 = vmatprep.subr.mxu0 0.0
    %291 = vmatpush1.msra.mxu0 0.0
    %292 = vmatprep.subr.mxu0 0.0
    %293 = vmatpush1.msra.mxu0 0.0
    %294 = vmatprep.subr.mxu0 0.0
    %295 = vmatpush1.msra.mxu0 0.0
    %296 = vmatprep.subr.mxu0 0.0
    %297 = vmatpush1.msra.mxu0 0.0
    %298 = vmatprep.subr.mxu0 0.0
    %299 = vmatpush1.msra.mxu0 0.0
    %300 = vmatprep.subr.mxu0 0.0
    %301 = vmatpush1.msra.mxu0 0.0
    %302 = vmatprep.subr.mxu0 0.0
    %303 = vmatpush1.msra.mxu0 0.0
    %304 = vmatprep.subr.mxu0 0.0
    %305 = vmatpush1.msra.mxu0 0.0
    %306 = vmatprep.subr.mxu0 0.0
    %307 = vmatpush1.msra.mxu0 0.0
    %308 = vmatprep.subr.mxu0 0.0
    %309 = vmatpush1.msra.mxu0 0.0
    %310 = vmatprep.subr.mxu0 0.0
    %311 = vmatpush1.msra.mxu0 0.0
    %312 = vmatprep.mubr.f32.mxu0 0.0
    %313 = vmatmul.mubr.f32.gmra.mrb[0].mxu0 %v243
    %v314 = vpop.f32.mrb[0].mxu0
    %v315 = vadd.f32 %v241, %v314
    %v316 = vpop.f32.mrb[0].mxu0
    %317 = vmatprep.mubr.f32.mxu0 0.0
    %318 = vmatmul.mubr.f32.gmra.mrb[0].mxu0 %v246
    %v319 = vpop.f32.mrb[0].mxu0
    %v320 = vadd.f32 %v241, %v319
    %v321 = vpop.f32.mrb[0].mxu0
    %322 = vdwg.mxu0
    %v323 = vld [vmem:[#allocation2 + $0x68] sm:$0xff]
    %v324 = vld [vmem:[#allocation2 + $0x70] sm:$0xff]
    %v325 = vld [vmem:[#allocation2 + $0x78] sm:$0xff]
    %v326 = vld [vmem:[#allocation2 + $0x80] sm:$0xff]
    %v327 = vtanh.pop %v315
    %v329 = vsel %vm149, %v327, 0
    %331 = vmatprep.subr.mxu0 0.0
    %332 = vmatpush1.msra.mxu0 %v323
    %333 = vmatprep.subr.mxu0 0.0
    %334 = vmatpush1.msra.mxu0 %v324
    %335 = vmatprep.subr.mxu0 0.0
    %336 = vmatpush1.msra.mxu0 %v325
    %337 = vmatprep.subr.mxu0 0.0
    %338 = vmatpush1.msra.mxu0 %v326
    %339 = vmatprep.subr.mxu0 0.0
    %340 = vmatpush1.msra.mxu0 0.0
    %341 = vmatprep.subr.mxu0 0.0
    %342 = vmatpush1.msra.mxu0 0.0
    %343 = vmatprep.subr.mxu0 0.0
    %344 = vmatpush1.msra.mxu0 0.0
    %345 = vmatprep.subr.mxu0 0.0
    %346 = vmatpush1.msra.mxu0 0.0
    %347 = vmatprep.subr.mxu0 0.0
    %348 = vmatpush1.msra.mxu0 0.0
    %349 = vmatprep.subr.mxu0 0.0
    %350 = vmatpush1.msra.mxu0 0.0
    %351 = vmatprep.subr.mxu0 0.0
    %352 = vmatpush1.msra.mxu0 0.0
    %353 = vmatprep.subr.mxu0 0.0
    %354 = vmatpush1.msra.mxu0 0.0
    %355 = vmatprep.subr.mxu0 0.0
    %356 = vmatpush1.msra.mxu0 0.0
    %357 = vmatprep.subr.mxu0 0.0
    %358 = vmatpush1.msra.mxu0 0.0
    %359 = vmatprep.subr.mxu0 0.0
    %360 = vmatpush1.msra.mxu0 0.0
    %361 = vmatprep.subr.mxu0 0.0
    %362 = vmatpush1.msra.mxu0 0.0
    %363 = vmatprep.subr.mxu0 0.0
    %364 = vmatpush1.msra.mxu0 0.0
    %365 = vmatprep.subr.mxu0 0.0
    %366 = vmatpush1.msra.mxu0 0.0
    %367 = vmatprep.subr.mxu0 0.0
    %368 = vmatpush1.msra.mxu0 0.0
    %369 = vmatprep.subr.mxu0 0.0
    %370 = vmatpush1.msra.mxu0 0.0
    %371 = vmatprep.subr.mxu0 0.0
    %372 = vmatpush1.msra.mxu0 0.0
    %373 = vmatprep.subr.mxu0 0.0
    %374 = vmatpush1.msra.mxu0 0.0
    %375 = vmatprep.subr.mxu0 0.0
    %376 = vmatpush1.msra.mxu0 0.0
    %377 = vmatprep.subr.mxu0 0.0
    %378 = vmatpush1.msra.mxu0 0.0
    %379 = vmatprep.subr.mxu0 0.0
    %380 = vmatpush1.msra.mxu0 0.0
    %381 = vmatprep.subr.mxu0 0.0
    %382 = vmatpush1.msra.mxu0 0.0
    %383 = vmatprep.subr.mxu0 0.0
    %384 = vmatpush1.msra.mxu0 0.0
    %385 = vmatprep.subr.mxu0 0.0
    %386 = vmatpush1.msra.mxu0 0.0
    %387 = vmatprep.subr.mxu0 0.0
    %388 = vmatpush1.msra.mxu0 0.0
    %389 = vmatprep.subr.mxu0 0.0
    %390 = vmatpush1.msra.mxu0 0.0
    %391 = vmatprep.subr.mxu0 0.0
    %392 = vmatpush1.msra.mxu0 0.0
    %393 = vmatprep.subr.mxu0 0.0
    %394 = vmatpush1.msra.mxu0 0.0
    %395 = vmatprep.mubr.f32.mxu0 0.0
    %396 = vmatmul.mubr.f32.gmra.mrb[0].mxu0 %v329
    %v397 = vpop.f32.mrb[0].mxu0
    %v398 = vadd.f32 0.0, %v397
    %v399 = vpop.f32.mrb[0].mxu0
    %400 = vdwg.mxu0
    %v402 = vrot.slane %v398, 6
    %v404 = vadd.f32 %v315, %v402
    %v405 = vtanh.pop %v404
    %v407 = vrot.slane %v405, 2
    %v408 = vsel %vm149, %v407, 0
    %410 = vmatprep.subr.mxu0 0.0
    %411 = vmatpush1.msra.mxu0 %v323
    %412 = vmatprep.subr.mxu0 0.0
    %413 = vmatpush1.msra.mxu0 %v324
    %414 = vmatprep.subr.mxu0 0.0
    %415 = vmatpush1.msra.mxu0 %v325
    %416 = vmatprep.subr.mxu0 0.0
    %417 = vmatpush1.msra.mxu0 %v326
    %418 = vmatprep.subr.mxu0 0.0
    %419 = vmatpush1.msra.mxu0 0.0
    %420 = vmatprep.subr.mxu0 0.0
    %421 = vmatpush1.msra.mxu0 0.0
    %422 = vmatprep.subr.mxu0 0.0
    %423 = vmatpush1.msra.mxu0 0.0
    %424 = vmatprep.subr.mxu0 0.0
    %425 = vmatpush1.msra.mxu0 0.0
    %426 = vmatprep.subr.mxu0 0.0
    %427 = vmatpush1.msra.mxu0 0.0
    %428 = vmatprep.subr.mxu0 0.0
    %429 = vmatpush1.msra.mxu0 0.0
    %430 = vmatprep.subr.mxu0 0.0
    %431 = vmatpush1.msra.mxu0 0.0
    %432 = vmatprep.subr.mxu0 0.0
    %433 = vmatpush1.msra.mxu0 0.0
    %434 = vmatprep.subr.mxu0 0.0
    %435 = vmatpush1.msra.mxu0 0.0
    %436 = vmatprep.subr.mxu0 0.0
    %437 = vmatpush1.msra.mxu0 0.0
    %438 = vmatprep.subr.mxu0 0.0
    %439 = vmatpush1.msra.mxu0 0.0
    %440 = vmatprep.subr.mxu0 0.0
    %441 = vmatpush1.msra.mxu0 0.0
    %442 = vmatprep.subr.mxu0 0.0
    %443 = vmatpush1.msra.mxu0 0.0
    %444 = vmatprep.subr.mxu0 0.0
    %445 = vmatpush1.msra.mxu0 0.0
    %446 = vmatprep.subr.mxu0 0.0
    %447 = vmatpush1.msra.mxu0 0.0
    %448 = vmatprep.subr.mxu0 0.0
    %449 = vmatpush1.msra.mxu0 0.0
    %450 = vmatprep.subr.mxu0 0.0
    %451 = vmatpush1.msra.mxu0 0.0
    %452 = vmatprep.subr.mxu0 0.0
    %453 = vmatpush1.msra.mxu0 0.0
    %454 = vmatprep.subr.mxu0 0.0
    %455 = vmatpush1.msra.mxu0 0.0
    %456 = vmatprep.subr.mxu0 0.0
    %457 = vmatpush1.msra.mxu0 0.0
    %458 = vmatprep.subr.mxu0 0.0
    %459 = vmatpush1.msra.mxu0 0.0
    %460 = vmatprep.subr.mxu0 0.0
    %461 = vmatpush1.msra.mxu0 0.0
    %462 = vmatprep.subr.mxu0 0.0
    %463 = vmatpush1.msra.mxu0 0.0
    %464 = vmatprep.subr.mxu0 0.0
    %465 = vmatpush1.msra.mxu0 0.0
    %466 = vmatprep.subr.mxu0 0.0
    %467 = vmatpush1.msra.mxu0 0.0
    %468 = vmatprep.subr.mxu0 0.0
    %469 = vmatpush1.msra.mxu0 0.0
    %470 = vmatprep.subr.mxu0 0.0
    %471 = vmatpush1.msra.mxu0 0.0
    %472 = vmatprep.subr.mxu0 0.0
    %473 = vmatpush1.msra.mxu0 0.0
    %474 = vmatprep.mubr.f32.mxu0 0.0
    %475 = vmatmul.mubr.f32.gmra.mrb[0].mxu0 %v408
    %v476 = vpop.f32.mrb[0].mxu0
    %v477 = vadd.f32 0.0, %v476
    %v478 = vpop.f32.mrb[0].mxu0
    %479 = vdwg.mxu0
    %v481 = vrot.slane %v477, 4
    %v483 = vadd.f32 %v315, %v481
    %v484 = vtanh.pop %v483
    %v486 = vrot.slane %v484, 4
    %v487 = vsel %vm149, %v486, 0
    %489 = vmatprep.subr.mxu0 0.0
    %490 = vmatpush1.msra.mxu0 %v323
    %491 = vmatprep.subr.mxu0 0.0
    %492 = vmatpush1.msra.mxu0 %v324
    %493 = vmatprep.subr.mxu0 0.0
    %494 = vmatpush1.msra.mxu0 %v325
    %495 = vmatprep.subr.mxu0 0.0
    %496 = vmatpush1.msra.mxu0 %v326
    %497 = vmatprep.subr.mxu0 0.0
    %498 = vmatpush1.msra.mxu0 0.0
    %499 = vmatprep.subr.mxu0 0.0
    %500 = vmatpush1.msra.mxu0 0.0
    %501 = vmatprep.subr.mxu0 0.0
    %502 = vmatpush1.msra.mxu0 0.0
    %503 = vmatprep.subr.mxu0 0.0
    %504 = vmatpush1.msra.mxu0 0.0
    %505 = vmatprep.subr.mxu0 0.0
    %506 = vmatpush1.msra.mxu0 0.0
    %507 = vmatprep.subr.mxu0 0.0
    %508 = vmatpush1.msra.mxu0 0.0
    %509 = vmatprep.subr.mxu0 0.0
    %510 = vmatpush1.msra.mxu0 0.0
    %511 = vmatprep.subr.mxu0 0.0
    %512 = vmatpush1.msra.mxu0 0.0
    %513 = vmatprep.subr.mxu0 0.0
    %514 = vmatpush1.msra.mxu0 0.0
    %515 = vmatprep.subr.mxu0 0.0
    %516 = vmatpush1.msra.mxu0 0.0
    %517 = vmatprep.subr.mxu0 0.0
    %518 = vmatpush1.msra.mxu0 0.0
    %519 = vmatprep.subr.mxu0 0.0
    %520 = vmatpush1.msra.mxu0 0.0
    %521 = vmatprep.subr.mxu0 0.0
    %522 = vmatpush1.msra.mxu0 0.0
    %523 = vmatprep.subr.mxu0 0.0
    %524 = vmatpush1.msra.mxu0 0.0
    %525 = vmatprep.subr.mxu0 0.0
    %526 = vmatpush1.msra.mxu0 0.0
    %527 = vmatprep.subr.mxu0 0.0
    %528 = vmatpush1.msra.mxu0 0.0
    %529 = vmatprep.subr.mxu0 0.0
    %530 = vmatpush1.msra.mxu0 0.0
    %531 = vmatprep.subr.mxu0 0.0
    %532 = vmatpush1.msra.mxu0 0.0
    %533 = vmatprep.subr.mxu0 0.0
    %534 = vmatpush1.msra.mxu0 0.0
    %535 = vmatprep.subr.mxu0 0.0
    %536 = vmatpush1.msra.mxu0 0.0
    %537 = vmatprep.subr.mxu0 0.0
    %538 = vmatpush1.msra.mxu0 0.0
    %539 = vmatprep.subr.mxu0 0.0
    %540 = vmatpush1.msra.mxu0 0.0
    %541 = vmatprep.subr.mxu0 0.0
    %542 = vmatpush1.msra.mxu0 0.0
    %543 = vmatprep.subr.mxu0 0.0
    %544 = vmatpush1.msra.mxu0 0.0
    %545 = vmatprep.subr.mxu0 0.0
    %546 = vmatpush1.msra.mxu0 0.0
    %547 = vmatprep.subr.mxu0 0.0
    %548 = vmatpush1.msra.mxu0 0.0
    %549 = vmatprep.subr.mxu0 0.0
    %550 = vmatpush1.msra.mxu0 0.0
    %551 = vmatprep.subr.mxu0 0.0
    %552 = vmatpush1.msra.mxu0 0.0
    %553 = vmatprep.mubr.f32.mxu0 0.0
    %554 = vmatmul.mubr.f32.gmra.mrb[0].mxu0 %v487
    %v555 = vpop.f32.mrb[0].mxu0
    %v556 = vadd.f32 0.0, %v555
    %v557 = vpop.f32.mrb[0].mxu0
    %558 = vdwg.mxu0
    %v560 = vrot.slane %v556, 2
    %v562 = vadd.f32 %v315, %v560
    %v563 = vtanh.pop %v562
    %v565 = vrot.slane %v563, 6
    %v566 = vsel %vm149, %v565, 0
    %568 = vmatprep.subr.mxu0 0.0
    %569 = vmatpush1.msra.mxu0 %v323
    %570 = vmatprep.subr.mxu0 0.0
    %571 = vmatpush1.msra.mxu0 %v324
    %572 = vmatprep.subr.mxu0 0.0
    %573 = vmatpush1.msra.mxu0 %v325
    %574 = vmatprep.subr.mxu0 0.0
    %575 = vmatpush1.msra.mxu0 %v326
    %576 = vmatprep.subr.mxu0 0.0
    %577 = vmatpush1.msra.mxu0 0.0
    %578 = vmatprep.subr.mxu0 0.0
    %579 = vmatpush1.msra.mxu0 0.0
    %580 = vmatprep.subr.mxu0 0.0
    %581 = vmatpush1.msra.mxu0 0.0
    %582 = vmatprep.subr.mxu0 0.0
    %583 = vmatpush1.msra.mxu0 0.0
    %584 = vmatprep.subr.mxu0 0.0
    %585 = vmatpush1.msra.mxu0 0.0
    %586 = vmatprep.subr.mxu0 0.0
    %587 = vmatpush1.msra.mxu0 0.0
    %588 = vmatprep.subr.mxu0 0.0
    %589 = vmatpush1.msra.mxu0 0.0
    %590 = vmatprep.subr.mxu0 0.0
    %591 = vmatpush1.msra.mxu0 0.0
    %592 = vmatprep.subr.mxu0 0.0
    %593 = vmatpush1.msra.mxu0 0.0
    %594 = vmatprep.subr.mxu0 0.0
    %595 = vmatpush1.msra.mxu0 0.0
    %596 = vmatprep.subr.mxu0 0.0
    %597 = vmatpush1.msra.mxu0 0.0
    %598 = vmatprep.subr.mxu0 0.0
    %599 = vmatpush1.msra.mxu0 0.0
    %600 = vmatprep.subr.mxu0 0.0
    %601 = vmatpush1.msra.mxu0 0.0
    %602 = vmatprep.subr.mxu0 0.0
    %603 = vmatpush1.msra.mxu0 0.0
    %604 = vmatprep.subr.mxu0 0.0
    %605 = vmatpush1.msra.mxu0 0.0
    %606 = vmatprep.subr.mxu0 0.0
    %607 = vmatpush1.msra.mxu0 0.0
    %608 = vmatprep.subr.mxu0 0.0
    %609 = vmatpush1.msra.mxu0 0.0
    %610 = vmatprep.subr.mxu0 0.0
    %611 = vmatpush1.msra.mxu0 0.0
    %612 = vmatprep.subr.mxu0 0.0
    %613 = vmatpush1.msra.mxu0 0.0
    %614 = vmatprep.subr.mxu0 0.0
    %615 = vmatpush1.msra.mxu0 0.0
    %616 = vmatprep.subr.mxu0 0.0
    %617 = vmatpush1.msra.mxu0 0.0
    %618 = vmatprep.subr.mxu0 0.0
    %619 = vmatpush1.msra.mxu0 0.0
    %620 = vmatprep.subr.mxu0 0.0
    %621 = vmatpush1.msra.mxu0 0.0
    %622 = vmatprep.subr.mxu0 0.0
    %623 = vmatpush1.msra.mxu0 0.0
    %624 = vmatprep.subr.mxu0 0.0
    %625 = vmatpush1.msra.mxu0 0.0
    %626 = vmatprep.subr.mxu0 0.0
    %627 = vmatpush1.msra.mxu0 0.0
    %628 = vmatprep.subr.mxu0 0.0
    %629 = vmatpush1.msra.mxu0 0.0
    %630 = vmatprep.subr.mxu0 0.0
    %631 = vmatpush1.msra.mxu0 0.0
    %632 = vmatprep.mubr.f32.mxu0 0.0
    %633 = vmatmul.mubr.f32.gmra.mrb[0].mxu0 %v566
    %v634 = vpop.f32.mrb[0].mxu0
    %v635 = vadd.f32 0.0, %v634
    %v636 = vpop.f32.mrb[0].mxu0
    %637 = vdwg.mxu0
    %v638 = vadd.f32 %v320, %v635
    %v639 = vtanh.pop %v638
    %v641 = vsel %vm149, %v639, 0
    %643 = vmatprep.subr.mxu0 0.0
    %644 = vmatpush1.msra.mxu0 %v323
    %645 = vmatprep.subr.mxu0 0.0
    %646 = vmatpush1.msra.mxu0 %v324
    %647 = vmatprep.subr.mxu0 0.0
    %648 = vmatpush1.msra.mxu0 %v325
    %649 = vmatprep.subr.mxu0 0.0
    %650 = vmatpush1.msra.mxu0 %v326
    %651 = vmatprep.subr.mxu0 0.0
    %652 = vmatpush1.msra.mxu0 0.0
    %653 = vmatprep.subr.mxu0 0.0
    %654 = vmatpush1.msra.mxu0 0.0
    %655 = vmatprep.subr.mxu0 0.0
    %656 = vmatpush1.msra.mxu0 0.0
    %657 = vmatprep.subr.mxu0 0.0
    %658 = vmatpush1.msra.mxu0 0.0
    %659 = vmatprep.subr.mxu0 0.0
    %660 = vmatpush1.msra.mxu0 0.0
    %661 = vmatprep.subr.mxu0 0.0
    %662 = vmatpush1.msra.mxu0 0.0
    %663 = vmatprep.subr.mxu0 0.0
    %664 = vmatpush1.msra.mxu0 0.0
    %665 = vmatprep.subr.mxu0 0.0
    %666 = vmatpush1.msra.mxu0 0.0
    %667 = vmatprep.subr.mxu0 0.0
    %668 = vmatpush1.msra.mxu0 0.0
    %669 = vmatprep.subr.mxu0 0.0
    %670 = vmatpush1.msra.mxu0 0.0
    %671 = vmatprep.subr.mxu0 0.0
    %672 = vmatpush1.msra.mxu0 0.0
    %673 = vmatprep.subr.mxu0 0.0
    %674 = vmatpush1.msra.mxu0 0.0
    %675 = vmatprep.subr.mxu0 0.0
    %676 = vmatpush1.msra.mxu0 0.0
    %677 = vmatprep.subr.mxu0 0.0
    %678 = vmatpush1.msra.mxu0 0.0
    %679 = vmatprep.subr.mxu0 0.0
    %680 = vmatpush1.msra.mxu0 0.0
    %681 = vmatprep.subr.mxu0 0.0
    %682 = vmatpush1.msra.mxu0 0.0
    %683 = vmatprep.subr.mxu0 0.0
    %684 = vmatpush1.msra.mxu0 0.0
    %685 = vmatprep.subr.mxu0 0.0
    %686 = vmatpush1.msra.mxu0 0.0
    %687 = vmatprep.subr.mxu0 0.0
    %688 = vmatpush1.msra.mxu0 0.0
    %689 = vmatprep.subr.mxu0 0.0
    %690 = vmatpush1.msra.mxu0 0.0
    %691 = vmatprep.subr.mxu0 0.0
    %692 = vmatpush1.msra.mxu0 0.0
    %693 = vmatprep.subr.mxu0 0.0
    %694 = vmatpush1.msra.mxu0 0.0
    %695 = vmatprep.subr.mxu0 0.0
    %696 = vmatpush1.msra.mxu0 0.0
    %697 = vmatprep.subr.mxu0 0.0
    %698 = vmatpush1.msra.mxu0 0.0
    %699 = vmatprep.subr.mxu0 0.0
    %700 = vmatpush1.msra.mxu0 0.0
    %701 = vmatprep.subr.mxu0 0.0
    %702 = vmatpush1.msra.mxu0 0.0
    %703 = vmatprep.subr.mxu0 0.0
    %704 = vmatpush1.msra.mxu0 0.0
    %705 = vmatprep.subr.mxu0 0.0
    %706 = vmatpush1.msra.mxu0 0.0
    %707 = vmatprep.mubr.f32.mxu0 0.0
    %708 = vmatmul.mubr.f32.gmra.mrb[0].mxu0 %v641
    %v709 = vpop.f32.mrb[0].mxu0
    %v710 = vadd.f32 0.0, %v709
    %v711 = vpop.f32.mrb[0].mxu0
    %712 = vdwg.mxu0
    %v714 = vrot.slane %v710, 6
    %v716 = vadd.f32 %v320, %v714
    %v717 = vtanh.pop %v716
    %v719 = vrot.slane %v717, 2
    %v720 = vsel %vm149, %v719, 0
    %722 = vmatprep.subr.mxu0 0.0
    %723 = vmatpush1.msra.mxu0 %v323
    %724 = vmatprep.subr.mxu0 0.0
    %725 = vmatpush1.msra.mxu0 %v324
    %726 = vmatprep.subr.mxu0 0.0
    %727 = vmatpush1.msra.mxu0 %v325
    %728 = vmatprep.subr.mxu0 0.0
    %729 = vmatpush1.msra.mxu0 %v326
    %730 = vmatprep.subr.mxu0 0.0
    %731 = vmatpush1.msra.mxu0 0.0
    %732 = vmatprep.subr.mxu0 0.0
    %733 = vmatpush1.msra.mxu0 0.0
    %734 = vmatprep.subr.mxu0 0.0
    %735 = vmatpush1.msra.mxu0 0.0
    %736 = vmatprep.subr.mxu0 0.0
    %737 = vmatpush1.msra.mxu0 0.0
    %738 = vmatprep.subr.mxu0 0.0
    %739 = vmatpush1.msra.mxu0 0.0
    %740 = vmatprep.subr.mxu0 0.0
    %741 = vmatpush1.msra.mxu0 0.0
    %742 = vmatprep.subr.mxu0 0.0
    %743 = vmatpush1.msra.mxu0 0.0
    %744 = vmatprep.subr.mxu0 0.0
    %745 = vmatpush1.msra.mxu0 0.0
    %746 = vmatprep.subr.mxu0 0.0
    %747 = vmatpush1.msra.mxu0 0.0
    %748 = vmatprep.subr.mxu0 0.0
    %749 = vmatpush1.msra.mxu0 0.0
    %750 = vmatprep.subr.mxu0 0.0
    %751 = vmatpush1.msra.mxu0 0.0
    %752 = vmatprep.subr.mxu0 0.0
    %753 = vmatpush1.msra.mxu0 0.0
    %754 = vmatprep.subr.mxu0 0.0
    %755 = vmatpush1.msra.mxu0 0.0
    %756 = vmatprep.subr.mxu0 0.0
    %757 = vmatpush1.msra.mxu0 0.0
    %758 = vmatprep.subr.mxu0 0.0
    %759 = vmatpush1.msra.mxu0 0.0
    %760 = vmatprep.subr.mxu0 0.0
    %761 = vmatpush1.msra.mxu0 0.0
    %762 = vmatprep.subr.mxu0 0.0
    %763 = vmatpush1.msra.mxu0 0.0
    %764 = vmatprep.subr.mxu0 0.0
    %765 = vmatpush1.msra.mxu0 0.0
    %766 = vmatprep.subr.mxu0 0.0
    %767 = vmatpush1.msra.mxu0 0.0
    %768 = vmatprep.subr.mxu0 0.0
    %769 = vmatpush1.msra.mxu0 0.0
    %770 = vmatprep.subr.mxu0 0.0
    %771 = vmatpush1.msra.mxu0 0.0
    %772 = vmatprep.subr.mxu0 0.0
    %773 = vmatpush1.msra.mxu0 0.0
    %774 = vmatprep.subr.mxu0 0.0
    %775 = vmatpush1.msra.mxu0 0.0
    %776 = vmatprep.subr.mxu0 0.0
    %777 = vmatpush1.msra.mxu0 0.0
    %778 = vmatprep.subr.mxu0 0.0
    %779 = vmatpush1.msra.mxu0 0.0
    %780 = vmatprep.subr.mxu0 0.0
    %781 = vmatpush1.msra.mxu0 0.0
    %782 = vmatprep.subr.mxu0 0.0
    %783 = vmatpush1.msra.mxu0 0.0
    %784 = vmatprep.subr.mxu0 0.0
    %785 = vmatpush1.msra.mxu0 0.0
    %786 = vmatprep.mubr.f32.mxu0 0.0
    %787 = vmatmul.mubr.f32.gmra.mrb[0].mxu0 %v720
    %v788 = vpop.f32.mrb[0].mxu0
    %v789 = vadd.f32 0.0, %v788
    %v790 = vpop.f32.mrb[0].mxu0
    %791 = vdwg.mxu0
    %v793 = vrot.slane %v789, 4
    %v795 = vadd.f32 %v320, %v793
    %v796 = vtanh.pop %v795
    %v798 = vrot.slane %v796, 4
    %v799 = vsel %vm149, %v798, 0
    %801 = vmatprep.subr.mxu0 0.0
    %802 = vmatpush1.msra.mxu0 %v323
    %803 = vmatprep.subr.mxu0 0.0
    %804 = vmatpush1.msra.mxu0 %v324
    %805 = vmatprep.subr.mxu0 0.0
    %806 = vmatpush1.msra.mxu0 %v325
    %807 = vmatprep.subr.mxu0 0.0
    %808 = vmatpush1.msra.mxu0 %v326
    %809 = vmatprep.subr.mxu0 0.0
    %810 = vmatpush1.msra.mxu0 0.0
    %811 = vmatprep.subr.mxu0 0.0
    %812 = vmatpush1.msra.mxu0 0.0
    %813 = vmatprep.subr.mxu0 0.0
    %814 = vmatpush1.msra.mxu0 0.0
    %815 = vmatprep.subr.mxu0 0.0
    %816 = vmatpush1.msra.mxu0 0.0
    %817 = vmatprep.subr.mxu0 0.0
    %818 = vmatpush1.msra.mxu0 0.0
    %819 = vmatprep.subr.mxu0 0.0
    %820 = vmatpush1.msra.mxu0 0.0
    %821 = vmatprep.subr.mxu0 0.0
    %822 = vmatpush1.msra.mxu0 0.0
    %823 = vmatprep.subr.mxu0 0.0
    %824 = vmatpush1.msra.mxu0 0.0
    %825 = vmatprep.subr.mxu0 0.0
    %826 = vmatpush1.msra.mxu0 0.0
    %827 = vmatprep.subr.mxu0 0.0
    %828 = vmatpush1.msra.mxu0 0.0
    %829 = vmatprep.subr.mxu0 0.0
    %830 = vmatpush1.msra.mxu0 0.0
    %831 = vmatprep.subr.mxu0 0.0
    %832 = vmatpush1.msra.mxu0 0.0
    %833 = vmatprep.subr.mxu0 0.0
    %834 = vmatpush1.msra.mxu0 0.0
    %835 = vmatprep.subr.mxu0 0.0
    %836 = vmatpush1.msra.mxu0 0.0
    %837 = vmatprep.subr.mxu0 0.0
    %838 = vmatpush1.msra.mxu0 0.0
    %839 = vmatprep.subr.mxu0 0.0
    %840 = vmatpush1.msra.mxu0 0.0
    %841 = vmatprep.subr.mxu0 0.0
    %842 = vmatpush1.msra.mxu0 0.0
    %843 = vmatprep.subr.mxu0 0.0
    %844 = vmatpush1.msra.mxu0 0.0
    %845 = vmatprep.subr.mxu0 0.0
    %846 = vmatpush1.msra.mxu0 0.0
    %847 = vmatprep.subr.mxu0 0.0
    %848 = vmatpush1.msra.mxu0 0.0
    %849 = vmatprep.subr.mxu0 0.0
    %850 = vmatpush1.msra.mxu0 0.0
    %851 = vmatprep.subr.mxu0 0.0
    %852 = vmatpush1.msra.mxu0 0.0
    %853 = vmatprep.subr.mxu0 0.0
    %854 = vmatpush1.msra.mxu0 0.0
    %855 = vmatprep.subr.mxu0 0.0
    %856 = vmatpush1.msra.mxu0 0.0
    %857 = vmatprep.subr.mxu0 0.0
    %858 = vmatpush1.msra.mxu0 0.0
    %859 = vmatprep.subr.mxu0 0.0
    %860 = vmatpush1.msra.mxu0 0.0
    %861 = vmatprep.subr.mxu0 0.0
    %862 = vmatpush1.msra.mxu0 0.0
    %863 = vmatprep.subr.mxu0 0.0
    %864 = vmatpush1.msra.mxu0 0.0
    %865 = vmatprep.mubr.f32.mxu0 0.0
    %866 = vmatmul.mubr.f32.gmra.mrb[0].mxu0 %v799
    %v867 = vpop.f32.mrb[0].mxu0
    %v868 = vadd.f32 0.0, %v867
    %v869 = vpop.f32.mrb[0].mxu0
    %870 = vdwg.mxu0
    %v872 = vrot.slane %v868, 2
    %v874 = vadd.f32 %v320, %v872
    %v875 = vtanh.pop %v874
    %vm876 = vcmask 1041408
    %v877 = vsel %vm876, %v327, %v405
    %vm878 = vcmask 1043456
    %v879 = vsel %vm878, %v877, %v484
    %vm880 = vcmask 1045504
    %v881 = vsel %vm880, %v879, %v563
    %v882 = vsel %vm876, %v639, %v717
    %v883 = vsel %vm878, %v882, %v796
    %v884 = vsel %vm880, %v883, %v875
    %v885 = vlaneseq
    %v886 = vshrl.u32 %v885, 7
    %v887 = vsub.s32 %v29, 1
    %v888 = vmul.u32 %v887, 2
    %889 = vset.pattern.permute.xlu0 0
    %890 = vperm.xlu0 %889, %v888
    %v891 = vpop.permute.xlu0 %890
    %v892 = vadd.s32 %v891, %v886
    %vm893 = vcmp.eq.s32.totalorder %v31, %v892
    %v894 = vsel %vm893, 1.0, 0.0
    %vm895 = vcmask 130048
    %v897 = vsel %vm895, %v894, 0
    %899 = vmatprep.subr.mxu0 0.0
    %900 = vmatpush1.msra.mxu0 %v881
    %901 = vmatprep.subr.mxu0 0.0
    %902 = vmatpush1.msra.mxu0 %v884
    %903 = vmatprep.subr.mxu0 0.0
    %904 = vmatpush1.msra.mxu0 0.0
    %905 = vmatprep.subr.mxu0 0.0
    %906 = vmatpush1.msra.mxu0 0.0
    %907 = vmatprep.subr.mxu0 0.0
    %908 = vmatpush1.msra.mxu0 0.0
    %909 = vmatprep.subr.mxu0 0.0
    %910 = vmatpush1.msra.mxu0 0.0
    %911 = vmatprep.subr.mxu0 0.0
    %912 = vmatpush1.msra.mxu0 0.0
    %913 = vmatprep.subr.mxu0 0.0
    %914 = vmatpush1.msra.mxu0 0.0
    %915 = vmatprep.subr.mxu0 0.0
    %916 = vmatpush1.msra.mxu0 0.0
    %917 = vmatprep.subr.mxu0 0.0
    %918 = vmatpush1.msra.mxu0 0.0
    %919 = vmatprep.subr.mxu0 0.0
    %920 = vmatpush1.msra.mxu0 0.0
    %921 = vmatprep.subr.mxu0 0.0
    %922 = vmatpush1.msra.mxu0 0.0
    %923 = vmatprep.subr.mxu0 0.0
    %924 = vmatpush1.msra.mxu0 0.0
    %925 = vmatprep.subr.mxu0 0.0
    %926 = vmatpush1.msra.mxu0 0.0
    %927 = vmatprep.subr.mxu0 0.0
    %928 = vmatpush1.msra.mxu0 0.0
    %929 = vmatprep.subr.mxu0 0.0
    %930 = vmatpush1.msra.mxu0 0.0
    %931 = vmatprep.subr.mxu0 0.0
    %932 = vmatpush1.msra.mxu0 0.0
    %933 = vmatprep.subr.mxu0 0.0
    %934 = vmatpush1.msra.mxu0 0.0
    %935 = vmatprep.subr.mxu0 0.0
    %936 = vmatpush1.msra.mxu0 0.0
    %937 = vmatprep.subr.mxu0 0.0
    %938 = vmatpush1.msra.mxu0 0.0
    %939 = vmatprep.subr.mxu0 0.0
    %940 = vmatpush1.msra.mxu0 0.0
    %941 = vmatprep.subr.mxu0 0.0
    %942 = vmatpush1.msra.mxu0 0.0
    %943 = vmatprep.subr.mxu0 0.0
    %944 = vmatpush1.msra.mxu0 0.0
    %945 = vmatprep.subr.mxu0 0.0
    %946 = vmatpush1.msra.mxu0 0.0
    %947 = vmatprep.subr.mxu0 0.0
    %948 = vmatpush1.msra.mxu0 0.0
    %949 = vmatprep.subr.mxu0 0.0
    %950 = vmatpush1.msra.mxu0 0.0
    %951 = vmatprep.subr.mxu0 0.0
    %952 = vmatpush1.msra.mxu0 0.0
    %953 = vmatprep.subr.mxu0 0.0
    %954 = vmatpush1.msra.mxu0 0.0
    %955 = vmatprep.subr.mxu0 0.0
    %956 = vmatpush1.msra.mxu0 0.0
    %957 = vmatprep.subr.mxu0 0.0
    %958 = vmatpush1.msra.mxu0 0.0
    %959 = vmatprep.subr.mxu0 0.0
    %960 = vmatpush1.msra.mxu0 0.0
    %961 = vmatprep.subr.mxu0 0.0
    %962 = vmatpush1.msra.mxu0 0.0
    %963 = vmatprep.mubr.f32.mxu0 0.0
    %964 = vmatmul.mubr.f32.gmra.mrb[0].mxu0 %v897
    %v965 = vpop.f32.mrb[0].mxu0
    %v966 = vadd.f32 0.0, %v965
    %v967 = vpop.f32.mrb[0].mxu0
    %968 = vdwg.mxu0
    %v969 = vld [vmem:[#allocation2 + $0xd8] sm:$0xff]
    %v970 = vld [vmem:[#allocation2 + $0xe0] sm:$0xff]
    %v971 = vld [vmem:[#allocation2 + $0xe8] sm:$0xff]
    %v972 = vld [vmem:[#allocation2 + $0xf0] sm:$0xff]
    %v973 = vld [vmem:[#allocation2 + $0x268] sm:$0x1]
    %v974 = vlaneseq
    %v975 = vshrl.u32 %v974, 7
    %v976 = vsub.s32 0, %v975
    %v977 = vrot.slane %v973, %v976
    %v979 = vsel %vm149, %v966, 0
    %981 = vmatprep.subr.mxu0 0.0
    %982 = vmatpush1.msra.mxu0 %v969
    %983 = vmatprep.subr.mxu0 0.0
    %984 = vmatpush1.msra.mxu0 %v970
    %985 = vmatprep.subr.mxu0 0.0
    %986 = vmatpush1.msra.mxu0 %v971
    %987 = vmatprep.subr.mxu0 0.0
    %988 = vmatpush1.msra.mxu0 %v972
    %989 = vmatprep.subr.mxu0 0.0
    %990 = vmatpush1.msra.mxu0 0.0
    %991 = vmatprep.subr.mxu0 0.0
    %992 = vmatpush1.msra.mxu0 0.0
    %993 = vmatprep.subr.mxu0 0.0
    %994 = vmatpush1.msra.mxu0 0.0
    %995 = vmatprep.subr.mxu0 0.0
    %996 = vmatpush1.msra.mxu0 0.0
    %997 = vmatprep.subr.mxu0 0.0
    %998 = vmatpush1.msra.mxu0 0.0
    %999 = vmatprep.subr.mxu0 0.0
    %1000 = vmatpush1.msra.mxu0 0.0
    %1001 = vmatprep.subr.mxu0 0.0
    %1002 = vmatpush1.msra.mxu0 0.0
    %1003 = vmatprep.subr.mxu0 0.0
    %1004 = vmatpush1.msra.mxu0 0.0
    %1005 = vmatprep.subr.mxu0 0.0
    %1006 = vmatpush1.msra.mxu0 0.0
    %1007 = vmatprep.subr.mxu0 0.0
    %1008 = vmatpush1.msra.mxu0 0.0
    %1009 = vmatprep.subr.mxu0 0.0
    %1010 = vmatpush1.msra.mxu0 0.0
    %1011 = vmatprep.subr.mxu0 0.0
    %1012 = vmatpush1.msra.mxu0 0.0
    %1013 = vmatprep.subr.mxu0 0.0
    %1014 = vmatpush1.msra.mxu0 0.0
    %1015 = vmatprep.subr.mxu0 0.0
    %1016 = vmatpush1.msra.mxu0 0.0
    %1017 = vmatprep.subr.mxu0 0.0
    %1018 = vmatpush1.msra.mxu0 0.0
    %1019 = vmatprep.subr.mxu0 0.0
    %1020 = vmatpush1.msra.mxu0 0.0
    %1021 = vmatprep.subr.mxu0 0.0
    %1022 = vmatpush1.msra.mxu0 0.0
    %1023 = vmatprep.subr.mxu0 0.0
    %1024 = vmatpush1.msra.mxu0 0.0
    %1025 = vmatprep.subr.mxu0 0.0
    %1026 = vmatpush1.msra.mxu0 0.0
    %1027 = vmatprep.subr.mxu0 0.0
    %1028 = vmatpush1.msra.mxu0 0.0
    %1029 = vmatprep.subr.mxu0 0.0
    %1030 = vmatpush1.msra.mxu0 0.0
    %1031 = vmatprep.subr.mxu0 0.0
    %1032 = vmatpush1.msra.mxu0 0.0
    %1033 = vmatprep.subr.mxu0 0.0
    %1034 = vmatpush1.msra.mxu0 0.0
    %1035 = vmatprep.subr.mxu0 0.0
    %1036 = vmatpush1.msra.mxu0 0.0
    %1037 = vmatprep.subr.mxu0 0.0
    %1038 = vmatpush1.msra.mxu0 0.0
    %1039 = vmatprep.subr.mxu0 0.0
    %1040 = vmatpush1.msra.mxu0 0.0
    %1041 = vmatprep.subr.mxu0 0.0
    %1042 = vmatpush1.msra.mxu0 0.0
    %1043 = vmatprep.subr.mxu0 0.0
    %1044 = vmatpush1.msra.mxu0 0.0
    %1045 = vmatprep.mubr.f32.mxu0 0.0
    %1046 = vmatmul.mubr.f32.gmra.mrb[0].mxu0 %v979
    %v1047 = vpop.f32.mrb[0].mxu0
    %v1048 = vadd.f32 %v977, %v1047
    %v1049 = vpop.f32.mrb[0].mxu0
    %1050 = vdwg.mxu0
    %v1051 = vmax.f32 %v1048, 0.0
    %v1052 = vld [vmem:[#allocation2 + $0xf8] sm:$0xff]
    %v1053 = vld [vmem:[#allocation2 + $0x100] sm:$0xff]
    %v1054 = vld [vmem:[#allocation2 + $0x108] sm:$0xff]
    %v1055 = vld [vmem:[#allocation2 + $0x110] sm:$0xff]
    %v1056 = vld [vmem:[#allocation2 + $0x118] sm:$0xff]
    %v1057 = vld [vmem:[#allocation2 + $0x120] sm:$0xff]
    %v1058 = vld [vmem:[#allocation2 + $0x128] sm:$0xff]
    %v1059 = vld [vmem:[#allocation2 + $0x130] sm:$0xff]
    %v1060 = vld [vmem:[#allocation2 + $0x270] sm:$0x1]
    %v1061 = vlaneseq
    %v1062 = vshrl.u32 %v1061, 7
    %v1063 = vsub.s32 0, %v1062
    %v1064 = vrot.slane %v1060, %v1063
    %vm1065 = vcmask 523264
    %v1067 = vsel %vm1065, %v1051, 0
    %1069 = vmatprep.subr.mxu0 0.0
    %1070 = vmatpush1.msra.mxu0 %v1052
    %1071 = vmatprep.subr.mxu0 0.0
    %1072 = vmatpush1.msra.mxu0 %v1053
    %1073 = vmatprep.subr.mxu0 0.0
    %1074 = vmatpush1.msra.mxu0 %v1054
    %1075 = vmatprep.subr.mxu0 0.0
    %1076 = vmatpush1.msra.mxu0 %v1055
    %1077 = vmatprep.subr.mxu0 0.0
    %1078 = vmatpush1.msra.mxu0 %v1056
    %1079 = vmatprep.subr.mxu0 0.0
    %1080 = vmatpush1.msra.mxu0 %v1057
    %1081 = vmatprep.subr.mxu0 0.0
    %1082 = vmatpush1.msra.mxu0 %v1058
    %1083 = vmatprep.subr.mxu0 0.0
    %1084 = vmatpush1.msra.mxu0 %v1059
    %1085 = vmatprep.subr.mxu0 0.0
    %1086 = vmatpush1.msra.mxu0 0.0
    %1087 = vmatprep.subr.mxu0 0.0
    %1088 = vmatpush1.msra.mxu0 0.0
    %1089 = vmatprep.subr.mxu0 0.0
    %1090 = vmatpush1.msra.mxu0 0.0
    %1091 = vmatprep.subr.mxu0 0.0
    %1092 = vmatpush1.msra.mxu0 0.0
    %1093 = vmatprep.subr.mxu0 0.0
    %1094 = vmatpush1.msra.mxu0 0.0
    %1095 = vmatprep.subr.mxu0 0.0
    %1096 = vmatpush1.msra.mxu0 0.0
    %1097 = vmatprep.subr.mxu0 0.0
    %1098 = vmatpush1.msra.mxu0 0.0
    %1099 = vmatprep.subr.mxu0 0.0
    %1100 = vmatpush1.msra.mxu0 0.0
    %1101 = vmatprep.subr.mxu0 0.0
    %1102 = vmatpush1.msra.mxu0 0.0
    %1103 = vmatprep.subr.mxu0 0.0
    %1104 = vmatpush1.msra.mxu0 0.0
    %1105 = vmatprep.subr.mxu0 0.0
    %1106 = vmatpush1.msra.mxu0 0.0
    %1107 = vmatprep.subr.mxu0 0.0
    %1108 = vmatpush1.msra.mxu0 0.0
    %1109 = vmatprep.subr.mxu0 0.0
    %1110 = vmatpush1.msra.mxu0 0.0
    %1111 = vmatprep.subr.mxu0 0.0
    %1112 = vmatpush1.msra.mxu0 0.0
    %1113 = vmatprep.subr.mxu0 0.0
    %1114 = vmatpush1.msra.mxu0 0.0
    %1115 = vmatprep.subr.mxu0 0.0
    %1116 = vmatpush1.msra.mxu0 0.0
    %1117 = vmatprep.subr.mxu0 0.0
    %1118 = vmatpush1.msra.mxu0 0.0
    %1119 = vmatprep.subr.mxu0 0.0
    %1120 = vmatpush1.msra.mxu0 0.0
    %1121 = vmatprep.subr.mxu0 0.0
    %1122 = vmatpush1.msra.mxu0 0.0
    %1123 = vmatprep.subr.mxu0 0.0
    %1124 = vmatpush1.msra.mxu0 0.0
    %1125 = vmatprep.subr.mxu0 0.0
    %1126 = vmatpush1.msra.mxu0 0.0
    %1127 = vmatprep.subr.mxu0 0.0
    %1128 = vmatpush1.msra.mxu0 0.0
    %1129 = vmatprep.subr.mxu0 0.0
    %1130 = vmatpush1.msra.mxu0 0.0
    %1131 = vmatprep.subr.mxu0 0.0
    %1132 = vmatpush1.msra.mxu0 0.0
    %1133 = vmatprep.mubr.f32.mxu0 0.0
    %1134 = vmatmul.mubr.f32.gmra.mrb[0].mxu0 %v1067
    %v1135 = vpop.f32.mrb[0].mxu0
    %v1136 = vadd.f32 %v1064, %v1135
    %v1137 = vpop.f32.mrb[0].mxu0
    %1138 = vdwg.mxu0
    %v1139 = vmax.f32 %v1136, 0.0
    %v1141 = vrot.slane %v1139, 7
    %1142 = vrot.lane.b32.xlu0 %v1141, 96
    %v1143 = vpop.permute.xlu0 %1142
    %vm1145 = vcmask 1040384
    %v1146 = vsel %vm1145, %v1139, %v1143
    %v1147 = vrot.slane %v1139, 1
    %1149 = vrot.lane.b32.xlu0 %v1139, 96
    %v1150 = vpop.permute.xlu0 %1149
    %v1152 = vsel %vm1145, %v1147, %v1150
    %1153 = vset.pattern.permute.xlu0 0
    %1154 = vperm.xlu0 %1153, %v27
    %v1155 = vpop.permute.xlu0 %1154
    %1156 = vset.pattern.permute.xlu0 0
    %1157 = vperm.xlu0 %1156, %v28
    %v1158 = vpop.permute.xlu0 %1157
    %vm1159 = vcmp.eq.s32.totalorder %v31, %v1155
    %vm1160 = vcmp.eq.s32.totalorder %v31, %v1158
    %v1161 = vsel %vm1159, 1.0, 0.0
    %v1162 = vsel %vm1160, 1.0, 0.0
    %v1163 = vld [vmem:[#allocation2 + $0x88] sm:$0xff]
    %v1164 = vld [vmem:[#allocation2 + $0x90] sm:$0xff]
    %v1165 = vld [vmem:[#allocation2 + $0x98] sm:$0xff]
    %v1166 = vld [vmem:[#allocation2 + $0xa0] sm:$0xff]
    %v1167 = vld [vmem:[#allocation2 + $0xa8] sm:$0xff]
    %v1168 = vld [vmem:[#allocation2 + $0xb0] sm:$0x1]
    %v1169 = vld [vmem:[#allocation2 + $0x258] sm:$0x1]
    %v1170 = vlaneseq
    %v1171 = vshrl.u32 %v1170, 7
    %v1172 = vsub.s32 0, %v1171
    %v1173 = vrot.slane %v1169, %v1172
    %vm1174 = vcmask 334848
    %v1176 = vsel %vm1174, %v1161, 0
    %v1179 = vsel %vm1174, %v1162, 0
    %v1182 = vsel %vm1145, %v1168, 0
    %1184 = vmatprep.subr.mxu0 0.0
    %1185 = vmatpush1.msra.mxu0 %v1163
    %1186 = vmatprep.subr.mxu0 0.0
    %1187 = vmatpush1.msra.mxu0 %v1164
    %1188 = vmatprep.subr.mxu0 0.0
    %1189 = vmatpush1.msra.mxu0 %v1165
    %1190 = vmatprep.subr.mxu0 0.0
    %1191 = vmatpush1.msra.mxu0 %v1166
    %1192 = vmatprep.subr.mxu0 0.0
    %1193 = vmatpush1.msra.mxu0 %v1167
    %1194 = vmatprep.subr.mxu0 0.0
    %1195 = vmatpush1.msra.mxu0 %v1182
    %1196 = vmatprep.subr.mxu0 0.0
    %1197 = vmatpush1.msra.mxu0 0.0
    %1198 = vmatprep.subr.mxu0 0.0
    %1199 = vmatpush1.msra.mxu0 0.0
    %1200 = vmatprep.subr.mxu0 0.0
    %1201 = vmatpush1.msra.mxu0 0.0
    %1202 = vmatprep.subr.mxu0 0.0
    %1203 = vmatpush1.msra.mxu0 0.0
    %1204 = vmatprep.subr.mxu0 0.0
    %1205 = vmatpush1.msra.mxu0 0.0
    %1206 = vmatprep.subr.mxu0 0.0
    %1207 = vmatpush1.msra.mxu0 0.0
    %1208 = vmatprep.subr.mxu0 0.0
    %1209 = vmatpush1.msra.mxu0 0.0
    %1210 = vmatprep.subr.mxu0 0.0
    %1211 = vmatpush1.msra.mxu0 0.0
    %1212 = vmatprep.subr.mxu0 0.0
    %1213 = vmatpush1.msra.mxu0 0.0
    %1214 = vmatprep.subr.mxu0 0.0
    %1215 = vmatpush1.msra.mxu0 0.0
    %1216 = vmatprep.subr.mxu0 0.0
    %1217 = vmatpush1.msra.mxu0 0.0
    %1218 = vmatprep.subr.mxu0 0.0
    %1219 = vmatpush1.msra.mxu0 0.0
    %1220 = vmatprep.subr.mxu0 0.0
    %1221 = vmatpush1.msra.mxu0 0.0
    %1222 = vmatprep.subr.mxu0 0.0
    %1223 = vmatpush1.msra.mxu0 0.0
    %1224 = vmatprep.subr.mxu0 0.0
    %1225 = vmatpush1.msra.mxu0 0.0
    %1226 = vmatprep.subr.mxu0 0.0
    %1227 = vmatpush1.msra.mxu0 0.0
    %1228 = vmatprep.subr.mxu0 0.0
    %1229 = vmatpush1.msra.mxu0 0.0
    %1230 = vmatprep.subr.mxu0 0.0
    %1231 = vmatpush1.msra.mxu0 0.0
    %1232 = vmatprep.subr.mxu0 0.0
    %1233 = vmatpush1.msra.mxu0 0.0
    %1234 = vmatprep.subr.mxu0 0.0
    %1235 = vmatpush1.msra.mxu0 0.0
    %1236 = vmatprep.subr.mxu0 0.0
    %1237 = vmatpush1.msra.mxu0 0.0
    %1238 = vmatprep.subr.mxu0 0.0
    %1239 = vmatpush1.msra.mxu0 0.0
    %1240 = vmatprep.subr.mxu0 0.0
    %1241 = vmatpush1.msra.mxu0 0.0
    %1242 = vmatprep.subr.mxu0 0.0
    %1243 = vmatpush1.msra.mxu0 0.0
    %1244 = vmatprep.subr.mxu0 0.0
    %1245 = vmatpush1.msra.mxu0 0.0
    %1246 = vmatprep.subr.mxu0 0.0
    %1247 = vmatpush1.msra.mxu0 0.0
    %1248 = vmatprep.mubr.f32.mxu0 0.0
    %1249 = vmatmul.mubr.f32.gmra.mrb[0].mxu0 %v1176
    %v1250 = vpop.f32.mrb[0].mxu0
    %v1251 = vadd.f32 %v1173, %v1250
    %v1252 = vpop.f32.mrb[0].mxu0
    %1253 = vmatprep.mubr.f32.mxu0 0.0
    %1254 = vmatmul.mubr.f32.gmra.mrb[0].mxu0 %v1179
    %v1255 = vpop.f32.mrb[0].mxu0
    %v1256 = vadd.f32 %v1173, %v1255
    %v1257 = vpop.f32.mrb[0].mxu0
    %1258 = vdwg.mxu0
    %v1259 = vmax.f32 %v1251, 0.0
    %v1260 = vmax.f32 %v1256, 0.0
    %v1261 = vld [vmem:[#allocation2 + $0xb8] sm:$0xff]
    %v1262 = vld [vmem:[#allocation2 + $0xc0] sm:$0xff]
    %v1263 = vld [vmem:[#allocation2 + $0xc8] sm:$0xff]
    %v1264 = vld [vmem:[#allocation2 + $0xd0] sm:$0xff]
    %v1265 = vld [vmem:[#allocation2 + $0x260] sm:$0x1]
    %v1266 = vlaneseq
    %v1267 = vshrl.u32 %v1266, 7
    %v1268 = vsub.s32 0, %v1267
    %v1269 = vrot.slane %v1265, %v1268
    %v1271 = vsel %vm149, %v1259, 0
    %v1274 = vsel %vm149, %v1260, 0
    %1276 = vmatprep.subr.mxu0 0.0
    %1277 = vmatpush1.msra.mxu0 %v1261
    %1278 = vmatprep.subr.mxu0 0.0
    %1279 = vmatpush1.msra.mxu0 %v1262
    %1280 = vmatprep.subr.mxu0 0.0
    %1281 = vmatpush1.msra.mxu0 %v1263
    %1282 = vmatprep.subr.mxu0 0.0
    %1283 = vmatpush1.msra.mxu0 %v1264
    %1284 = vmatprep.subr.mxu0 0.0
    %1285 = vmatpush1.msra.mxu0 0.0
    %1286 = vmatprep.subr.mxu0 0.0
    %1287 = vmatpush1.msra.mxu0 0.0
    %1288 = vmatprep.subr.mxu0 0.0
    %1289 = vmatpush1.msra.mxu0 0.0
    %1290 = vmatprep.subr.mxu0 0.0
    %1291 = vmatpush1.msra.mxu0 0.0
    %1292 = vmatprep.subr.mxu0 0.0
    %1293 = vmatpush1.msra.mxu0 0.0
    %1294 = vmatprep.subr.mxu0 0.0
    %1295 = vmatpush1.msra.mxu0 0.0
    %1296 = vmatprep.subr.mxu0 0.0
    %1297 = vmatpush1.msra.mxu0 0.0
    %1298 = vmatprep.subr.mxu0 0.0
    %1299 = vmatpush1.msra.mxu0 0.0
    %1300 = vmatprep.subr.mxu0 0.0
    %1301 = vmatpush1.msra.mxu0 0.0
    %1302 = vmatprep.subr.mxu0 0.0
    %1303 = vmatpush1.msra.mxu0 0.0
    %1304 = vmatprep.subr.mxu0 0.0
    %1305 = vmatpush1.msra.mxu0 0.0
    %1306 = vmatprep.subr.mxu0 0.0
    %1307 = vmatpush1.msra.mxu0 0.0
    %1308 = vmatprep.subr.mxu0 0.0
    %1309 = vmatpush1.msra.mxu0 0.0
    %1310 = vmatprep.subr.mxu0 0.0
    %1311 = vmatpush1.msra.mxu0 0.0
    %1312 = vmatprep.subr.mxu0 0.0
    %1313 = vmatpush1.msra.mxu0 0.0
    %1314 = vmatprep.subr.mxu0 0.0
    %1315 = vmatpush1.msra.mxu0 0.0
    %1316 = vmatprep.subr.mxu0 0.0
    %1317 = vmatpush1.msra.mxu0 0.0
    %1318 = vmatprep.subr.mxu0 0.0
    %1319 = vmatpush1.msra.mxu0 0.0
    %1320 = vmatprep.subr.mxu0 0.0
    %1321 = vmatpush1.msra.mxu0 0.0
    %1322 = vmatprep.subr.mxu0 0.0
    %1323 = vmatpush1.msra.mxu0 0.0
    %1324 = vmatprep.subr.mxu0 0.0
    %1325 = vmatpush1.msra.mxu0 0.0
    %1326 = vmatprep.subr.mxu0 0.0
    %1327 = vmatpush1.msra.mxu0 0.0
    %1328 = vmatprep.subr.mxu0 0.0
    %1329 = vmatpush1.msra.mxu0 0.0
    %1330 = vmatprep.subr.mxu0 0.0
    %1331 = vmatpush1.msra.mxu0 0.0
    %1332 = vmatprep.subr.mxu0 0.0
    %1333 = vmatpush1.msra.mxu0 0.0
    %1334 = vmatprep.subr.mxu0 0.0
    %1335 = vmatpush1.msra.mxu0 0.0
    %1336 = vmatprep.subr.mxu0 0.0
    %1337 = vmatpush1.msra.mxu0 0.0
    %1338 = vmatprep.subr.mxu0 0.0
    %1339 = vmatpush1.msra.mxu0 0.0
    %1340 = vmatprep.mubr.f32.mxu0 0.0
    %1341 = vmatmul.mubr.f32.gmra.mrb[0].mxu0 %v1271
    %v1342 = vpop.f32.mrb[0].mxu0
    %v1343 = vadd.f32 %v1269, %v1342
    %v1344 = vpop.f32.mrb[0].mxu0
    %1345 = vmatprep.mubr.f32.mxu0 0.0
    %1346 = vmatmul.mubr.f32.gmra.mrb[0].mxu0 %v1274
    %v1347 = vpop.f32.mrb[0].mxu0
    %v1348 = vadd.f32 %v1269, %v1347
    %v1349 = vpop.f32.mrb[0].mxu0
    %1350 = vdwg.mxu0
    %v1351 = vmax.f32 %v1343, 0.0
    %v1352 = vmax.f32 %v1348, 0.0
    %v1353 = vld [vmem:[#allocation2 + $0x138] sm:$0xff]
    %v1354 = vld [vmem:[#allocation2 + $0x140] sm:$0xff]
    %v1355 = vld [vmem:[#allocation2 + $0x148] sm:$0xff]
    %v1356 = vld [vmem:[#allocation2 + $0x150] sm:$0xff]
    %v1358 = vsel %vm149, %v1351, 0
    %v1361 = vsel %vm149, %v1352, 0
    %1363 = vmatprep.subr.mxu0 0.0
    %1364 = vmatpush1.msra.mxu0 %v1353
    %1365 = vmatprep.subr.mxu0 0.0
    %1366 = vmatpush1.msra.mxu0 %v1354
    %1367 = vmatprep.subr.mxu0 0.0
    %1368 = vmatpush1.msra.mxu0 %v1355
    %1369 = vmatprep.subr.mxu0 0.0
    %1370 = vmatpush1.msra.mxu0 %v1356
    %1371 = vmatprep.subr.mxu0 0.0
    %1372 = vmatpush1.msra.mxu0 0.0
    %1373 = vmatprep.subr.mxu0 0.0
    %1374 = vmatpush1.msra.mxu0 0.0
    %1375 = vmatprep.subr.mxu0 0.0
    %1376 = vmatpush1.msra.mxu0 0.0
    %1377 = vmatprep.subr.mxu0 0.0
    %1378 = vmatpush1.msra.mxu0 0.0
    %1379 = vmatprep.subr.mxu0 0.0
    %1380 = vmatpush1.msra.mxu0 0.0
    %1381 = vmatprep.subr.mxu0 0.0
    %1382 = vmatpush1.msra.mxu0 0.0
    %1383 = vmatprep.subr.mxu0 0.0
    %1384 = vmatpush1.msra.mxu0 0.0
    %1385 = vmatprep.subr.mxu0 0.0
    %1386 = vmatpush1.msra.mxu0 0.0
    %1387 = vmatprep.subr.mxu0 0.0
    %1388 = vmatpush1.msra.mxu0 0.0
    %1389 = vmatprep.subr.mxu0 0.0
    %1390 = vmatpush1.msra.mxu0 0.0
    %1391 = vmatprep.subr.mxu0 0.0
    %1392 = vmatpush1.msra.mxu0 0.0
    %1393 = vmatprep.subr.mxu0 0.0
    %1394 = vmatpush1.msra.mxu0 0.0
    %1395 = vmatprep.subr.mxu0 0.0
    %1396 = vmatpush1.msra.mxu0 0.0
    %1397 = vmatprep.subr.mxu0 0.0
    %1398 = vmatpush1.msra.mxu0 0.0
    %1399 = vmatprep.subr.mxu0 0.0
    %1400 = vmatpush1.msra.mxu0 0.0
    %1401 = vmatprep.subr.mxu0 0.0
    %1402 = vmatpush1.msra.mxu0 0.0
    %1403 = vmatprep.subr.mxu0 0.0
    %1404 = vmatpush1.msra.mxu0 0.0
    %1405 = vmatprep.subr.mxu0 0.0
    %1406 = vmatpush1.msra.mxu0 0.0
    %1407 = vmatprep.subr.mxu0 0.0
    %1408 = vmatpush1.msra.mxu0 0.0
    %1409 = vmatprep.subr.mxu0 0.0
    %1410 = vmatpush1.msra.mxu0 0.0
    %1411 = vmatprep.subr.mxu0 0.0
    %1412 = vmatpush1.msra.mxu0 0.0
    %1413 = vmatprep.subr.mxu0 0.0
    %1414 = vmatpush1.msra.mxu0 0.0
    %1415 = vmatprep.subr.mxu0 0.0
    %1416 = vmatpush1.msra.mxu0 0.0
    %1417 = vmatprep.subr.mxu0 0.0
    %1418 = vmatpush1.msra.mxu0 0.0
    %1419 = vmatprep.subr.mxu0 0.0
    %1420 = vmatpush1.msra.mxu0 0.0
    %1421 = vmatprep.subr.mxu0 0.0
    %1422 = vmatpush1.msra.mxu0 0.0
    %1423 = vmatprep.subr.mxu0 0.0
    %1424 = vmatpush1.msra.mxu0 0.0
    %1425 = vmatprep.subr.mxu0 0.0
    %1426 = vmatpush1.msra.mxu0 0.0
    %1427 = vmatprep.mubr.f32.mxu0 0.0
    %1428 = vmatmul.mubr.f32.gmra.mrb[0].mxu0 %v1358
    %v1429 = vpop.f32.mrb[0].mxu0
    %v1430 = vadd.f32 0.0, %v1429
    %v1431 = vpop.f32.mrb[0].mxu0
    %1432 = vmatprep.mubr.f32.mxu0 0.0
    %1433 = vmatmul.mubr.f32.gmra.mrb[0].mxu0 %v1361
    %v1434 = vpop.f32.mrb[0].mxu0
    %v1435 = vadd.f32 0.0, %v1434
    %v1436 = vpop.f32.mrb[0].mxu0
    %1437 = vdwg.mxu0
    %v1438 = vld [vmem:[#allocation2 + $0x158] sm:$0xff]
    %v1439 = vld [vmem:[#allocation2 + $0x160] sm:$0xff]
    %v1440 = vld [vmem:[#allocation2 + $0x168] sm:$0xff]
    %v1441 = vld [vmem:[#allocation2 + $0x170] sm:$0xff]
    %v1442 = vld [vmem:[#allocation2 + $0x178] sm:$0xff]
    %v1443 = vld [vmem:[#allocation2 + $0x180] sm:$0xff]
    %v1444 = vld [vmem:[#allocation2 + $0x188] sm:$0xff]
    %v1445 = vld [vmem:[#allocation2 + $0x190] sm:$0xff]
    %v1446 = vld [vmem:[#allocation2 + $0x198] sm:$0xff]
    %v1447 = vld [vmem:[#allocation2 + $0x1a0] sm:$0xff]
    %v1448 = vld [vmem:[#allocation2 + $0x1a8] sm:$0xff]
    %v1449 = vld [vmem:[#allocation2 + $0x1b0] sm:$0xff]
    %v1450 = vld [vmem:[#allocation2 + $0x1b8] sm:$0xff]
    %v1451 = vld [vmem:[#allocation2 + $0x1c0] sm:$0xff]
    %v1452 = vld [vmem:[#allocation2 + $0x1c8] sm:$0xff]
    %v1453 = vld [vmem:[#allocation2 + $0x1d0] sm:$0xff]
    %v1454 = vld [vmem:[#allocation2 + $0x1d8] sm:$0xff]
    %v1455 = vld [vmem:[#allocation2 + $0x1e0] sm:$0xff]
    %v1456 = vld [vmem:[#allocation2 + $0x1e8] sm:$0xff]
    %v1457 = vld [vmem:[#allocation2 + $0x1f0] sm:$0xff]
    %v1458 = vld [vmem:[#allocation2 + $0x278] sm:$0x1]
    %v1459 = vld [vmem:[#allocation2 + $0x280] sm:$0x1]
    %v1460 = vld [vmem:[#allocation2 + $0x238] sm:$0x3]
    %v1462 = vsel %vm149, %v1146, 0
    %v1465 = vsel %vm149, %v881, 0
    %v1468 = vsel %vm149, %v884, 0
    %1470 = vmatprep.subr.mxu0 0.0
    %1471 = vmatpush1.xpose.msra.mxu0 %v1465
    %1472 = vmatprep.subr.mxu0 0.0
    %1473 = vmatpush1.xpose.msra.mxu0 %v1468
    %1474 = vmatprep.subr.mxu0 0.0
    %1475 = vmatpush1.xpose.msra.mxu0 0.0
    %1476 = vmatprep.subr.mxu0 0.0
    %1477 = vmatpush1.xpose.msra.mxu0 0.0
    %1478 = vmatprep.subr.mxu0 0.0
    %1479 = vmatpush1.xpose.msra.mxu0 0.0
    %1480 = vmatprep.subr.mxu0 0.0
    %1481 = vmatpush1.xpose.msra.mxu0 0.0
    %1482 = vmatprep.subr.mxu0 0.0
    %1483 = vmatpush1.xpose.msra.mxu0 0.0
    %1484 = vmatprep.subr.mxu0 0.0
    %1485 = vmatpush1.xpose.msra.mxu0 0.0
    %1486 = vmatprep.subr.mxu0 0.0
    %1487 = vmatpush1.xpose.msra.mxu0 0.0
    %1488 = vmatprep.subr.mxu0 0.0
    %1489 = vmatpush1.xpose.msra.mxu0 0.0
    %1490 = vmatprep.subr.mxu0 0.0
    %1491 = vmatpush1.xpose.msra.mxu0 0.0
    %1492 = vmatprep.subr.mxu0 0.0
    %1493 = vmatpush1.xpose.msra.mxu0 0.0
    %1494 = vmatprep.subr.mxu0 0.0
    %1495 = vmatpush1.xpose.msra.mxu0 0.0
    %1496 = vmatprep.subr.mxu0 0.0
    %1497 = vmatpush1.xpose.msra.mxu0 0.0
    %1498 = vmatprep.subr.mxu0 0.0
    %1499 = vmatpush1.xpose.msra.mxu0 0.0
    %1500 = vmatprep.subr.mxu0 0.0
    %1501 = vmatpush1.xpose.msra.mxu0 0.0
    %1502 = vmatprep.subr.mxu0 0.0
    %1503 = vmatpush1.xpose.msra.mxu0 0.0
    %1504 = vmatprep.subr.mxu0 0.0
    %1505 = vmatpush1.xpose.msra.mxu0 0.0
    %1506 = vmatprep.subr.mxu0 0.0
    %1507 = vmatpush1.xpose.msra.mxu0 0.0
    %1508 = vmatprep.subr.mxu0 0.0
    %1509 = vmatpush1.xpose.msra.mxu0 0.0
    %1510 = vmatprep.subr.mxu0 0.0
    %1511 = vmatpush1.xpose.msra.mxu0 0.0
    %1512 = vmatprep.subr.mxu0 0.0
    %1513 = vmatpush1.xpose.msra.mxu0 0.0
    %1514 = vmatprep.subr.mxu0 0.0
    %1515 = vmatpush1.xpose.msra.mxu0 0.0
    %1516 = vmatprep.subr.mxu0 0.0
    %1517 = vmatpush1.xpose.msra.mxu0 0.0
    %1518 = vmatprep.subr.mxu0 0.0
    %1519 = vmatpush1.xpose.msra.mxu0 0.0
    %1520 = vmatprep.subr.mxu0 0.0
    %1521 = vmatpush1.xpose.msra.mxu0 0.0
    %1522 = vmatprep.subr.mxu0 0.0
    %1523 = vmatpush1.xpose.msra.mxu0 0.0
    %1524 = vmatprep.subr.mxu0 0.0
    %1525 = vmatpush1.xpose.msra.mxu0 0.0
    %1526 = vmatprep.subr.mxu0 0.0
    %1527 = vmatpush1.xpose.msra.mxu0 0.0
    %1528 = vmatprep.subr.mxu0 0.0
    %1529 = vmatpush1.xpose.msra.mxu0 0.0
    %1530 = vmatprep.subr.mxu0 0.0
    %1531 = vmatpush1.xpose.msra.mxu0 0.0
    %1532 = vmatprep.subr.mxu0 0.0
    %1533 = vmatpush1.xpose.msra.mxu0 0.0
    %1534 = vmatprep.mubr.f32.mxu0 0.0
    %1535 = vmatmul.mubr.f32.gmra.mrb[0].mxu0 %v1462
    %v1536 = vpop.f32.mrb[0].mxu0
    %v1537 = vadd.f32 %v1460, %v1536
    %v1538 = vpop.f32.mrb[0].mxu0
    %1539 = vdwg.mxu0
    %v1540 = vmul.f32 %v1537, 1.442695
    %v1541 = vpow.pop %v1540
    %vm1542 = vcmask 123904
    %v1543 = vsel %vm1542, %v1541, 0.0
    %1544 = vadd.xlane.f32.xlu0 %v1543
    %v1545 = vpop.xlane.xlu0 %1544
    %v1546 = vrcp.pop %v1545
    %v1547 = vmul.f32 %v1541, %v1546
    %v1549 = vsel %vm895, %v1547, 0
    %1551 = vmatprep.subr.mxu0 0.0
    %1552 = vmatpush1.msra.mxu0 %v881
    %1553 = vmatprep.subr.mxu0 0.0
    %1554 = vmatpush1.msra.mxu0 %v884
    %1555 = vmatprep.subr.mxu0 0.0
    %1556 = vmatpush1.msra.mxu0 0.0
    %1557 = vmatprep.subr.mxu0 0.0
    %1558 = vmatpush1.msra.mxu0 0.0
    %1559 = vmatprep.subr.mxu0 0.0
    %1560 = vmatpush1.msra.mxu0 0.0
    %1561 = vmatprep.subr.mxu0 0.0
    %1562 = vmatpush1.msra.mxu0 0.0
    %1563 = vmatprep.subr.mxu0 0.0
    %1564 = vmatpush1.msra.mxu0 0.0
    %1565 = vmatprep.subr.mxu0 0.0
    %1566 = vmatpush1.msra.mxu0 0.0
    %1567 = vmatprep.subr.mxu0 0.0
    %1568 = vmatpush1.msra.mxu0 0.0
    %1569 = vmatprep.subr.mxu0 0.0
    %1570 = vmatpush1.msra.mxu0 0.0
    %1571 = vmatprep.subr.mxu0 0.0
    %1572 = vmatpush1.msra.mxu0 0.0
    %1573 = vmatprep.subr.mxu0 0.0
    %1574 = vmatpush1.msra.mxu0 0.0
    %1575 = vmatprep.subr.mxu0 0.0
    %1576 = vmatpush1.msra.mxu0 0.0
    %1577 = vmatprep.subr.mxu0 0.0
    %1578 = vmatpush1.msra.mxu0 0.0
    %1579 = vmatprep.subr.mxu0 0.0
    %1580 = vmatpush1.msra.mxu0 0.0
    %1581 = vmatprep.subr.mxu0 0.0
    %1582 = vmatpush1.msra.mxu0 0.0
    %1583 = vmatprep.subr.mxu0 0.0
    %1584 = vmatpush1.msra.mxu0 0.0
    %1585 = vmatprep.subr.mxu0 0.0
    %1586 = vmatpush1.msra.mxu0 0.0
    %1587 = vmatprep.subr.mxu0 0.0
    %1588 = vmatpush1.msra.mxu0 0.0
    %1589 = vmatprep.subr.mxu0 0.0
    %1590 = vmatpush1.msra.mxu0 0.0
    %1591 = vmatprep.subr.mxu0 0.0
    %1592 = vmatpush1.msra.mxu0 0.0
    %1593 = vmatprep.subr.mxu0 0.0
    %1594 = vmatpush1.msra.mxu0 0.0
    %1595 = vmatprep.subr.mxu0 0.0
    %1596 = vmatpush1.msra.mxu0 0.0
    %1597 = vmatprep.subr.mxu0 0.0
    %1598 = vmatpush1.msra.mxu0 0.0
    %1599 = vmatprep.subr.mxu0 0.0
    %1600 = vmatpush1.msra.mxu0 0.0
    %1601 = vmatprep.subr.mxu0 0.0
    %1602 = vmatpush1.msra.mxu0 0.0
    %1603 = vmatprep.subr.mxu0 0.0
    %1604 = vmatpush1.msra.mxu0 0.0
    %1605 = vmatprep.subr.mxu0 0.0
    %1606 = vmatpush1.msra.mxu0 0.0
    %1607 = vmatprep.subr.mxu0 0.0
    %1608 = vmatpush1.msra.mxu0 0.0
    %1609 = vmatprep.subr.mxu0 0.0
    %1610 = vmatpush1.msra.mxu0 0.0
    %1611 = vmatprep.subr.mxu0 0.0
    %1612 = vmatpush1.msra.mxu0 0.0
    %1613 = vmatprep.subr.mxu0 0.0
    %1614 = vmatpush1.msra.mxu0 0.0
    %1615 = vmatprep.mubr.f32.mxu0 0.0
    %1616 = vmatmul.mubr.f32.gmra.mrb[0].mxu0 %v1549
    %v1617 = vpop.f32.mrb[0].mxu0
    %v1618 = vadd.f32 0.0, %v1617
    %v1619 = vpop.f32.mrb[0].mxu0
    %1620 = vdwg.mxu0
    %1621 = vrot.lane.b32.xlu0 %v1146, 32
    %v1622 = vpop.permute.xlu0 %1621
    %v1624 = vsel %vm149, %v1618, %v1622
    %v1626 = vsel %vm1065, %v1624, 0
    %1628 = vmatprep.subr.mxu0 0.0
    %1629 = vmatpush1.msra.mxu0 %v1438
    %1630 = vmatprep.subr.mxu0 0.0
    %1631 = vmatpush1.msra.mxu0 %v1439
    %1632 = vmatprep.subr.mxu0 0.0
    %1633 = vmatpush1.msra.mxu0 %v1440
    %1634 = vmatprep.subr.mxu0 0.0
    %1635 = vmatpush1.msra.mxu0 %v1441
    %1636 = vmatprep.subr.mxu0 0.0
    %1637 = vmatpush1.msra.mxu0 %v1442
    %1638 = vmatprep.subr.mxu0 0.0
    %1639 = vmatpush1.msra.mxu0 %v1443
    %1640 = vmatprep.subr.mxu0 0.0
    %1641 = vmatpush1.msra.mxu0 %v1444
    %1642 = vmatprep.subr.mxu0 0.0
    %1643 = vmatpush1.msra.mxu0 %v1445
    %1644 = vmatprep.subr.mxu0 0.0
    %1645 = vmatpush1.msra.mxu0 0.0
    %1646 = vmatprep.subr.mxu0 0.0
    %1647 = vmatpush1.msra.mxu0 0.0
    %1648 = vmatprep.subr.mxu0 0.0
    %1649 = vmatpush1.msra.mxu0 0.0
    %1650 = vmatprep.subr.mxu0 0.0
    %1651 = vmatpush1.msra.mxu0 0.0
    %1652 = vmatprep.subr.mxu0 0.0
    %1653 = vmatpush1.msra.mxu0 0.0
    %1654 = vmatprep.subr.mxu0 0.0
    %1655 = vmatpush1.msra.mxu0 0.0
    %1656 = vmatprep.subr.mxu0 0.0
    %1657 = vmatpush1.msra.mxu0 0.0
    %1658 = vmatprep.subr.mxu0 0.0
    %1659 = vmatpush1.msra.mxu0 0.0
    %1660 = vmatprep.subr.mxu0 0.0
    %1661 = vmatpush1.msra.mxu0 0.0
    %1662 = vmatprep.subr.mxu0 0.0
    %1663 = vmatpush1.msra.mxu0 0.0
    %1664 = vmatprep.subr.mxu0 0.0
    %1665 = vmatpush1.msra.mxu0 0.0
    %1666 = vmatprep.subr.mxu0 0.0
    %1667 = vmatpush1.msra.mxu0 0.0
    %1668 = vmatprep.subr.mxu0 0.0
    %1669 = vmatpush1.msra.mxu0 0.0
    %1670 = vmatprep.subr.mxu0 0.0
    %1671 = vmatpush1.msra.mxu0 0.0
    %1672 = vmatprep.subr.mxu0 0.0
    %1673 = vmatpush1.msra.mxu0 0.0
    %1674 = vmatprep.subr.mxu0 0.0
    %1675 = vmatpush1.msra.mxu0 0.0
    %1676 = vmatprep.subr.mxu0 0.0
    %1677 = vmatpush1.msra.mxu0 0.0
    %1678 = vmatprep.subr.mxu0 0.0
    %1679 = vmatpush1.msra.mxu0 0.0
    %1680 = vmatprep.subr.mxu0 0.0
    %1681 = vmatpush1.msra.mxu0 0.0
    %1682 = vmatprep.subr.mxu0 0.0
    %1683 = vmatpush1.msra.mxu0 0.0
    %1684 = vmatprep.subr.mxu0 0.0
    %1685 = vmatpush1.msra.mxu0 0.0
    %1686 = vmatprep.subr.mxu0 0.0
    %1687 = vmatpush1.msra.mxu0 0.0
    %1688 = vmatprep.subr.mxu0 0.0
    %1689 = vmatpush1.msra.mxu0 0.0
    %1690 = vmatprep.subr.mxu0 0.0
    %1691 = vmatpush1.msra.mxu0 0.0
    %1692 = vmatprep.mubr.f32.mxu0 0.0
    %1693 = vmatmul.mubr.f32.gmra.mrb[0].mxu0 %v1626
    %v1694 = vpop.f32.mrb[0].mxu0
    %v1695 = vadd.f32 0.0, %v1694
    %v1696 = vpop.f32.mrb[0].mxu0
    %1697 = vdwg.mxu0
    %v1698 = vadd.f32 %v1430, %v1695
    %v1699 = vlaneseq
    %v1700 = vshrl.u32 %v1699, 7
    %v1701 = vsub.s32 0, %v1700
    %v1702 = vrot.slane %v1458, %v1701
    %v1703 = vadd.f32 %v1698, %v1702
    %v1704 = vtanh.pop %v1703
    %v1706 = vsel %vm149, %v1152, 0
    %1708 = vmatprep.subr.mxu0 0.0
    %1709 = vmatpush1.xpose.msra.mxu0 %v1465
    %1710 = vmatprep.subr.mxu0 0.0
    %1711 = vmatpush1.xpose.msra.mxu0 %v1468
    %1712 = vmatprep.subr.mxu0 0.0
    %1713 = vmatpush1.xpose.msra.mxu0 0.0
    %1714 = vmatprep.subr.mxu0 0.0
    %1715 = vmatpush1.xpose.msra.mxu0 0.0
    %1716 = vmatprep.subr.mxu0 0.0
    %1717 = vmatpush1.xpose.msra.mxu0 0.0
    %1718 = vmatprep.subr.mxu0 0.0
    %1719 = vmatpush1.xpose.msra.mxu0 0.0
    %1720 = vmatprep.subr.mxu0 0.0
    %1721 = vmatpush1.xpose.msra.mxu0 0.0
    %1722 = vmatprep.subr.mxu0 0.0
    %1723 = vmatpush1.xpose.msra.mxu0 0.0
    %1724 = vmatprep.subr.mxu0 0.0
    %1725 = vmatpush1.xpose.msra.mxu0 0.0
    %1726 = vmatprep.subr.mxu0 0.0
    %1727 = vmatpush1.xpose.msra.mxu0 0.0
    %1728 = vmatprep.subr.mxu0 0.0
    %1729 = vmatpush1.xpose.msra.mxu0 0.0
    %1730 = vmatprep.subr.mxu0 0.0
    %1731 = vmatpush1.xpose.msra.mxu0 0.0
    %1732 = vmatprep.subr.mxu0 0.0
    %1733 = vmatpush1.xpose.msra.mxu0 0.0
    %1734 = vmatprep.subr.mxu0 0.0
    %1735 = vmatpush1.xpose.msra.mxu0 0.0
    %1736 = vmatprep.subr.mxu0 0.0
    %1737 = vmatpush1.xpose.msra.mxu0 0.0
    %1738 = vmatprep.subr.mxu0 0.0
    %1739 = vmatpush1.xpose.msra.mxu0 0.0
    %1740 = vmatprep.subr.mxu0 0.0
    %1741 = vmatpush1.xpose.msra.mxu0 0.0
    %1742 = vmatprep.subr.mxu0 0.0
    %1743 = vmatpush1.xpose.msra.mxu0 0.0
    %1744 = vmatprep.subr.mxu0 0.0
    %1745 = vmatpush1.xpose.msra.mxu0 0.0
    %1746 = vmatprep.subr.mxu0 0.0
    %1747 = vmatpush1.xpose.msra.mxu0 0.0
    %1748 = vmatprep.subr.mxu0 0.0
    %1749 = vmatpush1.xpose.msra.mxu0 0.0
    %1750 = vmatprep.subr.mxu0 0.0
    %1751 = vmatpush1.xpose.msra.mxu0 0.0
    %1752 = vmatprep.subr.mxu0 0.0
    %1753 = vmatpush1.xpose.msra.mxu0 0.0
    %1754 = vmatprep.subr.mxu0 0.0
    %1755 = vmatpush1.xpose.msra.mxu0 0.0
    %1756 = vmatprep.subr.mxu0 0.0
    %1757 = vmatpush1.xpose.msra.mxu0 0.0
    %1758 = vmatprep.subr.mxu0 0.0
    %1759 = vmatpush1.xpose.msra.mxu0 0.0
    %1760 = vmatprep.subr.mxu0 0.0
    %1761 = vmatpush1.xpose.msra.mxu0 0.0
    %1762 = vmatprep.subr.mxu0 0.0
    %1763 = vmatpush1.xpose.msra.mxu0 0.0
    %1764 = vmatprep.subr.mxu0 0.0
    %1765 = vmatpush1.xpose.msra.mxu0 0.0
    %1766 = vmatprep.subr.mxu0 0.0
    %1767 = vmatpush1.xpose.msra.mxu0 0.0
    %1768 = vmatprep.subr.mxu0 0.0
    %1769 = vmatpush1.xpose.msra.mxu0 0.0
    %1770 = vmatprep.subr.mxu0 0.0
    %1771 = vmatpush1.xpose.msra.mxu0 0.0
    %1772 = vmatprep.mubr.f32.mxu0 0.0
    %1773 = vmatmul.mubr.f32.gmra.mrb[0].mxu0 %v1706
    %v1774 = vpop.f32.mrb[0].mxu0
    %v1775 = vadd.f32 %v1460, %v1774
    %v1776 = vpop.f32.mrb[0].mxu0
    %1777 = vdwg.mxu0
    %v1778 = vmul.f32 %v1775, 1.442695
    %v1779 = vpow.pop %v1778
    %v1780 = vsel %vm1542, %v1779, 0.0
    %1781 = vadd.xlane.f32.xlu0 %v1780
    %v1782 = vpop.xlane.xlu0 %1781
    %v1783 = vrcp.pop %v1782
    %v1784 = vmul.f32 %v1779, %v1783
    %v1786 = vsel %vm895, %v1784, 0
    %1788 = vmatprep.subr.mxu0 0.0
    %1789 = vmatpush1.msra.mxu0 %v881
    %1790 = vmatprep.subr.mxu0 0.0
    %1791 = vmatpush1.msra.mxu0 %v884
    %1792 = vmatprep.subr.mxu0 0.0
    %1793 = vmatpush1.msra.mxu0 0.0
    %1794 = vmatprep.subr.mxu0 0.0
    %1795 = vmatpush1.msra.mxu0 0.0
    %1796 = vmatprep.subr.mxu0 0.0
    %1797 = vmatpush1.msra.mxu0 0.0
    %1798 = vmatprep.subr.mxu0 0.0
    %1799 = vmatpush1.msra.mxu0 0.0
    %1800 = vmatprep.subr.mxu0 0.0
    %1801 = vmatpush1.msra.mxu0 0.0
    %1802 = vmatprep.subr.mxu0 0.0
    %1803 = vmatpush1.msra.mxu0 0.0
    %1804 = vmatprep.subr.mxu0 0.0
    %1805 = vmatpush1.msra.mxu0 0.0
    %1806 = vmatprep.subr.mxu0 0.0
    %1807 = vmatpush1.msra.mxu0 0.0
    %1808 = vmatprep.subr.mxu0 0.0
    %1809 = vmatpush1.msra.mxu0 0.0
    %1810 = vmatprep.subr.mxu0 0.0
    %1811 = vmatpush1.msra.mxu0 0.0
    %1812 = vmatprep.subr.mxu0 0.0
    %1813 = vmatpush1.msra.mxu0 0.0
    %1814 = vmatprep.subr.mxu0 0.0
    %1815 = vmatpush1.msra.mxu0 0.0
    %1816 = vmatprep.subr.mxu0 0.0
    %1817 = vmatpush1.msra.mxu0 0.0
    %1818 = vmatprep.subr.mxu0 0.0
    %1819 = vmatpush1.msra.mxu0 0.0
    %1820 = vmatprep.subr.mxu0 0.0
    %1821 = vmatpush1.msra.mxu0 0.0
    %1822 = vmatprep.subr.mxu0 0.0
    %1823 = vmatpush1.msra.mxu0 0.0
    %1824 = vmatprep.subr.mxu0 0.0
    %1825 = vmatpush1.msra.mxu0 0.0
    %1826 = vmatprep.subr.mxu0 0.0
    %1827 = vmatpush1.msra.mxu0 0.0
    %1828 = vmatprep.subr.mxu0 0.0
    %1829 = vmatpush1.msra.mxu0 0.0
    %1830 = vmatprep.subr.mxu0 0.0
    %1831 = vmatpush1.msra.mxu0 0.0
    %1832 = vmatprep.subr.mxu0 0.0
    %1833 = vmatpush1.msra.mxu0 0.0
    %1834 = vmatprep.subr.mxu0 0.0
    %1835 = vmatpush1.msra.mxu0 0.0
    %1836 = vmatprep.subr.mxu0 0.0
    %1837 = vmatpush1.msra.mxu0 0.0
    %1838 = vmatprep.subr.mxu0 0.0
    %1839 = vmatpush1.msra.mxu0 0.0
    %1840 = vmatprep.subr.mxu0 0.0
    %1841 = vmatpush1.msra.mxu0 0.0
    %1842 = vmatprep.subr.mxu0 0.0
    %1843 = vmatpush1.msra.mxu0 0.0
    %1844 = vmatprep.subr.mxu0 0.0
    %1845 = vmatpush1.msra.mxu0 0.0
    %1846 = vmatprep.subr.mxu0 0.0
    %1847 = vmatpush1.msra.mxu0 0.0
    %1848 = vmatprep.subr.mxu0 0.0
    %1849 = vmatpush1.msra.mxu0 0.0
    %1850 = vmatprep.subr.mxu0 0.0
    %1851 = vmatpush1.msra.mxu0 0.0
    %1852 = vmatprep.mubr.f32.mxu0 0.0
    %1853 = vmatmul.mubr.f32.gmra.mrb[0].mxu0 %v1786
    %v1854 = vpop.f32.mrb[0].mxu0
    %v1855 = vadd.f32 0.0, %v1854
    %v1856 = vpop.f32.mrb[0].mxu0
    %1857 = vdwg.mxu0
    %1859 = vrot.lane.b32.xlu0 %v1855, 32
    %v1860 = vpop.permute.xlu0 %1859
    %1862 = vrot.lane.b32.xlu0 %v1152, 64
    %v1863 = vpop.permute.xlu0 %1862
    %v1865 = vsel %vm149, %v1704, %v1860
    %v1866 = vsel %vm1065, %v1865, %v1863
    %v1867 = vlaneseq
    %v1868 = vshrl.u32 %v1867, 7
    %v1869 = vsub.s32 0, %v1868
    %v1870 = vrot.slane %v1459, %v1869
    %vm1871 = vcmask 785408
    %v1873 = vsel %vm1871, %v1866, 0
    %1875 = vmatprep.subr.mxu0 0.0
    %1876 = vmatpush1.msra.mxu0 %v1446
    %1877 = vmatprep.subr.mxu0 0.0
    %1878 = vmatpush1.msra.mxu0 %v1447
    %1879 = vmatprep.subr.mxu0 0.0
    %1880 = vmatpush1.msra.mxu0 %v1448
    %1881 = vmatprep.subr.mxu0 0.0
    %1882 = vmatpush1.msra.mxu0 %v1449
    %1883 = vmatprep.subr.mxu0 0.0
    %1884 = vmatpush1.msra.mxu0 %v1450
    %1885 = vmatprep.subr.mxu0 0.0
    %1886 = vmatpush1.msra.mxu0 %v1451
    %1887 = vmatprep.subr.mxu0 0.0
    %1888 = vmatpush1.msra.mxu0 %v1452
    %1889 = vmatprep.subr.mxu0 0.0
    %1890 = vmatpush1.msra.mxu0 %v1453
    %1891 = vmatprep.subr.mxu0 0.0
    %1892 = vmatpush1.msra.mxu0 %v1454
    %1893 = vmatprep.subr.mxu0 0.0
    %1894 = vmatpush1.msra.mxu0 %v1455
    %1895 = vmatprep.subr.mxu0 0.0
    %1896 = vmatpush1.msra.mxu0 %v1456
    %1897 = vmatprep.subr.mxu0 0.0
    %1898 = vmatpush1.msra.mxu0 %v1457
    %1899 = vmatprep.subr.mxu0 0.0
    %1900 = vmatpush1.msra.mxu0 0.0
    %1901 = vmatprep.subr.mxu0 0.0
    %1902 = vmatpush1.msra.mxu0 0.0
    %1903 = vmatprep.subr.mxu0 0.0
    %1904 = vmatpush1.msra.mxu0 0.0
    %1905 = vmatprep.subr.mxu0 0.0
    %1906 = vmatpush1.msra.mxu0 0.0
    %1907 = vmatprep.subr.mxu0 0.0
    %1908 = vmatpush1.msra.mxu0 0.0
    %1909 = vmatprep.subr.mxu0 0.0
    %1910 = vmatpush1.msra.mxu0 0.0
    %1911 = vmatprep.subr.mxu0 0.0
    %1912 = vmatpush1.msra.mxu0 0.0
    %1913 = vmatprep.subr.mxu0 0.0
    %1914 = vmatpush1.msra.mxu0 0.0
    %1915 = vmatprep.subr.mxu0 0.0
    %1916 = vmatpush1.msra.mxu0 0.0
    %1917 = vmatprep.subr.mxu0 0.0
    %1918 = vmatpush1.msra.mxu0 0.0
    %1919 = vmatprep.subr.mxu0 0.0
    %1920 = vmatpush1.msra.mxu0 0.0
    %1921 = vmatprep.subr.mxu0 0.0
    %1922 = vmatpush1.msra.mxu0 0.0
    %1923 = vmatprep.subr.mxu0 0.0
    %1924 = vmatpush1.msra.mxu0 0.0
    %1925 = vmatprep.subr.mxu0 0.0
    %1926 = vmatpush1.msra.mxu0 0.0
    %1927 = vmatprep.subr.mxu0 0.0
    %1928 = vmatpush1.msra.mxu0 0.0
    %1929 = vmatprep.subr.mxu0 0.0
    %1930 = vmatpush1.msra.mxu0 0.0
    %1931 = vmatprep.subr.mxu0 0.0
    %1932 = vmatpush1.msra.mxu0 0.0
    %1933 = vmatprep.subr.mxu0 0.0
    %1934 = vmatpush1.msra.mxu0 0.0
    %1935 = vmatprep.subr.mxu0 0.0
    %1936 = vmatpush1.msra.mxu0 0.0
    %1937 = vmatprep.subr.mxu0 0.0
    %1938 = vmatpush1.msra.mxu0 0.0
    %1939 = vmatprep.mubr.f32.mxu0 0.0
    %1940 = vmatmul.mubr.f32.gmra.mrb[0].mxu0 %v1873
    %v1941 = vpop.f32.mrb[0].mxu0
    %v1942 = vadd.f32 %v1870, %v1941
    %v1943 = vpop.f32.mrb[0].mxu0
    %1944 = vdwg.mxu0
    %v1945 = vtanh.pop %v1942
    %v1947 = vsel %vm149, %v1704, 0
    %1949 = vmatprep.subr.mxu0 0.0
    %1950 = vmatpush1.xpose.msra.mxu0 %v1465
    %1951 = vmatprep.subr.mxu0 0.0
    %1952 = vmatpush1.xpose.msra.mxu0 %v1468
    %1953 = vmatprep.subr.mxu0 0.0
    %1954 = vmatpush1.xpose.msra.mxu0 0.0
    %1955 = vmatprep.subr.mxu0 0.0
    %1956 = vmatpush1.xpose.msra.mxu0 0.0
    %1957 = vmatprep.subr.mxu0 0.0
    %1958 = vmatpush1.xpose.msra.mxu0 0.0
    %1959 = vmatprep.subr.mxu0 0.0
    %1960 = vmatpush1.xpose.msra.mxu0 0.0
    %1961 = vmatprep.subr.mxu0 0.0
    %1962 = vmatpush1.xpose.msra.mxu0 0.0
    %1963 = vmatprep.subr.mxu0 0.0
    %1964 = vmatpush1.xpose.msra.mxu0 0.0
    %1965 = vmatprep.subr.mxu0 0.0
    %1966 = vmatpush1.xpose.msra.mxu0 0.0
    %1967 = vmatprep.subr.mxu0 0.0
    %1968 = vmatpush1.xpose.msra.mxu0 0.0
    %1969 = vmatprep.subr.mxu0 0.0
    %1970 = vmatpush1.xpose.msra.mxu0 0.0
    %1971 = vmatprep.subr.mxu0 0.0
    %1972 = vmatpush1.xpose.msra.mxu0 0.0
    %1973 = vmatprep.subr.mxu0 0.0
    %1974 = vmatpush1.xpose.msra.mxu0 0.0
    %1975 = vmatprep.subr.mxu0 0.0
    %1976 = vmatpush1.xpose.msra.mxu0 0.0
    %1977 = vmatprep.subr.mxu0 0.0
    %1978 = vmatpush1.xpose.msra.mxu0 0.0
    %1979 = vmatprep.subr.mxu0 0.0
    %1980 = vmatpush1.xpose.msra.mxu0 0.0
    %1981 = vmatprep.subr.mxu0 0.0
    %1982 = vmatpush1.xpose.msra.mxu0 0.0
    %1983 = vmatprep.subr.mxu0 0.0
    %1984 = vmatpush1.xpose.msra.mxu0 0.0
    %1985 = vmatprep.subr.mxu0 0.0
    %1986 = vmatpush1.xpose.msra.mxu0 0.0
    %1987 = vmatprep.subr.mxu0 0.0
    %1988 = vmatpush1.xpose.msra.mxu0 0.0
    %1989 = vmatprep.subr.mxu0 0.0
    %1990 = vmatpush1.xpose.msra.mxu0 0.0
    %1991 = vmatprep.subr.mxu0 0.0
    %1992 = vmatpush1.xpose.msra.mxu0 0.0
    %1993 = vmatprep.subr.mxu0 0.0
    %1994 = vmatpush1.xpose.msra.mxu0 0.0
    %1995 = vmatprep.subr.mxu0 0.0
    %1996 = vmatpush1.xpose.msra.mxu0 0.0
    %1997 = vmatprep.subr.mxu0 0.0
    %1998 = vmatpush1.xpose.msra.mxu0 0.0
    %1999 = vmatprep.subr.mxu0 0.0
    %2000 = vmatpush1.xpose.msra.mxu0 0.0
    %2001 = vmatprep.subr.mxu0 0.0
    %2002 = vmatpush1.xpose.msra.mxu0 0.0
    %2003 = vmatprep.subr.mxu0 0.0
    %2004 = vmatpush1.xpose.msra.mxu0 0.0
    %2005 = vmatprep.subr.mxu0 0.0
    %2006 = vmatpush1.xpose.msra.mxu0 0.0
    %2007 = vmatprep.subr.mxu0 0.0
    %2008 = vmatpush1.xpose.msra.mxu0 0.0
    %2009 = vmatprep.subr.mxu0 0.0
    %2010 = vmatpush1.xpose.msra.mxu0 0.0
    %2011 = vmatprep.subr.mxu0 0.0
    %2012 = vmatpush1.xpose.msra.mxu0 0.0
    %2013 = vmatprep.mubr.f32.mxu0 0.0
    %2014 = vmatmul.mubr.f32.gmra.mrb[0].mxu0 %v1947
    %v2015 = vpop.f32.mrb[0].mxu0
    %v2016 = vadd.f32 %v1460, %v2015
    %v2017 = vpop.f32.mrb[0].mxu0
    %2018 = vdwg.mxu0
    %v2019 = vmul.f32 %v2016, 1.442695
    %v2020 = vpow.pop %v2019
    %v2021 = vsel %vm1542, %v2020, 0.0
    %2022 = vadd.xlane.f32.xlu0 %v2021
    %v2023 = vpop.xlane.xlu0 %2022
    %v2024 = vrcp.pop %v2023
    %v2025 = vmul.f32 %v2020, %v2024
    %v2027 = vsel %vm895, %v2025, 0
    %2029 = vmatprep.subr.mxu0 0.0
    %2030 = vmatpush1.msra.mxu0 %v881
    %2031 = vmatprep.subr.mxu0 0.0
    %2032 = vmatpush1.msra.mxu0 %v884
    %2033 = vmatprep.subr.mxu0 0.0
    %2034 = vmatpush1.msra.mxu0 0.0
    %2035 = vmatprep.subr.mxu0 0.0
    %2036 = vmatpush1.msra.mxu0 0.0
    %2037 = vmatprep.subr.mxu0 0.0
    %2038 = vmatpush1.msra.mxu0 0.0
    %2039 = vmatprep.subr.mxu0 0.0
    %2040 = vmatpush1.msra.mxu0 0.0
    %2041 = vmatprep.subr.mxu0 0.0
    %2042 = vmatpush1.msra.mxu0 0.0
    %2043 = vmatprep.subr.mxu0 0.0
    %2044 = vmatpush1.msra.mxu0 0.0
    %2045 = vmatprep.subr.mxu0 0.0
    %2046 = vmatpush1.msra.mxu0 0.0
    %2047 = vmatprep.subr.mxu0 0.0
    %2048 = vmatpush1.msra.mxu0 0.0
    %2049 = vmatprep.subr.mxu0 0.0
    %2050 = vmatpush1.msra.mxu0 0.0
    %2051 = vmatprep.subr.mxu0 0.0
    %2052 = vmatpush1.msra.mxu0 0.0
    %2053 = vmatprep.subr.mxu0 0.0
    %2054 = vmatpush1.msra.mxu0 0.0
    %2055 = vmatprep.subr.mxu0 0.0
    %2056 = vmatpush1.msra.mxu0 0.0
    %2057 = vmatprep.subr.mxu0 0.0
    %2058 = vmatpush1.msra.mxu0 0.0
    %2059 = vmatprep.subr.mxu0 0.0
    %2060 = vmatpush1.msra.mxu0 0.0
    %2061 = vmatprep.subr.mxu0 0.0
    %2062 = vmatpush1.msra.mxu0 0.0
    %2063 = vmatprep.subr.mxu0 0.0
    %2064 = vmatpush1.msra.mxu0 0.0
    %2065 = vmatprep.subr.mxu0 0.0
    %2066 = vmatpush1.msra.mxu0 0.0
    %2067 = vmatprep.subr.mxu0 0.0
    %2068 = vmatpush1.msra.mxu0 0.0
    %2069 = vmatprep.subr.mxu0 0.0
    %2070 = vmatpush1.msra.mxu0 0.0
    %2071 = vmatprep.subr.mxu0 0.0
    %2072 = vmatpush1.msra.mxu0 0.0
    %2073 = vmatprep.subr.mxu0 0.0
    %2074 = vmatpush1.msra.mxu0 0.0
    %2075 = vmatprep.subr.mxu0 0.0
    %2076 = vmatpush1.msra.mxu0 0.0
    %2077 = vmatprep.subr.mxu0 0.0
    %2078 = vmatpush1.msra.mxu0 0.0
    %2079 = vmatprep.subr.mxu0 0.0
    %2080 = vmatpush1.msra.mxu0 0.0
    %2081 = vmatprep.subr.mxu0 0.0
    %2082 = vmatpush1.msra.mxu0 0.0
    %2083 = vmatprep.subr.mxu0 0.0
    %2084 = vmatpush1.msra.mxu0 0.0
    %2085 = vmatprep.subr.mxu0 0.0
    %2086 = vmatpush1.msra.mxu0 0.0
    %2087 = vmatprep.subr.mxu0 0.0
    %2088 = vmatpush1.msra.mxu0 0.0
    %2089 = vmatprep.subr.mxu0 0.0
    %2090 = vmatpush1.msra.mxu0 0.0
    %2091 = vmatprep.subr.mxu0 0.0
    %2092 = vmatpush1.msra.mxu0 0.0
    %2093 = vmatprep.mubr.f32.mxu0 0.0
    %2094 = vmatmul.mubr.f32.gmra.mrb[0].mxu0 %v2027
    %v2095 = vpop.f32.mrb[0].mxu0
    %v2096 = vadd.f32 0.0, %v2095
    %v2097 = vpop.f32.mrb[0].mxu0
    %2098 = vdwg.mxu0
    %2099 = vrot.lane.b32.xlu0 %v1704, 32
    %v2100 = vpop.permute.xlu0 %2099
    %v2102 = vsel %vm149, %v2096, %v2100
    %v2104 = vsel %vm1065, %v2102, 0
    %2106 = vmatprep.subr.mxu0 0.0
    %2107 = vmatpush1.msra.mxu0 %v1438
    %2108 = vmatprep.subr.mxu0 0.0
    %2109 = vmatpush1.msra.mxu0 %v1439
    %2110 = vmatprep.subr.mxu0 0.0
    %2111 = vmatpush1.msra.mxu0 %v1440
    %2112 = vmatprep.subr.mxu0 0.0
    %2113 = vmatpush1.msra.mxu0 %v1441
    %2114 = vmatprep.subr.mxu0 0.0
    %2115 = vmatpush1.msra.mxu0 %v1442
    %2116 = vmatprep.subr.mxu0 0.0
    %2117 = vmatpush1.msra.mxu0 %v1443
    %2118 = vmatprep.subr.mxu0 0.0
    %2119 = vmatpush1.msra.mxu0 %v1444
    %2120 = vmatprep.subr.mxu0 0.0
    %2121 = vmatpush1.msra.mxu0 %v1445
    %2122 = vmatprep.subr.mxu0 0.0
    %2123 = vmatpush1.msra.mxu0 0.0
    %2124 = vmatprep.subr.mxu0 0.0
    %2125 = vmatpush1.msra.mxu0 0.0
    %2126 = vmatprep.subr.mxu0 0.0
    %2127 = vmatpush1.msra.mxu0 0.0
    %2128 = vmatprep.subr.mxu0 0.0
    %2129 = vmatpush1.msra.mxu0 0.0
    %2130 = vmatprep.subr.mxu0 0.0
    %2131 = vmatpush1.msra.mxu0 0.0
    %2132 = vmatprep.subr.mxu0 0.0
    %2133 = vmatpush1.msra.mxu0 0.0
    %2134 = vmatprep.subr.mxu0 0.0
    %2135 = vmatpush1.msra.mxu0 0.0
    %2136 = vmatprep.subr.mxu0 0.0
    %2137 = vmatpush1.msra.mxu0 0.0
    %2138 = vmatprep.subr.mxu0 0.0
    %2139 = vmatpush1.msra.mxu0 0.0
    %2140 = vmatprep.subr.mxu0 0.0
    %2141 = vmatpush1.msra.mxu0 0.0
    %2142 = vmatprep.subr.mxu0 0.0
    %2143 = vmatpush1.msra.mxu0 0.0
    %2144 = vmatprep.subr.mxu0 0.0
    %2145 = vmatpush1.msra.mxu0 0.0
    %2146 = vmatprep.subr.mxu0 0.0
    %2147 = vmatpush1.msra.mxu0 0.0
    %2148 = vmatprep.subr.mxu0 0.0
    %2149 = vmatpush1.msra.mxu0 0.0
    %2150 = vmatprep.subr.mxu0 0.0
    %2151 = vmatpush1.msra.mxu0 0.0
    %2152 = vmatprep.subr.mxu0 0.0
    %2153 = vmatpush1.msra.mxu0 0.0
    %2154 = vmatprep.subr.mxu0 0.0
    %2155 = vmatpush1.msra.mxu0 0.0
    %2156 = vmatprep.subr.mxu0 0.0
    %2157 = vmatpush1.msra.mxu0 0.0
    %2158 = vmatprep.subr.mxu0 0.0
    %2159 = vmatpush1.msra.mxu0 0.0
    %2160 = vmatprep.subr.mxu0 0.0
    %2161 = vmatpush1.msra.mxu0 0.0
    %2162 = vmatprep.subr.mxu0 0.0
    %2163 = vmatpush1.msra.mxu0 0.0
    %2164 = vmatprep.subr.mxu0 0.0
    %2165 = vmatpush1.msra.mxu0 0.0
    %2166 = vmatprep.subr.mxu0 0.0
    %2167 = vmatpush1.msra.mxu0 0.0
    %2168 = vmatprep.subr.mxu0 0.0
    %2169 = vmatpush1.msra.mxu0 0.0
    %2170 = vmatprep.mubr.f32.mxu0 0.0
    %2171 = vmatmul.mubr.f32.gmra.mrb[0].mxu0 %v2104
    %v2172 = vpop.f32.mrb[0].mxu0
    %v2173 = vadd.f32 0.0, %v2172
    %v2174 = vpop.f32.mrb[0].mxu0
    %2175 = vdwg.mxu0
    %v2177 = vrot.slane %v2173, 6
    %v2179 = vadd.f32 %v1430, %v2177
    %v2180 = vadd.f32 %v2179, %v1702
    %v2181 = vtanh.pop %v2180
    %v2183 = vsel %vm149, %v1945, 0
    %2185 = vmatprep.subr.mxu0 0.0
    %2186 = vmatpush1.xpose.msra.mxu0 %v1465
    %2187 = vmatprep.subr.mxu0 0.0
    %2188 = vmatpush1.xpose.msra.mxu0 %v1468
    %2189 = vmatprep.subr.mxu0 0.0
    %2190 = vmatpush1.xpose.msra.mxu0 0.0
    %2191 = vmatprep.subr.mxu0 0.0
    %2192 = vmatpush1.xpose.msra.mxu0 0.0
    %2193 = vmatprep.subr.mxu0 0.0
    %2194 = vmatpush1.xpose.msra.mxu0 0.0
    %2195 = vmatprep.subr.mxu0 0.0
    %2196 = vmatpush1.xpose.msra.mxu0 0.0
    %2197 = vmatprep.subr.mxu0 0.0
    %2198 = vmatpush1.xpose.msra.mxu0 0.0
    %2199 = vmatprep.subr.mxu0 0.0
    %2200 = vmatpush1.xpose.msra.mxu0 0.0
    %2201 = vmatprep.subr.mxu0 0.0
    %2202 = vmatpush1.xpose.msra.mxu0 0.0
    %2203 = vmatprep.subr.mxu0 0.0
    %2204 = vmatpush1.xpose.msra.mxu0 0.0
    %2205 = vmatprep.subr.mxu0 0.0
    %2206 = vmatpush1.xpose.msra.mxu0 0.0
    %2207 = vmatprep.subr.mxu0 0.0
    %2208 = vmatpush1.xpose.msra.mxu0 0.0
    %2209 = vmatprep.subr.mxu0 0.0
    %2210 = vmatpush1.xpose.msra.mxu0 0.0
    %2211 = vmatprep.subr.mxu0 0.0
    %2212 = vmatpush1.xpose.msra.mxu0 0.0
    %2213 = vmatprep.subr.mxu0 0.0
    %2214 = vmatpush1.xpose.msra.mxu0 0.0
    %2215 = vmatprep.subr.mxu0 0.0
    %2216 = vmatpush1.xpose.msra.mxu0 0.0
    %2217 = vmatprep.subr.mxu0 0.0
    %2218 = vmatpush1.xpose.msra.mxu0 0.0
    %2219 = vmatprep.subr.mxu0 0.0
    %2220 = vmatpush1.xpose.msra.mxu0 0.0
    %2221 = vmatprep.subr.mxu0 0.0
    %2222 = vmatpush1.xpose.msra.mxu0 0.0
    %2223 = vmatprep.subr.mxu0 0.0
    %2224 = vmatpush1.xpose.msra.mxu0 0.0
    %2225 = vmatprep.subr.mxu0 0.0
    %2226 = vmatpush1.xpose.msra.mxu0 0.0
    %2227 = vmatprep.subr.mxu0 0.0
    %2228 = vmatpush1.xpose.msra.mxu0 0.0
    %2229 = vmatprep.subr.mxu0 0.0
    %2230 = vmatpush1.xpose.msra.mxu0 0.0
    %2231 = vmatprep.subr.mxu0 0.0
    %2232 = vmatpush1.xpose.msra.mxu0 0.0
    %2233 = vmatprep.subr.mxu0 0.0
    %2234 = vmatpush1.xpose.msra.mxu0 0.0
    %2235 = vmatprep.subr.mxu0 0.0
    %2236 = vmatpush1.xpose.msra.mxu0 0.0
    %2237 = vmatprep.subr.mxu0 0.0
    %2238 = vmatpush1.xpose.msra.mxu0 0.0
    %2239 = vmatprep.subr.mxu0 0.0
    %2240 = vmatpush1.xpose.msra.mxu0 0.0
    %2241 = vmatprep.subr.mxu0 0.0
    %2242 = vmatpush1.xpose.msra.mxu0 0.0
    %2243 = vmatprep.subr.mxu0 0.0
    %2244 = vmatpush1.xpose.msra.mxu0 0.0
    %2245 = vmatprep.subr.mxu0 0.0
    %2246 = vmatpush1.xpose.msra.mxu0 0.0
    %2247 = vmatprep.subr.mxu0 0.0
    %2248 = vmatpush1.xpose.msra.mxu0 0.0
    %2249 = vmatprep.mubr.f32.mxu0 0.0
    %2250 = vmatmul.mubr.f32.gmra.mrb[0].mxu0 %v2183
    %v2251 = vpop.f32.mrb[0].mxu0
    %v2252 = vadd.f32 %v1460, %v2251
    %v2253 = vpop.f32.mrb[0].mxu0
    %2254 = vdwg.mxu0
    %v2255 = vmul.f32 %v2252, 1.442695
    %v2256 = vpow.pop %v2255
    %v2257 = vsel %vm1542, %v2256, 0.0
    %2258 = vadd.xlane.f32.xlu0 %v2257
    %v2259 = vpop.xlane.xlu0 %2258
    %v2260 = vrcp.pop %v2259
    %v2261 = vmul.f32 %v2256, %v2260
    %v2263 = vsel %vm895, %v2261, 0
    %2265 = vmatprep.subr.mxu0 0.0
    %2266 = vmatpush1.msra.mxu0 %v881
    %2267 = vmatprep.subr.mxu0 0.0
    %2268 = vmatpush1.msra.mxu0 %v884
    %2269 = vmatprep.subr.mxu0 0.0
    %2270 = vmatpush1.msra.mxu0 0.0
    %2271 = vmatprep.subr.mxu0 0.0
    %2272 = vmatpush1.msra.mxu0 0.0
    %2273 = vmatprep.subr.mxu0 0.0
    %2274 = vmatpush1.msra.mxu0 0.0
    %2275 = vmatprep.subr.mxu0 0.0
    %2276 = vmatpush1.msra.mxu0 0.0
    %2277 = vmatprep.subr.mxu0 0.0
    %2278 = vmatpush1.msra.mxu0 0.0
    %2279 = vmatprep.subr.mxu0 0.0
    %2280 = vmatpush1.msra.mxu0 0.0
    %2281 = vmatprep.subr.mxu0 0.0
    %2282 = vmatpush1.msra.mxu0 0.0
    %2283 = vmatprep.subr.mxu0 0.0
    %2284 = vmatpush1.msra.mxu0 0.0
    %2285 = vmatprep.subr.mxu0 0.0
    %2286 = vmatpush1.msra.mxu0 0.0
    %2287 = vmatprep.subr.mxu0 0.0
    %2288 = vmatpush1.msra.mxu0 0.0
    %2289 = vmatprep.subr.mxu0 0.0
    %2290 = vmatpush1.msra.mxu0 0.0
    %2291 = vmatprep.subr.mxu0 0.0
    %2292 = vmatpush1.msra.mxu0 0.0
    %2293 = vmatprep.subr.mxu0 0.0
    %2294 = vmatpush1.msra.mxu0 0.0
    %2295 = vmatprep.subr.mxu0 0.0
    %2296 = vmatpush1.msra.mxu0 0.0
    %2297 = vmatprep.subr.mxu0 0.0
    %2298 = vmatpush1.msra.mxu0 0.0
    %2299 = vmatprep.subr.mxu0 0.0
    %2300 = vmatpush1.msra.mxu0 0.0
    %2301 = vmatprep.subr.mxu0 0.0
    %2302 = vmatpush1.msra.mxu0 0.0
    %2303 = vmatprep.subr.mxu0 0.0
    %2304 = vmatpush1.msra.mxu0 0.0
    %2305 = vmatprep.subr.mxu0 0.0
    %2306 = vmatpush1.msra.mxu0 0.0
    %2307 = vmatprep.subr.mxu0 0.0
    %2308 = vmatpush1.msra.mxu0 0.0
    %2309 = vmatprep.subr.mxu0 0.0
    %2310 = vmatpush1.msra.mxu0 0.0
    %2311 = vmatprep.subr.mxu0 0.0
    %2312 = vmatpush1.msra.mxu0 0.0
    %2313 = vmatprep.subr.mxu0 0.0
    %2314 = vmatpush1.msra.mxu0 0.0
    %2315 = vmatprep.subr.mxu0 0.0
    %2316 = vmatpush1.msra.mxu0 0.0
    %2317 = vmatprep.subr.mxu0 0.0
    %2318 = vmatpush1.msra.mxu0 0.0
    %2319 = vmatprep.subr.mxu0 0.0
    %2320 = vmatpush1.msra.mxu0 0.0
    %2321 = vmatprep.subr.mxu0 0.0
    %2322 = vmatpush1.msra.mxu0 0.0
    %2323 = vmatprep.subr.mxu0 0.0
    %2324 = vmatpush1.msra.mxu0 0.0
    %2325 = vmatprep.subr.mxu0 0.0
    %2326 = vmatpush1.msra.mxu0 0.0
    %2327 = vmatprep.subr.mxu0 0.0
    %2328 = vmatpush1.msra.mxu0 0.0
    %2329 = vmatprep.mubr.f32.mxu0 0.0
    %2330 = vmatmul.mubr.f32.gmra.mrb[0].mxu0 %v2263
    %v2331 = vpop.f32.mrb[0].mxu0
    %v2332 = vadd.f32 0.0, %v2331
    %v2333 = vpop.f32.mrb[0].mxu0
    %2334 = vdwg.mxu0
    %v2336 = vrot.slane %v2332, 6
    %2337 = vrot.lane.b32.xlu0 %v2336, 32
    %v2338 = vpop.permute.xlu0 %2337
    %v2340 = vrot.slane %v1945, 6
    %2341 = vrot.lane.b32.xlu0 %v2340, 64
    %v2342 = vpop.permute.xlu0 %2341
    %v2344 = vsel %vm149, %v2181, %v2338
    %v2345 = vsel %vm1065, %v2344, %v2342
    %v2347 = vrot.slane %v2345, 2
    %v2348 = vsel %vm1871, %v2347, 0
    %2350 = vmatprep.subr.mxu0 0.0
    %2351 = vmatpush1.msra.mxu0 %v1446
    %2352 = vmatprep.subr.mxu0 0.0
    %2353 = vmatpush1.msra.mxu0 %v1447
    %2354 = vmatprep.subr.mxu0 0.0
    %2355 = vmatpush1.msra.mxu0 %v1448
    %2356 = vmatprep.subr.mxu0 0.0
    %2357 = vmatpush1.msra.mxu0 %v1449
    %2358 = vmatprep.subr.mxu0 0.0
    %2359 = vmatpush1.msra.mxu0 %v1450
    %2360 = vmatprep.subr.mxu0 0.0
    %2361 = vmatpush1.msra.mxu0 %v1451
    %2362 = vmatprep.subr.mxu0 0.0
    %2363 = vmatpush1.msra.mxu0 %v1452
    %2364 = vmatprep.subr.mxu0 0.0
    %2365 = vmatpush1.msra.mxu0 %v1453
    %2366 = vmatprep.subr.mxu0 0.0
    %2367 = vmatpush1.msra.mxu0 %v1454
    %2368 = vmatprep.subr.mxu0 0.0
    %2369 = vmatpush1.msra.mxu0 %v1455
    %2370 = vmatprep.subr.mxu0 0.0
    %2371 = vmatpush1.msra.mxu0 %v1456
    %2372 = vmatprep.subr.mxu0 0.0
    %2373 = vmatpush1.msra.mxu0 %v1457
    %2374 = vmatprep.subr.mxu0 0.0
    %2375 = vmatpush1.msra.mxu0 0.0
    %2376 = vmatprep.subr.mxu0 0.0
    %2377 = vmatpush1.msra.mxu0 0.0
    %2378 = vmatprep.subr.mxu0 0.0
    %2379 = vmatpush1.msra.mxu0 0.0
    %2380 = vmatprep.subr.mxu0 0.0
    %2381 = vmatpush1.msra.mxu0 0.0
    %2382 = vmatprep.subr.mxu0 0.0
    %2383 = vmatpush1.msra.mxu0 0.0
    %2384 = vmatprep.subr.mxu0 0.0
    %2385 = vmatpush1.msra.mxu0 0.0
    %2386 = vmatprep.subr.mxu0 0.0
    %2387 = vmatpush1.msra.mxu0 0.0
    %2388 = vmatprep.subr.mxu0 0.0
    %2389 = vmatpush1.msra.mxu0 0.0
    %2390 = vmatprep.subr.mxu0 0.0
    %2391 = vmatpush1.msra.mxu0 0.0
    %2392 = vmatprep.subr.mxu0 0.0
    %2393 = vmatpush1.msra.mxu0 0.0
    %2394 = vmatprep.subr.mxu0 0.0
    %2395 = vmatpush1.msra.mxu0 0.0
    %2396 = vmatprep.subr.mxu0 0.0
    %2397 = vmatpush1.msra.mxu0 0.0
    %2398 = vmatprep.subr.mxu0 0.0
    %2399 = vmatpush1.msra.mxu0 0.0
    %2400 = vmatprep.subr.mxu0 0.0
    %2401 = vmatpush1.msra.mxu0 0.0
    %2402 = vmatprep.subr.mxu0 0.0
    %2403 = vmatpush1.msra.mxu0 0.0
    %2404 = vmatprep.subr.mxu0 0.0
    %2405 = vmatpush1.msra.mxu0 0.0
    %2406 = vmatprep.subr.mxu0 0.0
    %2407 = vmatpush1.msra.mxu0 0.0
    %2408 = vmatprep.subr.mxu0 0.0
    %2409 = vmatpush1.msra.mxu0 0.0
    %2410 = vmatprep.subr.mxu0 0.0
    %2411 = vmatpush1.msra.mxu0 0.0
    %2412 = vmatprep.subr.mxu0 0.0
    %2413 = vmatpush1.msra.mxu0 0.0
    %2414 = vmatprep.mubr.f32.mxu0 0.0
    %2415 = vmatmul.mubr.f32.gmra.mrb[0].mxu0 %v2348
    %v2416 = vpop.f32.mrb[0].mxu0
    %v2417 = vadd.f32 %v1870, %v2416
    %v2418 = vpop.f32.mrb[0].mxu0
    %2419 = vdwg.mxu0
    %v2420 = vtanh.pop %v2417
    %v2422 = vrot.slane %v2181, 2
    %v2423 = vsel %vm149, %v2422, 0
    %2425 = vmatprep.subr.mxu0 0.0
    %2426 = vmatpush1.xpose.msra.mxu0 %v1465
    %2427 = vmatprep.subr.mxu0 0.0
    %2428 = vmatpush1.xpose.msra.mxu0 %v1468
    %2429 = vmatprep.subr.mxu0 0.0
    %2430 = vmatpush1.xpose.msra.mxu0 0.0
    %2431 = vmatprep.subr.mxu0 0.0
    %2432 = vmatpush1.xpose.msra.mxu0 0.0
    %2433 = vmatprep.subr.mxu0 0.0
    %2434 = vmatpush1.xpose.msra.mxu0 0.0
    %2435 = vmatprep.subr.mxu0 0.0
    %2436 = vmatpush1.xpose.msra.mxu0 0.0
    %2437 = vmatprep.subr.mxu0 0.0
    %2438 = vmatpush1.xpose.msra.mxu0 0.0
    %2439 = vmatprep.subr.mxu0 0.0
    %2440 = vmatpush1.xpose.msra.mxu0 0.0
    %2441 = vmatprep.subr.mxu0 0.0
    %2442 = vmatpush1.xpose.msra.mxu0 0.0
    %2443 = vmatprep.subr.mxu0 0.0
    %2444 = vmatpush1.xpose.msra.mxu0 0.0
    %2445 = vmatprep.subr.mxu0 0.0
    %2446 = vmatpush1.xpose.msra.mxu0 0.0
    %2447 = vmatprep.subr.mxu0 0.0
    %2448 = vmatpush1.xpose.msra.mxu0 0.0
    %2449 = vmatprep.subr.mxu0 0.0
    %2450 = vmatpush1.xpose.msra.mxu0 0.0
    %2451 = vmatprep.subr.mxu0 0.0
    %2452 = vmatpush1.xpose.msra.mxu0 0.0
    %2453 = vmatprep.subr.mxu0 0.0
    %2454 = vmatpush1.xpose.msra.mxu0 0.0
    %2455 = vmatprep.subr.mxu0 0.0
    %2456 = vmatpush1.xpose.msra.mxu0 0.0
    %2457 = vmatprep.subr.mxu0 0.0
    %2458 = vmatpush1.xpose.msra.mxu0 0.0
    %2459 = vmatprep.subr.mxu0 0.0
    %2460 = vmatpush1.xpose.msra.mxu0 0.0
    %2461 = vmatprep.subr.mxu0 0.0
    %2462 = vmatpush1.xpose.msra.mxu0 0.0
    %2463 = vmatprep.subr.mxu0 0.0
    %2464 = vmatpush1.xpose.msra.mxu0 0.0
    %2465 = vmatprep.subr.mxu0 0.0
    %2466 = vmatpush1.xpose.msra.mxu0 0.0
    %2467 = vmatprep.subr.mxu0 0.0
    %2468 = vmatpush1.xpose.msra.mxu0 0.0
    %2469 = vmatprep.subr.mxu0 0.0
    %2470 = vmatpush1.xpose.msra.mxu0 0.0
    %2471 = vmatprep.subr.mxu0 0.0
    %2472 = vmatpush1.xpose.msra.mxu0 0.0
    %2473 = vmatprep.subr.mxu0 0.0
    %2474 = vmatpush1.xpose.msra.mxu0 0.0
    %2475 = vmatprep.subr.mxu0 0.0
    %2476 = vmatpush1.xpose.msra.mxu0 0.0
    %2477 = vmatprep.subr.mxu0 0.0
    %2478 = vmatpush1.xpose.msra.mxu0 0.0
    %2479 = vmatprep.subr.mxu0 0.0
    %2480 = vmatpush1.xpose.msra.mxu0 0.0
    %2481 = vmatprep.subr.mxu0 0.0
    %2482 = vmatpush1.xpose.msra.mxu0 0.0
    %2483 = vmatprep.subr.mxu0 0.0
    %2484 = vmatpush1.xpose.msra.mxu0 0.0
    %2485 = vmatprep.subr.mxu0 0.0
    %2486 = vmatpush1.xpose.msra.mxu0 0.0
    %2487 = vmatprep.subr.mxu0 0.0
    %2488 = vmatpush1.xpose.msra.mxu0 0.0
    %2489 = vmatprep.mubr.f32.mxu0 0.0
    %2490 = vmatmul.mubr.f32.gmra.mrb[0].mxu0 %v2423
    %v2491 = vpop.f32.mrb[0].mxu0
    %v2492 = vadd.f32 %v1460, %v2491
    %v2493 = vpop.f32.mrb[0].mxu0
    %2494 = vdwg.mxu0
    %v2495 = vmul.f32 %v2492, 1.442695
    %v2496 = vpow.pop %v2495
    %v2497 = vsel %vm1542, %v2496, 0.0
    %2498 = vadd.xlane.f32.xlu0 %v2497
    %v2499 = vpop.xlane.xlu0 %2498
    %v2500 = vrcp.pop %v2499
    %v2501 = vmul.f32 %v2496, %v2500
    %v2503 = vsel %vm895, %v2501, 0
    %2505 = vmatprep.subr.mxu0 0.0
    %2506 = vmatpush1.msra.mxu0 %v881
    %2507 = vmatprep.subr.mxu0 0.0
    %2508 = vmatpush1.msra.mxu0 %v884
    %2509 = vmatprep.subr.mxu0 0.0
    %2510 = vmatpush1.msra.mxu0 0.0
    %2511 = vmatprep.subr.mxu0 0.0
    %2512 = vmatpush1.msra.mxu0 0.0
    %2513 = vmatprep.subr.mxu0 0.0
    %2514 = vmatpush1.msra.mxu0 0.0
    %2515 = vmatprep.subr.mxu0 0.0
    %2516 = vmatpush1.msra.mxu0 0.0
    %2517 = vmatprep.subr.mxu0 0.0
    %2518 = vmatpush1.msra.mxu0 0.0
    %2519 = vmatprep.subr.mxu0 0.0
    %2520 = vmatpush1.msra.mxu0 0.0
    %2521 = vmatprep.subr.mxu0 0.0
    %2522 = vmatpush1.msra.mxu0 0.0
    %2523 = vmatprep.subr.mxu0 0.0
    %2524 = vmatpush1.msra.mxu0 0.0
    %2525 = vmatprep.subr.mxu0 0.0
    %2526 = vmatpush1.msra.mxu0 0.0
    %2527 = vmatprep.subr.mxu0 0.0
    %2528 = vmatpush1.msra.mxu0 0.0
    %2529 = vmatprep.subr.mxu0 0.0
    %2530 = vmatpush1.msra.mxu0 0.0
    %2531 = vmatprep.subr.mxu0 0.0
    %2532 = vmatpush1.msra.mxu0 0.0
    %2533 = vmatprep.subr.mxu0 0.0
    %2534 = vmatpush1.msra.mxu0 0.0
    %2535 = vmatprep.subr.mxu0 0.0
    %2536 = vmatpush1.msra.mxu0 0.0
    %2537 = vmatprep.subr.mxu0 0.0
    %2538 = vmatpush1.msra.mxu0 0.0
    %2539 = vmatprep.subr.mxu0 0.0
    %2540 = vmatpush1.msra.mxu0 0.0
    %2541 = vmatprep.subr.mxu0 0.0
    %2542 = vmatpush1.msra.mxu0 0.0
    %2543 = vmatprep.subr.mxu0 0.0
    %2544 = vmatpush1.msra.mxu0 0.0
    %2545 = vmatprep.subr.mxu0 0.0
    %2546 = vmatpush1.msra.mxu0 0.0
    %2547 = vmatprep.subr.mxu0 0.0
    %2548 = vmatpush1.msra.mxu0 0.0
    %2549 = vmatprep.subr.mxu0 0.0
    %2550 = vmatpush1.msra.mxu0 0.0
    %2551 = vmatprep.subr.mxu0 0.0
    %2552 = vmatpush1.msra.mxu0 0.0
    %2553 = vmatprep.subr.mxu0 0.0
    %2554 = vmatpush1.msra.mxu0 0.0
    %2555 = vmatprep.subr.mxu0 0.0
    %2556 = vmatpush1.msra.mxu0 0.0
    %2557 = vmatprep.subr.mxu0 0.0
    %2558 = vmatpush1.msra.mxu0 0.0
    %2559 = vmatprep.subr.mxu0 0.0
    %2560 = vmatpush1.msra.mxu0 0.0
    %2561 = vmatprep.subr.mxu0 0.0
    %2562 = vmatpush1.msra.mxu0 0.0
    %2563 = vmatprep.subr.mxu0 0.0
    %2564 = vmatpush1.msra.mxu0 0.0
    %2565 = vmatprep.subr.mxu0 0.0
    %2566 = vmatpush1.msra.mxu0 0.0
    %2567 = vmatprep.subr.mxu0 0.0
    %2568 = vmatpush1.msra.mxu0 0.0
    %2569 = vmatprep.mubr.f32.mxu0 0.0
    %2570 = vmatmul.mubr.f32.gmra.mrb[0].mxu0 %v2503
    %v2571 = vpop.f32.mrb[0].mxu0
    %v2572 = vadd.f32 0.0, %v2571
    %v2573 = vpop.f32.mrb[0].mxu0
    %2574 = vdwg.mxu0
    %2575 = vrot.lane.b32.xlu0 %v2422, 32
    %v2576 = vpop.permute.xlu0 %2575
    %v2578 = vsel %vm149, %v2572, %v2576
    %v2580 = vsel %vm1065, %v2578, 0
    %2582 = vmatprep.subr.mxu0 0.0
    %2583 = vmatpush1.msra.mxu0 %v1438
    %2584 = vmatprep.subr.mxu0 0.0
    %2585 = vmatpush1.msra.mxu0 %v1439
    %2586 = vmatprep.subr.mxu0 0.0
    %2587 = vmatpush1.msra.mxu0 %v1440
    %2588 = vmatprep.subr.mxu0 0.0
    %2589 = vmatpush1.msra.mxu0 %v1441
    %2590 = vmatprep.subr.mxu0 0.0
    %2591 = vmatpush1.msra.mxu0 %v1442
    %2592 = vmatprep.subr.mxu0 0.0
    %2593 = vmatpush1.msra.mxu0 %v1443
    %2594 = vmatprep.subr.mxu0 0.0
    %2595 = vmatpush1.msra.mxu0 %v1444
    %2596 = vmatprep.subr.mxu0 0.0
    %2597 = vmatpush1.msra.mxu0 %v1445
    %2598 = vmatprep.subr.mxu0 0.0
    %2599 = vmatpush1.msra.mxu0 0.0
    %2600 = vmatprep.subr.mxu0 0.0
    %2601 = vmatpush1.msra.mxu0 0.0
    %2602 = vmatprep.subr.mxu0 0.0
    %2603 = vmatpush1.msra.mxu0 0.0
    %2604 = vmatprep.subr.mxu0 0.0
    %2605 = vmatpush1.msra.mxu0 0.0
    %2606 = vmatprep.subr.mxu0 0.0
    %2607 = vmatpush1.msra.mxu0 0.0
    %2608 = vmatprep.subr.mxu0 0.0
    %2609 = vmatpush1.msra.mxu0 0.0
    %2610 = vmatprep.subr.mxu0 0.0
    %2611 = vmatpush1.msra.mxu0 0.0
    %2612 = vmatprep.subr.mxu0 0.0
    %2613 = vmatpush1.msra.mxu0 0.0
    %2614 = vmatprep.subr.mxu0 0.0
    %2615 = vmatpush1.msra.mxu0 0.0
    %2616 = vmatprep.subr.mxu0 0.0
    %2617 = vmatpush1.msra.mxu0 0.0
    %2618 = vmatprep.subr.mxu0 0.0
    %2619 = vmatpush1.msra.mxu0 0.0
    %2620 = vmatprep.subr.mxu0 0.0
    %2621 = vmatpush1.msra.mxu0 0.0
    %2622 = vmatprep.subr.mxu0 0.0
    %2623 = vmatpush1.msra.mxu0 0.0
    %2624 = vmatprep.subr.mxu0 0.0
    %2625 = vmatpush1.msra.mxu0 0.0
    %2626 = vmatprep.subr.mxu0 0.0
    %2627 = vmatpush1.msra.mxu0 0.0
    %2628 = vmatprep.subr.mxu0 0.0
    %2629 = vmatpush1.msra.mxu0 0.0
    %2630 = vmatprep.subr.mxu0 0.0
    %2631 = vmatpush1.msra.mxu0 0.0
    %2632 = vmatprep.subr.mxu0 0.0
    %2633 = vmatpush1.msra.mxu0 0.0
    %2634 = vmatprep.subr.mxu0 0.0
    %2635 = vmatpush1.msra.mxu0 0.0
    %2636 = vmatprep.subr.mxu0 0.0
    %2637 = vmatpush1.msra.mxu0 0.0
    %2638 = vmatprep.subr.mxu0 0.0
    %2639 = vmatpush1.msra.mxu0 0.0
    %2640 = vmatprep.subr.mxu0 0.0
    %2641 = vmatpush1.msra.mxu0 0.0
    %2642 = vmatprep.subr.mxu0 0.0
    %2643 = vmatpush1.msra.mxu0 0.0
    %2644 = vmatprep.subr.mxu0 0.0
    %2645 = vmatpush1.msra.mxu0 0.0
    %2646 = vmatprep.mubr.f32.mxu0 0.0
    %2647 = vmatmul.mubr.f32.gmra.mrb[0].mxu0 %v2580
    %v2648 = vpop.f32.mrb[0].mxu0
    %v2649 = vadd.f32 0.0, %v2648
    %v2650 = vpop.f32.mrb[0].mxu0
    %2651 = vdwg.mxu0
    %v2653 = vrot.slane %v2649, 4
    %v2655 = vadd.f32 %v1430, %v2653
    %v2656 = vadd.f32 %v2655, %v1702
    %v2657 = vtanh.pop %v2656
    %v2659 = vsel %vm149, %v2420, 0
    %2661 = vmatprep.subr.mxu0 0.0
    %2662 = vmatpush1.xpose.msra.mxu0 %v1465
    %2663 = vmatprep.subr.mxu0 0.0
    %2664 = vmatpush1.xpose.msra.mxu0 %v1468
    %2665 = vmatprep.subr.mxu0 0.0
    %2666 = vmatpush1.xpose.msra.mxu0 0.0
    %2667 = vmatprep.subr.mxu0 0.0
    %2668 = vmatpush1.xpose.msra.mxu0 0.0
    %2669 = vmatprep.subr.mxu0 0.0
    %2670 = vmatpush1.xpose.msra.mxu0 0.0
    %2671 = vmatprep.subr.mxu0 0.0
    %2672 = vmatpush1.xpose.msra.mxu0 0.0
    %2673 = vmatprep.subr.mxu0 0.0
    %2674 = vmatpush1.xpose.msra.mxu0 0.0
    %2675 = vmatprep.subr.mxu0 0.0
    %2676 = vmatpush1.xpose.msra.mxu0 0.0
    %2677 = vmatprep.subr.mxu0 0.0
    %2678 = vmatpush1.xpose.msra.mxu0 0.0
    %2679 = vmatprep.subr.mxu0 0.0
    %2680 = vmatpush1.xpose.msra.mxu0 0.0
    %2681 = vmatprep.subr.mxu0 0.0
    %2682 = vmatpush1.xpose.msra.mxu0 0.0
    %2683 = vmatprep.subr.mxu0 0.0
    %2684 = vmatpush1.xpose.msra.mxu0 0.0
    %2685 = vmatprep.subr.mxu0 0.0
    %2686 = vmatpush1.xpose.msra.mxu0 0.0
    %2687 = vmatprep.subr.mxu0 0.0
    %2688 = vmatpush1.xpose.msra.mxu0 0.0
    %2689 = vmatprep.subr.mxu0 0.0
    %2690 = vmatpush1.xpose.msra.mxu0 0.0
    %2691 = vmatprep.subr.mxu0 0.0
    %2692 = vmatpush1.xpose.msra.mxu0 0.0
    %2693 = vmatprep.subr.mxu0 0.0
    %2694 = vmatpush1.xpose.msra.mxu0 0.0
    %2695 = vmatprep.subr.mxu0 0.0
    %2696 = vmatpush1.xpose.msra.mxu0 0.0
    %2697 = vmatprep.subr.mxu0 0.0
    %2698 = vmatpush1.xpose.msra.mxu0 0.0
    %2699 = vmatprep.subr.mxu0 0.0
    %2700 = vmatpush1.xpose.msra.mxu0 0.0
    %2701 = vmatprep.subr.mxu0 0.0
    %2702 = vmatpush1.xpose.msra.mxu0 0.0
    %2703 = vmatprep.subr.mxu0 0.0
    %2704 = vmatpush1.xpose.msra.mxu0 0.0
    %2705 = vmatprep.subr.mxu0 0.0
    %2706 = vmatpush1.xpose.msra.mxu0 0.0
    %2707 = vmatprep.subr.mxu0 0.0
    %2708 = vmatpush1.xpose.msra.mxu0 0.0
    %2709 = vmatprep.subr.mxu0 0.0
    %2710 = vmatpush1.xpose.msra.mxu0 0.0
    %2711 = vmatprep.subr.mxu0 0.0
    %2712 = vmatpush1.xpose.msra.mxu0 0.0
    %2713 = vmatprep.subr.mxu0 0.0
    %2714 = vmatpush1.xpose.msra.mxu0 0.0
    %2715 = vmatprep.subr.mxu0 0.0
    %2716 = vmatpush1.xpose.msra.mxu0 0.0
    %2717 = vmatprep.subr.mxu0 0.0
    %2718 = vmatpush1.xpose.msra.mxu0 0.0
    %2719 = vmatprep.subr.mxu0 0.0
    %2720 = vmatpush1.xpose.msra.mxu0 0.0
    %2721 = vmatprep.subr.mxu0 0.0
    %2722 = vmatpush1.xpose.msra.mxu0 0.0
    %2723 = vmatprep.subr.mxu0 0.0
    %2724 = vmatpush1.xpose.msra.mxu0 0.0
    %2725 = vmatprep.mubr.f32.mxu0 0.0
    %2726 = vmatmul.mubr.f32.gmra.mrb[0].mxu0 %v2659
    %v2727 = vpop.f32.mrb[0].mxu0
    %v2728 = vadd.f32 %v1460, %v2727
    %v2729 = vpop.f32.mrb[0].mxu0
    %2730 = vdwg.mxu0
    %v2731 = vmul.f32 %v2728, 1.442695
    %v2732 = vpow.pop %v2731
    %v2733 = vsel %vm1542, %v2732, 0.0
    %2734 = vadd.xlane.f32.xlu0 %v2733
    %v2735 = vpop.xlane.xlu0 %2734
    %v2736 = vrcp.pop %v2735
    %v2737 = vmul.f32 %v2732, %v2736
    %v2739 = vsel %vm895, %v2737, 0
    %2741 = vmatprep.subr.mxu0 0.0
    %2742 = vmatpush1.msra.mxu0 %v881
    %2743 = vmatprep.subr.mxu0 0.0
    %2744 = vmatpush1.msra.mxu0 %v884
    %2745 = vmatprep.subr.mxu0 0.0
    %2746 = vmatpush1.msra.mxu0 0.0
    %2747 = vmatprep.subr.mxu0 0.0
    %2748 = vmatpush1.msra.mxu0 0.0
    %2749 = vmatprep.subr.mxu0 0.0
    %2750 = vmatpush1.msra.mxu0 0.0
    %2751 = vmatprep.subr.mxu0 0.0
    %2752 = vmatpush1.msra.mxu0 0.0
    %2753 = vmatprep.subr.mxu0 0.0
    %2754 = vmatpush1.msra.mxu0 0.0
    %2755 = vmatprep.subr.mxu0 0.0
    %2756 = vmatpush1.msra.mxu0 0.0
    %2757 = vmatprep.subr.mxu0 0.0
    %2758 = vmatpush1.msra.mxu0 0.0
    %2759 = vmatprep.subr.mxu0 0.0
    %2760 = vmatpush1.msra.mxu0 0.0
    %2761 = vmatprep.subr.mxu0 0.0
    %2762 = vmatpush1.msra.mxu0 0.0
    %2763 = vmatprep.subr.mxu0 0.0
    %2764 = vmatpush1.msra.mxu0 0.0
    %2765 = vmatprep.subr.mxu0 0.0
    %2766 = vmatpush1.msra.mxu0 0.0
    %2767 = vmatprep.subr.mxu0 0.0
    %2768 = vmatpush1.msra.mxu0 0.0
    %2769 = vmatprep.subr.mxu0 0.0
    %2770 = vmatpush1.msra.mxu0 0.0
    %2771 = vmatprep.subr.mxu0 0.0
    %2772 = vmatpush1.msra.mxu0 0.0
    %2773 = vmatprep.subr.mxu0 0.0
    %2774 = vmatpush1.msra.mxu0 0.0
    %2775 = vmatprep.subr.mxu0 0.0
    %2776 = vmatpush1.msra.mxu0 0.0
    %2777 = vmatprep.subr.mxu0 0.0
    %2778 = vmatpush1.msra.mxu0 0.0
    %2779 = vmatprep.subr.mxu0 0.0
    %2780 = vmatpush1.msra.mxu0 0.0
    %2781 = vmatprep.subr.mxu0 0.0
    %2782 = vmatpush1.msra.mxu0 0.0
    %2783 = vmatprep.subr.mxu0 0.0
    %2784 = vmatpush1.msra.mxu0 0.0
    %2785 = vmatprep.subr.mxu0 0.0
    %2786 = vmatpush1.msra.mxu0 0.0
    %2787 = vmatprep.subr.mxu0 0.0
    %2788 = vmatpush1.msra.mxu0 0.0
    %2789 = vmatprep.subr.mxu0 0.0
    %2790 = vmatpush1.msra.mxu0 0.0
    %2791 = vmatprep.subr.mxu0 0.0
    %2792 = vmatpush1.msra.mxu0 0.0
    %2793 = vmatprep.subr.mxu0 0.0
    %2794 = vmatpush1.msra.mxu0 0.0
    %2795 = vmatprep.subr.mxu0 0.0
    %2796 = vmatpush1.msra.mxu0 0.0
    %2797 = vmatprep.subr.mxu0 0.0
    %2798 = vmatpush1.msra.mxu0 0.0
    %2799 = vmatprep.subr.mxu0 0.0
    %2800 = vmatpush1.msra.mxu0 0.0
    %2801 = vmatprep.subr.mxu0 0.0
    %2802 = vmatpush1.msra.mxu0 0.0
    %2803 = vmatprep.subr.mxu0 0.0
    %2804 = vmatpush1.msra.mxu0 0.0
    %2805 = vmatprep.mubr.f32.mxu0 0.0
    %2806 = vmatmul.mubr.f32.gmra.mrb[0].mxu0 %v2739
    %v2807 = vpop.f32.mrb[0].mxu0
    %v2808 = vadd.f32 0.0, %v2807
    %v2809 = vpop.f32.mrb[0].mxu0
    %2810 = vdwg.mxu0
    %v2812 = vrot.slane %v2808, 4
    %2813 = vrot.lane.b32.xlu0 %v2812, 32
    %v2814 = vpop.permute.xlu0 %2813
    %v2816 = vrot.slane %v2420, 4
    %2817 = vrot.lane.b32.xlu0 %v2816, 64
    %v2818 = vpop.permute.xlu0 %2817
    %v2820 = vsel %vm149, %v2657, %v2814
    %v2821 = vsel %vm1065, %v2820, %v2818
    %v2823 = vrot.slane %v2821, 4
    %v2824 = vsel %vm1871, %v2823, 0
    %2826 = vmatprep.subr.mxu0 0.0
    %2827 = vmatpush1.msra.mxu0 %v1446
    %2828 = vmatprep.subr.mxu0 0.0
    %2829 = vmatpush1.msra.mxu0 %v1447
    %2830 = vmatprep.subr.mxu0 0.0
    %2831 = vmatpush1.msra.mxu0 %v1448
    %2832 = vmatprep.subr.mxu0 0.0
    %2833 = vmatpush1.msra.mxu0 %v1449
    %2834 = vmatprep.subr.mxu0 0.0
    %2835 = vmatpush1.msra.mxu0 %v1450
    %2836 = vmatprep.subr.mxu0 0.0
    %2837 = vmatpush1.msra.mxu0 %v1451
    %2838 = vmatprep.subr.mxu0 0.0
    %2839 = vmatpush1.msra.mxu0 %v1452
    %2840 = vmatprep.subr.mxu0 0.0
    %2841 = vmatpush1.msra.mxu0 %v1453
    %2842 = vmatprep.subr.mxu0 0.0
    %2843 = vmatpush1.msra.mxu0 %v1454
    %2844 = vmatprep.subr.mxu0 0.0
    %2845 = vmatpush1.msra.mxu0 %v1455
    %2846 = vmatprep.subr.mxu0 0.0
    %2847 = vmatpush1.msra.mxu0 %v1456
    %2848 = vmatprep.subr.mxu0 0.0
    %2849 = vmatpush1.msra.mxu0 %v1457
    %2850 = vmatprep.subr.mxu0 0.0
    %2851 = vmatpush1.msra.mxu0 0.0
    %2852 = vmatprep.subr.mxu0 0.0
    %2853 = vmatpush1.msra.mxu0 0.0
    %2854 = vmatprep.subr.mxu0 0.0
    %2855 = vmatpush1.msra.mxu0 0.0
    %2856 = vmatprep.subr.mxu0 0.0
    %2857 = vmatpush1.msra.mxu0 0.0
    %2858 = vmatprep.subr.mxu0 0.0
    %2859 = vmatpush1.msra.mxu0 0.0
    %2860 = vmatprep.subr.mxu0 0.0
    %2861 = vmatpush1.msra.mxu0 0.0
    %2862 = vmatprep.subr.mxu0 0.0
    %2863 = vmatpush1.msra.mxu0 0.0
    %2864 = vmatprep.subr.mxu0 0.0
    %2865 = vmatpush1.msra.mxu0 0.0
    %2866 = vmatprep.subr.mxu0 0.0
    %2867 = vmatpush1.msra.mxu0 0.0
    %2868 = vmatprep.subr.mxu0 0.0
    %2869 = vmatpush1.msra.mxu0 0.0
    %2870 = vmatprep.subr.mxu0 0.0
    %2871 = vmatpush1.msra.mxu0 0.0
    %2872 = vmatprep.subr.mxu0 0.0
    %2873 = vmatpush1.msra.mxu0 0.0
    %2874 = vmatprep.subr.mxu0 0.0
    %2875 = vmatpush1.msra.mxu0 0.0
    %2876 = vmatprep.subr.mxu0 0.0
    %2877 = vmatpush1.msra.mxu0 0.0
    %2878 = vmatprep.subr.mxu0 0.0
    %2879 = vmatpush1.msra.mxu0 0.0
    %2880 = vmatprep.subr.mxu0 0.0
    %2881 = vmatpush1.msra.mxu0 0.0
    %2882 = vmatprep.subr.mxu0 0.0
    %2883 = vmatpush1.msra.mxu0 0.0
    %2884 = vmatprep.subr.mxu0 0.0
    %2885 = vmatpush1.msra.mxu0 0.0
    %2886 = vmatprep.subr.mxu0 0.0
    %2887 = vmatpush1.msra.mxu0 0.0
    %2888 = vmatprep.subr.mxu0 0.0
    %2889 = vmatpush1.msra.mxu0 0.0
    %2890 = vmatprep.mubr.f32.mxu0 0.0
    %2891 = vmatmul.mubr.f32.gmra.mrb[0].mxu0 %v2824
    %v2892 = vpop.f32.mrb[0].mxu0
    %v2893 = vadd.f32 %v1870, %v2892
    %v2894 = vpop.f32.mrb[0].mxu0
    %2895 = vdwg.mxu0
    %v2896 = vtanh.pop %v2893
    %v2898 = vrot.slane %v2657, 4
    %v2899 = vsel %vm149, %v2898, 0
    %2901 = vmatprep.subr.mxu0 0.0
    %2902 = vmatpush1.xpose.msra.mxu0 %v1465
    %2903 = vmatprep.subr.mxu0 0.0
    %2904 = vmatpush1.xpose.msra.mxu0 %v1468
    %2905 = vmatprep.subr.mxu0 0.0
    %2906 = vmatpush1.xpose.msra.mxu0 0.0
    %2907 = vmatprep.subr.mxu0 0.0
    %2908 = vmatpush1.xpose.msra.mxu0 0.0
    %2909 = vmatprep.subr.mxu0 0.0
    %2910 = vmatpush1.xpose.msra.mxu0 0.0
    %2911 = vmatprep.subr.mxu0 0.0
    %2912 = vmatpush1.xpose.msra.mxu0 0.0
    %2913 = vmatprep.subr.mxu0 0.0
    %2914 = vmatpush1.xpose.msra.mxu0 0.0
    %2915 = vmatprep.subr.mxu0 0.0
    %2916 = vmatpush1.xpose.msra.mxu0 0.0
    %2917 = vmatprep.subr.mxu0 0.0
    %2918 = vmatpush1.xpose.msra.mxu0 0.0
    %2919 = vmatprep.subr.mxu0 0.0
    %2920 = vmatpush1.xpose.msra.mxu0 0.0
    %2921 = vmatprep.subr.mxu0 0.0
    %2922 = vmatpush1.xpose.msra.mxu0 0.0
    %2923 = vmatprep.subr.mxu0 0.0
    %2924 = vmatpush1.xpose.msra.mxu0 0.0
    %2925 = vmatprep.subr.mxu0 0.0
    %2926 = vmatpush1.xpose.msra.mxu0 0.0
    %2927 = vmatprep.subr.mxu0 0.0
    %2928 = vmatpush1.xpose.msra.mxu0 0.0
    %2929 = vmatprep.subr.mxu0 0.0
    %2930 = vmatpush1.xpose.msra.mxu0 0.0
    %2931 = vmatprep.subr.mxu0 0.0
    %2932 = vmatpush1.xpose.msra.mxu0 0.0
    %2933 = vmatprep.subr.mxu0 0.0
    %2934 = vmatpush1.xpose.msra.mxu0 0.0
    %2935 = vmatprep.subr.mxu0 0.0
    %2936 = vmatpush1.xpose.msra.mxu0 0.0
    %2937 = vmatprep.subr.mxu0 0.0
    %2938 = vmatpush1.xpose.msra.mxu0 0.0
    %2939 = vmatprep.subr.mxu0 0.0
    %2940 = vmatpush1.xpose.msra.mxu0 0.0
    %2941 = vmatprep.subr.mxu0 0.0
    %2942 = vmatpush1.xpose.msra.mxu0 0.0
    %2943 = vmatprep.subr.mxu0 0.0
    %2944 = vmatpush1.xpose.msra.mxu0 0.0
    %2945 = vmatprep.subr.mxu0 0.0
    %2946 = vmatpush1.xpose.msra.mxu0 0.0
    %2947 = vmatprep.subr.mxu0 0.0
    %2948 = vmatpush1.xpose.msra.mxu0 0.0
    %2949 = vmatprep.subr.mxu0 0.0
    %2950 = vmatpush1.xpose.msra.mxu0 0.0
    %2951 = vmatprep.subr.mxu0 0.0
    %2952 = vmatpush1.xpose.msra.mxu0 0.0
    %2953 = vmatprep.subr.mxu0 0.0
    %2954 = vmatpush1.xpose.msra.mxu0 0.0
    %2955 = vmatprep.subr.mxu0 0.0
    %2956 = vmatpush1.xpose.msra.mxu0 0.0
    %2957 = vmatprep.subr.mxu0 0.0
    %2958 = vmatpush1.xpose.msra.mxu0 0.0
    %2959 = vmatprep.subr.mxu0 0.0
    %2960 = vmatpush1.xpose.msra.mxu0 0.0
    %2961 = vmatprep.subr.mxu0 0.0
    %2962 = vmatpush1.xpose.msra.mxu0 0.0
    %2963 = vmatprep.subr.mxu0 0.0
    %2964 = vmatpush1.xpose.msra.mxu0 0.0
    %2965 = vmatprep.mubr.f32.mxu0 0.0
    %2966 = vmatmul.mubr.f32.gmra.mrb[0].mxu0 %v2899
    %v2967 = vpop.f32.mrb[0].mxu0
    %v2968 = vadd.f32 %v1460, %v2967
    %v2969 = vpop.f32.mrb[0].mxu0
    %2970 = vdwg.mxu0
    %v2971 = vmul.f32 %v2968, 1.442695
    %v2972 = vpow.pop %v2971
    %v2973 = vsel %vm1542, %v2972, 0.0
    %2974 = vadd.xlane.f32.xlu0 %v2973
    %v2975 = vpop.xlane.xlu0 %2974
    %v2976 = vrcp.pop %v2975
    %v2977 = vmul.f32 %v2972, %v2976
    %v2979 = vsel %vm895, %v2977, 0
    %2981 = vmatprep.subr.mxu0 0.0
    %2982 = vmatpush1.msra.mxu0 %v881
    %2983 = vmatprep.subr.mxu0 0.0
    %2984 = vmatpush1.msra.mxu0 %v884
    %2985 = vmatprep.subr.mxu0 0.0
    %2986 = vmatpush1.msra.mxu0 0.0
    %2987 = vmatprep.subr.mxu0 0.0
    %2988 = vmatpush1.msra.mxu0 0.0
    %2989 = vmatprep.subr.mxu0 0.0
    %2990 = vmatpush1.msra.mxu0 0.0
    %2991 = vmatprep.subr.mxu0 0.0
    %2992 = vmatpush1.msra.mxu0 0.0
    %2993 = vmatprep.subr.mxu0 0.0
    %2994 = vmatpush1.msra.mxu0 0.0
    %2995 = vmatprep.subr.mxu0 0.0
    %2996 = vmatpush1.msra.mxu0 0.0
    %2997 = vmatprep.subr.mxu0 0.0
    %2998 = vmatpush1.msra.mxu0 0.0
    %2999 = vmatprep.subr.mxu0 0.0
    %3000 = vmatpush1.msra.mxu0 0.0
    %3001 = vmatprep.subr.mxu0 0.0
    %3002 = vmatpush1.msra.mxu0 0.0
    %3003 = vmatprep.subr.mxu0 0.0
    %3004 = vmatpush1.msra.mxu0 0.0
    %3005 = vmatprep.subr.mxu0 0.0
    %3006 = vmatpush1.msra.mxu0 0.0
    %3007 = vmatprep.subr.mxu0 0.0
    %3008 = vmatpush1.msra.mxu0 0.0
    %3009 = vmatprep.subr.mxu0 0.0
    %3010 = vmatpush1.msra.mxu0 0.0
    %3011 = vmatprep.subr.mxu0 0.0
    %3012 = vmatpush1.msra.mxu0 0.0
    %3013 = vmatprep.subr.mxu0 0.0
    %3014 = vmatpush1.msra.mxu0 0.0
    %3015 = vmatprep.subr.mxu0 0.0
    %3016 = vmatpush1.msra.mxu0 0.0
    %3017 = vmatprep.subr.mxu0 0.0
    %3018 = vmatpush1.msra.mxu0 0.0
    %3019 = vmatprep.subr.mxu0 0.0
    %3020 = vmatpush1.msra.mxu0 0.0
    %3021 = vmatprep.subr.mxu0 0.0
    %3022 = vmatpush1.msra.mxu0 0.0
    %3023 = vmatprep.subr.mxu0 0.0
    %3024 = vmatpush1.msra.mxu0 0.0
    %3025 = vmatprep.subr.mxu0 0.0
    %3026 = vmatpush1.msra.mxu0 0.0
    %3027 = vmatprep.subr.mxu0 0.0
    %3028 = vmatpush1.msra.mxu0 0.0
    %3029 = vmatprep.subr.mxu0 0.0
    %3030 = vmatpush1.msra.mxu0 0.0
    %3031 = vmatprep.subr.mxu0 0.0
    %3032 = vmatpush1.msra.mxu0 0.0
    %3033 = vmatprep.subr.mxu0 0.0
    %3034 = vmatpush1.msra.mxu0 0.0
    %3035 = vmatprep.subr.mxu0 0.0
    %3036 = vmatpush1.msra.mxu0 0.0
    %3037 = vmatprep.subr.mxu0 0.0
    %3038 = vmatpush1.msra.mxu0 0.0
    %3039 = vmatprep.subr.mxu0 0.0
    %3040 = vmatpush1.msra.mxu0 0.0
    %3041 = vmatprep.subr.mxu0 0.0
    %3042 = vmatpush1.msra.mxu0 0.0
    %3043 = vmatprep.subr.mxu0 0.0
    %3044 = vmatpush1.msra.mxu0 0.0
    %3045 = vmatprep.mubr.f32.mxu0 0.0
    %3046 = vmatmul.mubr.f32.gmra.mrb[0].mxu0 %v2979
    %v3047 = vpop.f32.mrb[0].mxu0
    %v3048 = vadd.f32 0.0, %v3047
    %v3049 = vpop.f32.mrb[0].mxu0
    %3050 = vdwg.mxu0
    %3051 = vrot.lane.b32.xlu0 %v2898, 32
    %v3052 = vpop.permute.xlu0 %3051
    %v3054 = vsel %vm149, %v3048, %v3052
    %v3056 = vsel %vm1065, %v3054, 0
    %3058 = vmatprep.subr.mxu0 0.0
    %3059 = vmatpush1.msra.mxu0 %v1438
    %3060 = vmatprep.subr.mxu0 0.0
    %3061 = vmatpush1.msra.mxu0 %v1439
    %3062 = vmatprep.subr.mxu0 0.0
    %3063 = vmatpush1.msra.mxu0 %v1440
    %3064 = vmatprep.subr.mxu0 0.0
    %3065 = vmatpush1.msra.mxu0 %v1441
    %3066 = vmatprep.subr.mxu0 0.0
    %3067 = vmatpush1.msra.mxu0 %v1442
    %3068 = vmatprep.subr.mxu0 0.0
    %3069 = vmatpush1.msra.mxu0 %v1443
    %3070 = vmatprep.subr.mxu0 0.0
    %3071 = vmatpush1.msra.mxu0 %v1444
    %3072 = vmatprep.subr.mxu0 0.0
    %3073 = vmatpush1.msra.mxu0 %v1445
    %3074 = vmatprep.subr.mxu0 0.0
    %3075 = vmatpush1.msra.mxu0 0.0
    %3076 = vmatprep.subr.mxu0 0.0
    %3077 = vmatpush1.msra.mxu0 0.0
    %3078 = vmatprep.subr.mxu0 0.0
    %3079 = vmatpush1.msra.mxu0 0.0
    %3080 = vmatprep.subr.mxu0 0.0
    %3081 = vmatpush1.msra.mxu0 0.0
    %3082 = vmatprep.subr.mxu0 0.0
    %3083 = vmatpush1.msra.mxu0 0.0
    %3084 = vmatprep.subr.mxu0 0.0
    %3085 = vmatpush1.msra.mxu0 0.0
    %3086 = vmatprep.subr.mxu0 0.0
    %3087 = vmatpush1.msra.mxu0 0.0
    %3088 = vmatprep.subr.mxu0 0.0
    %3089 = vmatpush1.msra.mxu0 0.0
    %3090 = vmatprep.subr.mxu0 0.0
    %3091 = vmatpush1.msra.mxu0 0.0
    %3092 = vmatprep.subr.mxu0 0.0
    %3093 = vmatpush1.msra.mxu0 0.0
    %3094 = vmatprep.subr.mxu0 0.0
    %3095 = vmatpush1.msra.mxu0 0.0
    %3096 = vmatprep.subr.mxu0 0.0
    %3097 = vmatpush1.msra.mxu0 0.0
    %3098 = vmatprep.subr.mxu0 0.0
    %3099 = vmatpush1.msra.mxu0 0.0
    %3100 = vmatprep.subr.mxu0 0.0
    %3101 = vmatpush1.msra.mxu0 0.0
    %3102 = vmatprep.subr.mxu0 0.0
    %3103 = vmatpush1.msra.mxu0 0.0
    %3104 = vmatprep.subr.mxu0 0.0
    %3105 = vmatpush1.msra.mxu0 0.0
    %3106 = vmatprep.subr.mxu0 0.0
    %3107 = vmatpush1.msra.mxu0 0.0
    %3108 = vmatprep.subr.mxu0 0.0
    %3109 = vmatpush1.msra.mxu0 0.0
    %3110 = vmatprep.subr.mxu0 0.0
    %3111 = vmatpush1.msra.mxu0 0.0
    %3112 = vmatprep.subr.mxu0 0.0
    %3113 = vmatpush1.msra.mxu0 0.0
    %3114 = vmatprep.subr.mxu0 0.0
    %3115 = vmatpush1.msra.mxu0 0.0
    %3116 = vmatprep.subr.mxu0 0.0
    %3117 = vmatpush1.msra.mxu0 0.0
    %3118 = vmatprep.subr.mxu0 0.0
    %3119 = vmatpush1.msra.mxu0 0.0
    %3120 = vmatprep.subr.mxu0 0.0
    %3121 = vmatpush1.msra.mxu0 0.0
    %3122 = vmatprep.mubr.f32.mxu0 0.0
    %3123 = vmatmul.mubr.f32.gmra.mrb[0].mxu0 %v3056
    %v3124 = vpop.f32.mrb[0].mxu0
    %v3125 = vadd.f32 0.0, %v3124
    %v3126 = vpop.f32.mrb[0].mxu0
    %3127 = vdwg.mxu0
    %v3129 = vrot.slane %v3125, 2
    %v3131 = vadd.f32 %v1430, %v3129
    %v3132 = vadd.f32 %v3131, %v1702
    %v3133 = vtanh.pop %v3132
    %v3135 = vsel %vm149, %v2896, 0
    %3137 = vmatprep.subr.mxu0 0.0
    %3138 = vmatpush1.xpose.msra.mxu0 %v1465
    %3139 = vmatprep.subr.mxu0 0.0
    %3140 = vmatpush1.xpose.msra.mxu0 %v1468
    %3141 = vmatprep.subr.mxu0 0.0
    %3142 = vmatpush1.xpose.msra.mxu0 0.0
    %3143 = vmatprep.subr.mxu0 0.0
    %3144 = vmatpush1.xpose.msra.mxu0 0.0
    %3145 = vmatprep.subr.mxu0 0.0
    %3146 = vmatpush1.xpose.msra.mxu0 0.0
    %3147 = vmatprep.subr.mxu0 0.0
    %3148 = vmatpush1.xpose.msra.mxu0 0.0
    %3149 = vmatprep.subr.mxu0 0.0
    %3150 = vmatpush1.xpose.msra.mxu0 0.0
    %3151 = vmatprep.subr.mxu0 0.0
    %3152 = vmatpush1.xpose.msra.mxu0 0.0
    %3153 = vmatprep.subr.mxu0 0.0
    %3154 = vmatpush1.xpose.msra.mxu0 0.0
    %3155 = vmatprep.subr.mxu0 0.0
    %3156 = vmatpush1.xpose.msra.mxu0 0.0
    %3157 = vmatprep.subr.mxu0 0.0
    %3158 = vmatpush1.xpose.msra.mxu0 0.0
    %3159 = vmatprep.subr.mxu0 0.0
    %3160 = vmatpush1.xpose.msra.mxu0 0.0
    %3161 = vmatprep.subr.mxu0 0.0
    %3162 = vmatpush1.xpose.msra.mxu0 0.0
    %3163 = vmatprep.subr.mxu0 0.0
    %3164 = vmatpush1.xpose.msra.mxu0 0.0
    %3165 = vmatprep.subr.mxu0 0.0
    %3166 = vmatpush1.xpose.msra.mxu0 0.0
    %3167 = vmatprep.subr.mxu0 0.0
    %3168 = vmatpush1.xpose.msra.mxu0 0.0
    %3169 = vmatprep.subr.mxu0 0.0
    %3170 = vmatpush1.xpose.msra.mxu0 0.0
    %3171 = vmatprep.subr.mxu0 0.0
    %3172 = vmatpush1.xpose.msra.mxu0 0.0
    %3173 = vmatprep.subr.mxu0 0.0
    %3174 = vmatpush1.xpose.msra.mxu0 0.0
    %3175 = vmatprep.subr.mxu0 0.0
    %3176 = vmatpush1.xpose.msra.mxu0 0.0
    %3177 = vmatprep.subr.mxu0 0.0
    %3178 = vmatpush1.xpose.msra.mxu0 0.0
    %3179 = vmatprep.subr.mxu0 0.0
    %3180 = vmatpush1.xpose.msra.mxu0 0.0
    %3181 = vmatprep.subr.mxu0 0.0
    %3182 = vmatpush1.xpose.msra.mxu0 0.0
    %3183 = vmatprep.subr.mxu0 0.0
    %3184 = vmatpush1.xpose.msra.mxu0 0.0
    %3185 = vmatprep.subr.mxu0 0.0
    %3186 = vmatpush1.xpose.msra.mxu0 0.0
    %3187 = vmatprep.subr.mxu0 0.0
    %3188 = vmatpush1.xpose.msra.mxu0 0.0
    %3189 = vmatprep.subr.mxu0 0.0
    %3190 = vmatpush1.xpose.msra.mxu0 0.0
    %3191 = vmatprep.subr.mxu0 0.0
    %3192 = vmatpush1.xpose.msra.mxu0 0.0
    %3193 = vmatprep.subr.mxu0 0.0
    %3194 = vmatpush1.xpose.msra.mxu0 0.0
    %3195 = vmatprep.subr.mxu0 0.0
    %3196 = vmatpush1.xpose.msra.mxu0 0.0
    %3197 = vmatprep.subr.mxu0 0.0
    %3198 = vmatpush1.xpose.msra.mxu0 0.0
    %3199 = vmatprep.subr.mxu0 0.0
    %3200 = vmatpush1.xpose.msra.mxu0 0.0
    %3201 = vmatprep.mubr.f32.mxu0 0.0
    %3202 = vmatmul.mubr.f32.gmra.mrb[0].mxu0 %v3135
    %v3203 = vpop.f32.mrb[0].mxu0
    %v3204 = vadd.f32 %v1460, %v3203
    %v3205 = vpop.f32.mrb[0].mxu0
    %3206 = vdwg.mxu0
    %v3207 = vmul.f32 %v3204, 1.442695
    %v3208 = vpow.pop %v3207
    %v3209 = vsel %vm1542, %v3208, 0.0
    %3210 = vadd.xlane.f32.xlu0 %v3209
    %v3211 = vpop.xlane.xlu0 %3210
    %v3212 = vrcp.pop %v3211
    %v3213 = vmul.f32 %v3208, %v3212
    %v3215 = vsel %vm895, %v3213, 0
    %3217 = vmatprep.subr.mxu0 0.0
    %3218 = vmatpush1.msra.mxu0 %v881
    %3219 = vmatprep.subr.mxu0 0.0
    %3220 = vmatpush1.msra.mxu0 %v884
    %3221 = vmatprep.subr.mxu0 0.0
    %3222 = vmatpush1.msra.mxu0 0.0
    %3223 = vmatprep.subr.mxu0 0.0
    %3224 = vmatpush1.msra.mxu0 0.0
    %3225 = vmatprep.subr.mxu0 0.0
    %3226 = vmatpush1.msra.mxu0 0.0
    %3227 = vmatprep.subr.mxu0 0.0
    %3228 = vmatpush1.msra.mxu0 0.0
    %3229 = vmatprep.subr.mxu0 0.0
    %3230 = vmatpush1.msra.mxu0 0.0
    %3231 = vmatprep.subr.mxu0 0.0
    %3232 = vmatpush1.msra.mxu0 0.0
    %3233 = vmatprep.subr.mxu0 0.0
    %3234 = vmatpush1.msra.mxu0 0.0
    %3235 = vmatprep.subr.mxu0 0.0
    %3236 = vmatpush1.msra.mxu0 0.0
    %3237 = vmatprep.subr.mxu0 0.0
    %3238 = vmatpush1.msra.mxu0 0.0
    %3239 = vmatprep.subr.mxu0 0.0
    %3240 = vmatpush1.msra.mxu0 0.0
    %3241 = vmatprep.subr.mxu0 0.0
    %3242 = vmatpush1.msra.mxu0 0.0
    %3243 = vmatprep.subr.mxu0 0.0
    %3244 = vmatpush1.msra.mxu0 0.0
    %3245 = vmatprep.subr.mxu0 0.0
    %3246 = vmatpush1.msra.mxu0 0.0
    %3247 = vmatprep.subr.mxu0 0.0
    %3248 = vmatpush1.msra.mxu0 0.0
    %3249 = vmatprep.subr.mxu0 0.0
    %3250 = vmatpush1.msra.mxu0 0.0
    %3251 = vmatprep.subr.mxu0 0.0
    %3252 = vmatpush1.msra.mxu0 0.0
    %3253 = vmatprep.subr.mxu0 0.0
    %3254 = vmatpush1.msra.mxu0 0.0
    %3255 = vmatprep.subr.mxu0 0.0
    %3256 = vmatpush1.msra.mxu0 0.0
    %3257 = vmatprep.subr.mxu0 0.0
    %3258 = vmatpush1.msra.mxu0 0.0
    %3259 = vmatprep.subr.mxu0 0.0
    %3260 = vmatpush1.msra.mxu0 0.0
    %3261 = vmatprep.subr.mxu0 0.0
    %3262 = vmatpush1.msra.mxu0 0.0
    %3263 = vmatprep.subr.mxu0 0.0
    %3264 = vmatpush1.msra.mxu0 0.0
    %3265 = vmatprep.subr.mxu0 0.0
    %3266 = vmatpush1.msra.mxu0 0.0
    %3267 = vmatprep.subr.mxu0 0.0
    %3268 = vmatpush1.msra.mxu0 0.0
    %3269 = vmatprep.subr.mxu0 0.0
    %3270 = vmatpush1.msra.mxu0 0.0
    %3271 = vmatprep.subr.mxu0 0.0
    %3272 = vmatpush1.msra.mxu0 0.0
    %3273 = vmatprep.subr.mxu0 0.0
    %3274 = vmatpush1.msra.mxu0 0.0
    %3275 = vmatprep.subr.mxu0 0.0
    %3276 = vmatpush1.msra.mxu0 0.0
    %3277 = vmatprep.subr.mxu0 0.0
    %3278 = vmatpush1.msra.mxu0 0.0
    %3279 = vmatprep.subr.mxu0 0.0
    %3280 = vmatpush1.msra.mxu0 0.0
    %3281 = vmatprep.mubr.f32.mxu0 0.0
    %3282 = vmatmul.mubr.f32.gmra.mrb[0].mxu0 %v3215
    %v3283 = vpop.f32.mrb[0].mxu0
    %v3284 = vadd.f32 0.0, %v3283
    %v3285 = vpop.f32.mrb[0].mxu0
    %3286 = vdwg.mxu0
    %v3288 = vrot.slane %v3284, 2
    %3289 = vrot.lane.b32.xlu0 %v3288, 32
    %v3290 = vpop.permute.xlu0 %3289
    %v3292 = vrot.slane %v2896, 2
    %3293 = vrot.lane.b32.xlu0 %v3292, 64
    %v3294 = vpop.permute.xlu0 %3293
    %v3296 = vsel %vm149, %v3133, %v3290
    %v3297 = vsel %vm1065, %v3296, %v3294
    %v3299 = vrot.slane %v3297, 6
    %v3300 = vsel %vm1871, %v3299, 0
    %3302 = vmatprep.subr.mxu0 0.0
    %3303 = vmatpush1.msra.mxu0 %v1446
    %3304 = vmatprep.subr.mxu0 0.0
    %3305 = vmatpush1.msra.mxu0 %v1447
    %3306 = vmatprep.subr.mxu0 0.0
    %3307 = vmatpush1.msra.mxu0 %v1448
    %3308 = vmatprep.subr.mxu0 0.0
    %3309 = vmatpush1.msra.mxu0 %v1449
    %3310 = vmatprep.subr.mxu0 0.0
    %3311 = vmatpush1.msra.mxu0 %v1450
    %3312 = vmatprep.subr.mxu0 0.0
    %3313 = vmatpush1.msra.mxu0 %v1451
    %3314 = vmatprep.subr.mxu0 0.0
    %3315 = vmatpush1.msra.mxu0 %v1452
    %3316 = vmatprep.subr.mxu0 0.0
    %3317 = vmatpush1.msra.mxu0 %v1453
    %3318 = vmatprep.subr.mxu0 0.0
    %3319 = vmatpush1.msra.mxu0 %v1454
    %3320 = vmatprep.subr.mxu0 0.0
    %3321 = vmatpush1.msra.mxu0 %v1455
    %3322 = vmatprep.subr.mxu0 0.0
    %3323 = vmatpush1.msra.mxu0 %v1456
    %3324 = vmatprep.subr.mxu0 0.0
    %3325 = vmatpush1.msra.mxu0 %v1457
    %3326 = vmatprep.subr.mxu0 0.0
    %3327 = vmatpush1.msra.mxu0 0.0
    %3328 = vmatprep.subr.mxu0 0.0
    %3329 = vmatpush1.msra.mxu0 0.0
    %3330 = vmatprep.subr.mxu0 0.0
    %3331 = vmatpush1.msra.mxu0 0.0
    %3332 = vmatprep.subr.mxu0 0.0
    %3333 = vmatpush1.msra.mxu0 0.0
    %3334 = vmatprep.subr.mxu0 0.0
    %3335 = vmatpush1.msra.mxu0 0.0
    %3336 = vmatprep.subr.mxu0 0.0
    %3337 = vmatpush1.msra.mxu0 0.0
    %3338 = vmatprep.subr.mxu0 0.0
    %3339 = vmatpush1.msra.mxu0 0.0
    %3340 = vmatprep.subr.mxu0 0.0
    %3341 = vmatpush1.msra.mxu0 0.0
    %3342 = vmatprep.subr.mxu0 0.0
    %3343 = vmatpush1.msra.mxu0 0.0
    %3344 = vmatprep.subr.mxu0 0.0
    %3345 = vmatpush1.msra.mxu0 0.0
    %3346 = vmatprep.subr.mxu0 0.0
    %3347 = vmatpush1.msra.mxu0 0.0
    %3348 = vmatprep.subr.mxu0 0.0
    %3349 = vmatpush1.msra.mxu0 0.0
    %3350 = vmatprep.subr.mxu0 0.0
    %3351 = vmatpush1.msra.mxu0 0.0
    %3352 = vmatprep.subr.mxu0 0.0
    %3353 = vmatpush1.msra.mxu0 0.0
    %3354 = vmatprep.subr.mxu0 0.0
    %3355 = vmatpush1.msra.mxu0 0.0
    %3356 = vmatprep.subr.mxu0 0.0
    %3357 = vmatpush1.msra.mxu0 0.0
    %3358 = vmatprep.subr.mxu0 0.0
    %3359 = vmatpush1.msra.mxu0 0.0
    %3360 = vmatprep.subr.mxu0 0.0
    %3361 = vmatpush1.msra.mxu0 0.0
    %3362 = vmatprep.subr.mxu0 0.0
    %3363 = vmatpush1.msra.mxu0 0.0
    %3364 = vmatprep.subr.mxu0 0.0
    %3365 = vmatpush1.msra.mxu0 0.0
    %3366 = vmatprep.mubr.f32.mxu0 0.0
    %3367 = vmatmul.mubr.f32.gmra.mrb[0].mxu0 %v3300
    %v3368 = vpop.f32.mrb[0].mxu0
    %v3369 = vadd.f32 %v1870, %v3368
    %v3370 = vpop.f32.mrb[0].mxu0
    %3371 = vdwg.mxu0
    %v3372 = vtanh.pop %v3369
    %v3374 = vrot.slane %v3133, 6
    %v3375 = vsel %vm149, %v3374, 0
    %3377 = vmatprep.subr.mxu0 0.0
    %3378 = vmatpush1.xpose.msra.mxu0 %v1465
    %3379 = vmatprep.subr.mxu0 0.0
    %3380 = vmatpush1.xpose.msra.mxu0 %v1468
    %3381 = vmatprep.subr.mxu0 0.0
    %3382 = vmatpush1.xpose.msra.mxu0 0.0
    %3383 = vmatprep.subr.mxu0 0.0
    %3384 = vmatpush1.xpose.msra.mxu0 0.0
    %3385 = vmatprep.subr.mxu0 0.0
    %3386 = vmatpush1.xpose.msra.mxu0 0.0
    %3387 = vmatprep.subr.mxu0 0.0
    %3388 = vmatpush1.xpose.msra.mxu0 0.0
    %3389 = vmatprep.subr.mxu0 0.0
    %3390 = vmatpush1.xpose.msra.mxu0 0.0
    %3391 = vmatprep.subr.mxu0 0.0
    %3392 = vmatpush1.xpose.msra.mxu0 0.0
    %3393 = vmatprep.subr.mxu0 0.0
    %3394 = vmatpush1.xpose.msra.mxu0 0.0
    %3395 = vmatprep.subr.mxu0 0.0
    %3396 = vmatpush1.xpose.msra.mxu0 0.0
    %3397 = vmatprep.subr.mxu0 0.0
    %3398 = vmatpush1.xpose.msra.mxu0 0.0
    %3399 = vmatprep.subr.mxu0 0.0
    %3400 = vmatpush1.xpose.msra.mxu0 0.0
    %3401 = vmatprep.subr.mxu0 0.0
    %3402 = vmatpush1.xpose.msra.mxu0 0.0
    %3403 = vmatprep.subr.mxu0 0.0
    %3404 = vmatpush1.xpose.msra.mxu0 0.0
    %3405 = vmatprep.subr.mxu0 0.0
    %3406 = vmatpush1.xpose.msra.mxu0 0.0
    %3407 = vmatprep.subr.mxu0 0.0
    %3408 = vmatpush1.xpose.msra.mxu0 0.0
    %3409 = vmatprep.subr.mxu0 0.0
    %3410 = vmatpush1.xpose.msra.mxu0 0.0
    %3411 = vmatprep.subr.mxu0 0.0
    %3412 = vmatpush1.xpose.msra.mxu0 0.0
    %3413 = vmatprep.subr.mxu0 0.0
    %3414 = vmatpush1.xpose.msra.mxu0 0.0
    %3415 = vmatprep.subr.mxu0 0.0
    %3416 = vmatpush1.xpose.msra.mxu0 0.0
    %3417 = vmatprep.subr.mxu0 0.0
    %3418 = vmatpush1.xpose.msra.mxu0 0.0
    %3419 = vmatprep.subr.mxu0 0.0
    %3420 = vmatpush1.xpose.msra.mxu0 0.0
    %3421 = vmatprep.subr.mxu0 0.0
    %3422 = vmatpush1.xpose.msra.mxu0 0.0
    %3423 = vmatprep.subr.mxu0 0.0
    %3424 = vmatpush1.xpose.msra.mxu0 0.0
    %3425 = vmatprep.subr.mxu0 0.0
    %3426 = vmatpush1.xpose.msra.mxu0 0.0
    %3427 = vmatprep.subr.mxu0 0.0
    %3428 = vmatpush1.xpose.msra.mxu0 0.0
    %3429 = vmatprep.subr.mxu0 0.0
    %3430 = vmatpush1.xpose.msra.mxu0 0.0
    %3431 = vmatprep.subr.mxu0 0.0
    %3432 = vmatpush1.xpose.msra.mxu0 0.0
    %3433 = vmatprep.subr.mxu0 0.0
    %3434 = vmatpush1.xpose.msra.mxu0 0.0
    %3435 = vmatprep.subr.mxu0 0.0
    %3436 = vmatpush1.xpose.msra.mxu0 0.0
    %3437 = vmatprep.subr.mxu0 0.0
    %3438 = vmatpush1.xpose.msra.mxu0 0.0
    %3439 = vmatprep.subr.mxu0 0.0
    %3440 = vmatpush1.xpose.msra.mxu0 0.0
    %3441 = vmatprep.mubr.f32.mxu0 0.0
    %3442 = vmatmul.mubr.f32.gmra.mrb[0].mxu0 %v3375
    %v3443 = vpop.f32.mrb[0].mxu0
    %v3444 = vadd.f32 %v1460, %v3443
    %v3445 = vpop.f32.mrb[0].mxu0
    %3446 = vdwg.mxu0
    %v3447 = vmul.f32 %v3444, 1.442695
    %v3448 = vpow.pop %v3447
    %v3449 = vsel %vm1542, %v3448, 0.0
    %3450 = vadd.xlane.f32.xlu0 %v3449
    %v3451 = vpop.xlane.xlu0 %3450
    %v3452 = vrcp.pop %v3451
    %v3453 = vmul.f32 %v3448, %v3452
    %v3455 = vsel %vm895, %v3453, 0
    %3457 = vmatprep.subr.mxu0 0.0
    %3458 = vmatpush1.msra.mxu0 %v881
    %3459 = vmatprep.subr.mxu0 0.0
    %3460 = vmatpush1.msra.mxu0 %v884
    %3461 = vmatprep.subr.mxu0 0.0
    %3462 = vmatpush1.msra.mxu0 0.0
    %3463 = vmatprep.subr.mxu0 0.0
    %3464 = vmatpush1.msra.mxu0 0.0
    %3465 = vmatprep.subr.mxu0 0.0
    %3466 = vmatpush1.msra.mxu0 0.0
    %3467 = vmatprep.subr.mxu0 0.0
    %3468 = vmatpush1.msra.mxu0 0.0
    %3469 = vmatprep.subr.mxu0 0.0
    %3470 = vmatpush1.msra.mxu0 0.0
    %3471 = vmatprep.subr.mxu0 0.0
    %3472 = vmatpush1.msra.mxu0 0.0
    %3473 = vmatprep.subr.mxu0 0.0
    %3474 = vmatpush1.msra.mxu0 0.0
    %3475 = vmatprep.subr.mxu0 0.0
    %3476 = vmatpush1.msra.mxu0 0.0
    %3477 = vmatprep.subr.mxu0 0.0
    %3478 = vmatpush1.msra.mxu0 0.0
    %3479 = vmatprep.subr.mxu0 0.0
    %3480 = vmatpush1.msra.mxu0 0.0
    %3481 = vmatprep.subr.mxu0 0.0
    %3482 = vmatpush1.msra.mxu0 0.0
    %3483 = vmatprep.subr.mxu0 0.0
    %3484 = vmatpush1.msra.mxu0 0.0
    %3485 = vmatprep.subr.mxu0 0.0
    %3486 = vmatpush1.msra.mxu0 0.0
    %3487 = vmatprep.subr.mxu0 0.0
    %3488 = vmatpush1.msra.mxu0 0.0
    %3489 = vmatprep.subr.mxu0 0.0
    %3490 = vmatpush1.msra.mxu0 0.0
    %3491 = vmatprep.subr.mxu0 0.0
    %3492 = vmatpush1.msra.mxu0 0.0
    %3493 = vmatprep.subr.mxu0 0.0
    %3494 = vmatpush1.msra.mxu0 0.0
    %3495 = vmatprep.subr.mxu0 0.0
    %3496 = vmatpush1.msra.mxu0 0.0
    %3497 = vmatprep.subr.mxu0 0.0
    %3498 = vmatpush1.msra.mxu0 0.0
    %3499 = vmatprep.subr.mxu0 0.0
    %3500 = vmatpush1.msra.mxu0 0.0
    %3501 = vmatprep.subr.mxu0 0.0
    %3502 = vmatpush1.msra.mxu0 0.0
    %3503 = vmatprep.subr.mxu0 0.0
    %3504 = vmatpush1.msra.mxu0 0.0
    %3505 = vmatprep.subr.mxu0 0.0
    %3506 = vmatpush1.msra.mxu0 0.0
    %3507 = vmatprep.subr.mxu0 0.0
    %3508 = vmatpush1.msra.mxu0 0.0
    %3509 = vmatprep.subr.mxu0 0.0
    %3510 = vmatpush1.msra.mxu0 0.0
    %3511 = vmatprep.subr.mxu0 0.0
    %3512 = vmatpush1.msra.mxu0 0.0
    %3513 = vmatprep.subr.mxu0 0.0
    %3514 = vmatpush1.msra.mxu0 0.0
    %3515 = vmatprep.subr.mxu0 0.0
    %3516 = vmatpush1.msra.mxu0 0.0
    %3517 = vmatprep.subr.mxu0 0.0
    %3518 = vmatpush1.msra.mxu0 0.0
    %3519 = vmatprep.subr.mxu0 0.0
    %3520 = vmatpush1.msra.mxu0 0.0
    %3521 = vmatprep.mubr.f32.mxu0 0.0
    %3522 = vmatmul.mubr.f32.gmra.mrb[0].mxu0 %v3455
    %v3523 = vpop.f32.mrb[0].mxu0
    %v3524 = vadd.f32 0.0, %v3523
    %v3525 = vpop.f32.mrb[0].mxu0
    %3526 = vdwg.mxu0
    %3527 = vrot.lane.b32.xlu0 %v3374, 32
    %v3528 = vpop.permute.xlu0 %3527
    %v3530 = vsel %vm149, %v3524, %v3528
    %v3532 = vsel %vm1065, %v3530, 0
    %3534 = vmatprep.subr.mxu0 0.0
    %3535 = vmatpush1.msra.mxu0 %v1438
    %3536 = vmatprep.subr.mxu0 0.0
    %3537 = vmatpush1.msra.mxu0 %v1439
    %3538 = vmatprep.subr.mxu0 0.0
    %3539 = vmatpush1.msra.mxu0 %v1440
    %3540 = vmatprep.subr.mxu0 0.0
    %3541 = vmatpush1.msra.mxu0 %v1441
    %3542 = vmatprep.subr.mxu0 0.0
    %3543 = vmatpush1.msra.mxu0 %v1442
    %3544 = vmatprep.subr.mxu0 0.0
    %3545 = vmatpush1.msra.mxu0 %v1443
    %3546 = vmatprep.subr.mxu0 0.0
    %3547 = vmatpush1.msra.mxu0 %v1444
    %3548 = vmatprep.subr.mxu0 0.0
    %3549 = vmatpush1.msra.mxu0 %v1445
    %3550 = vmatprep.subr.mxu0 0.0
    %3551 = vmatpush1.msra.mxu0 0.0
    %3552 = vmatprep.subr.mxu0 0.0
    %3553 = vmatpush1.msra.mxu0 0.0
    %3554 = vmatprep.subr.mxu0 0.0
    %3555 = vmatpush1.msra.mxu0 0.0
    %3556 = vmatprep.subr.mxu0 0.0
    %3557 = vmatpush1.msra.mxu0 0.0
    %3558 = vmatprep.subr.mxu0 0.0
    %3559 = vmatpush1.msra.mxu0 0.0
    %3560 = vmatprep.subr.mxu0 0.0
    %3561 = vmatpush1.msra.mxu0 0.0
    %3562 = vmatprep.subr.mxu0 0.0
    %3563 = vmatpush1.msra.mxu0 0.0
    %3564 = vmatprep.subr.mxu0 0.0
    %3565 = vmatpush1.msra.mxu0 0.0
    %3566 = vmatprep.subr.mxu0 0.0
    %3567 = vmatpush1.msra.mxu0 0.0
    %3568 = vmatprep.subr.mxu0 0.0
    %3569 = vmatpush1.msra.mxu0 0.0
    %3570 = vmatprep.subr.mxu0 0.0
    %3571 = vmatpush1.msra.mxu0 0.0
    %3572 = vmatprep.subr.mxu0 0.0
    %3573 = vmatpush1.msra.mxu0 0.0
    %3574 = vmatprep.subr.mxu0 0.0
    %3575 = vmatpush1.msra.mxu0 0.0
    %3576 = vmatprep.subr.mxu0 0.0
    %3577 = vmatpush1.msra.mxu0 0.0
    %3578 = vmatprep.subr.mxu0 0.0
    %3579 = vmatpush1.msra.mxu0 0.0
    %3580 = vmatprep.subr.mxu0 0.0
    %3581 = vmatpush1.msra.mxu0 0.0
    %3582 = vmatprep.subr.mxu0 0.0
    %3583 = vmatpush1.msra.mxu0 0.0
    %3584 = vmatprep.subr.mxu0 0.0
    %3585 = vmatpush1.msra.mxu0 0.0
    %3586 = vmatprep.subr.mxu0 0.0
    %3587 = vmatpush1.msra.mxu0 0.0
    %3588 = vmatprep.subr.mxu0 0.0
    %3589 = vmatpush1.msra.mxu0 0.0
    %3590 = vmatprep.subr.mxu0 0.0
    %3591 = vmatpush1.msra.mxu0 0.0
    %3592 = vmatprep.subr.mxu0 0.0
    %3593 = vmatpush1.msra.mxu0 0.0
    %3594 = vmatprep.subr.mxu0 0.0
    %3595 = vmatpush1.msra.mxu0 0.0
    %3596 = vmatprep.subr.mxu0 0.0
    %3597 = vmatpush1.msra.mxu0 0.0
    %3598 = vmatprep.mubr.f32.mxu0 0.0
    %3599 = vmatmul.mubr.f32.gmra.mrb[0].mxu0 %v3532
    %v3600 = vpop.f32.mrb[0].mxu0
    %v3601 = vadd.f32 0.0, %v3600
    %v3602 = vpop.f32.mrb[0].mxu0
    %3603 = vdwg.mxu0
    %v3604 = vadd.f32 %v1435, %v3601
    %v3605 = vadd.f32 %v3604, %v1702
    %v3606 = vtanh.pop %v3605
    %v3608 = vsel %vm149, %v3372, 0
    %3610 = vmatprep.subr.mxu0 0.0
    %3611 = vmatpush1.xpose.msra.mxu0 %v1465
    %3612 = vmatprep.subr.mxu0 0.0
    %3613 = vmatpush1.xpose.msra.mxu0 %v1468
    %3614 = vmatprep.subr.mxu0 0.0
    %3615 = vmatpush1.xpose.msra.mxu0 0.0
    %3616 = vmatprep.subr.mxu0 0.0
    %3617 = vmatpush1.xpose.msra.mxu0 0.0
    %3618 = vmatprep.subr.mxu0 0.0
    %3619 = vmatpush1.xpose.msra.mxu0 0.0
    %3620 = vmatprep.subr.mxu0 0.0
    %3621 = vmatpush1.xpose.msra.mxu0 0.0
    %3622 = vmatprep.subr.mxu0 0.0
    %3623 = vmatpush1.xpose.msra.mxu0 0.0
    %3624 = vmatprep.subr.mxu0 0.0
    %3625 = vmatpush1.xpose.msra.mxu0 0.0
    %3626 = vmatprep.subr.mxu0 0.0
    %3627 = vmatpush1.xpose.msra.mxu0 0.0
    %3628 = vmatprep.subr.mxu0 0.0
    %3629 = vmatpush1.xpose.msra.mxu0 0.0
    %3630 = vmatprep.subr.mxu0 0.0
    %3631 = vmatpush1.xpose.msra.mxu0 0.0
    %3632 = vmatprep.subr.mxu0 0.0
    %3633 = vmatpush1.xpose.msra.mxu0 0.0
    %3634 = vmatprep.subr.mxu0 0.0
    %3635 = vmatpush1.xpose.msra.mxu0 0.0
    %3636 = vmatprep.subr.mxu0 0.0
    %3637 = vmatpush1.xpose.msra.mxu0 0.0
    %3638 = vmatprep.subr.mxu0 0.0
    %3639 = vmatpush1.xpose.msra.mxu0 0.0
    %3640 = vmatprep.subr.mxu0 0.0
    %3641 = vmatpush1.xpose.msra.mxu0 0.0
    %3642 = vmatprep.subr.mxu0 0.0
    %3643 = vmatpush1.xpose.msra.mxu0 0.0
    %3644 = vmatprep.subr.mxu0 0.0
    %3645 = vmatpush1.xpose.msra.mxu0 0.0
    %3646 = vmatprep.subr.mxu0 0.0
    %3647 = vmatpush1.xpose.msra.mxu0 0.0
    %3648 = vmatprep.subr.mxu0 0.0
    %3649 = vmatpush1.xpose.msra.mxu0 0.0
    %3650 = vmatprep.subr.mxu0 0.0
    %3651 = vmatpush1.xpose.msra.mxu0 0.0
    %3652 = vmatprep.subr.mxu0 0.0
    %3653 = vmatpush1.xpose.msra.mxu0 0.0
    %3654 = vmatprep.subr.mxu0 0.0
    %3655 = vmatpush1.xpose.msra.mxu0 0.0
    %3656 = vmatprep.subr.mxu0 0.0
    %3657 = vmatpush1.xpose.msra.mxu0 0.0
    %3658 = vmatprep.subr.mxu0 0.0
    %3659 = vmatpush1.xpose.msra.mxu0 0.0
    %3660 = vmatprep.subr.mxu0 0.0
    %3661 = vmatpush1.xpose.msra.mxu0 0.0
    %3662 = vmatprep.subr.mxu0 0.0
    %3663 = vmatpush1.xpose.msra.mxu0 0.0
    %3664 = vmatprep.subr.mxu0 0.0
    %3665 = vmatpush1.xpose.msra.mxu0 0.0
    %3666 = vmatprep.subr.mxu0 0.0
    %3667 = vmatpush1.xpose.msra.mxu0 0.0
    %3668 = vmatprep.subr.mxu0 0.0
    %3669 = vmatpush1.xpose.msra.mxu0 0.0
    %3670 = vmatprep.subr.mxu0 0.0
    %3671 = vmatpush1.xpose.msra.mxu0 0.0
    %3672 = vmatprep.subr.mxu0 0.0
    %3673 = vmatpush1.xpose.msra.mxu0 0.0
    %3674 = vmatprep.mubr.f32.mxu0 0.0
    %3675 = vmatmul.mubr.f32.gmra.mrb[0].mxu0 %v3608
    %v3676 = vpop.f32.mrb[0].mxu0
    %v3677 = vadd.f32 %v1460, %v3676
    %v3678 = vpop.f32.mrb[0].mxu0
    %3679 = vdwg.mxu0
    %v3680 = vmul.f32 %v3677, 1.442695
    %v3681 = vpow.pop %v3680
    %v3682 = vsel %vm1542, %v3681, 0.0
    %3683 = vadd.xlane.f32.xlu0 %v3682
    %v3684 = vpop.xlane.xlu0 %3683
    %v3685 = vrcp.pop %v3684
    %v3686 = vmul.f32 %v3681, %v3685
    %v3688 = vsel %vm895, %v3686, 0
    %3690 = vmatprep.subr.mxu0 0.0
    %3691 = vmatpush1.msra.mxu0 %v881
    %3692 = vmatprep.subr.mxu0 0.0
    %3693 = vmatpush1.msra.mxu0 %v884
    %3694 = vmatprep.subr.mxu0 0.0
    %3695 = vmatpush1.msra.mxu0 0.0
    %3696 = vmatprep.subr.mxu0 0.0
    %3697 = vmatpush1.msra.mxu0 0.0
    %3698 = vmatprep.subr.mxu0 0.0
    %3699 = vmatpush1.msra.mxu0 0.0
    %3700 = vmatprep.subr.mxu0 0.0
    %3701 = vmatpush1.msra.mxu0 0.0
    %3702 = vmatprep.subr.mxu0 0.0
    %3703 = vmatpush1.msra.mxu0 0.0
    %3704 = vmatprep.subr.mxu0 0.0
    %3705 = vmatpush1.msra.mxu0 0.0
    %3706 = vmatprep.subr.mxu0 0.0
    %3707 = vmatpush1.msra.mxu0 0.0
    %3708 = vmatprep.subr.mxu0 0.0
    %3709 = vmatpush1.msra.mxu0 0.0
    %3710 = vmatprep.subr.mxu0 0.0
    %3711 = vmatpush1.msra.mxu0 0.0
    %3712 = vmatprep.subr.mxu0 0.0
    %3713 = vmatpush1.msra.mxu0 0.0
    %3714 = vmatprep.subr.mxu0 0.0
    %3715 = vmatpush1.msra.mxu0 0.0
    %3716 = vmatprep.subr.mxu0 0.0
    %3717 = vmatpush1.msra.mxu0 0.0
    %3718 = vmatprep.subr.mxu0 0.0
    %3719 = vmatpush1.msra.mxu0 0.0
    %3720 = vmatprep.subr.mxu0 0.0
    %3721 = vmatpush1.msra.mxu0 0.0
    %3722 = vmatprep.subr.mxu0 0.0
    %3723 = vmatpush1.msra.mxu0 0.0
    %3724 = vmatprep.subr.mxu0 0.0
    %3725 = vmatpush1.msra.mxu0 0.0
    %3726 = vmatprep.subr.mxu0 0.0
    %3727 = vmatpush1.msra.mxu0 0.0
    %3728 = vmatprep.subr.mxu0 0.0
    %3729 = vmatpush1.msra.mxu0 0.0
    %3730 = vmatprep.subr.mxu0 0.0
    %3731 = vmatpush1.msra.mxu0 0.0
    %3732 = vmatprep.subr.mxu0 0.0
    %3733 = vmatpush1.msra.mxu0 0.0
    %3734 = vmatprep.subr.mxu0 0.0
    %3735 = vmatpush1.msra.mxu0 0.0
    %3736 = vmatprep.subr.mxu0 0.0
    %3737 = vmatpush1.msra.mxu0 0.0
    %3738 = vmatprep.subr.mxu0 0.0
    %3739 = vmatpush1.msra.mxu0 0.0
    %3740 = vmatprep.subr.mxu0 0.0
    %3741 = vmatpush1.msra.mxu0 0.0
    %3742 = vmatprep.subr.mxu0 0.0
    %3743 = vmatpush1.msra.mxu0 0.0
    %3744 = vmatprep.subr.mxu0 0.0
    %3745 = vmatpush1.msra.mxu0 0.0
    %3746 = vmatprep.subr.mxu0 0.0
    %3747 = vmatpush1.msra.mxu0 0.0
    %3748 = vmatprep.subr.mxu0 0.0
    %3749 = vmatpush1.msra.mxu0 0.0
    %3750 = vmatprep.subr.mxu0 0.0
    %3751 = vmatpush1.msra.mxu0 0.0
    %3752 = vmatprep.subr.mxu0 0.0
    %3753 = vmatpush1.msra.mxu0 0.0
    %3754 = vmatprep.mubr.f32.mxu0 0.0
    %3755 = vmatmul.mubr.f32.gmra.mrb[0].mxu0 %v3688
    %v3756 = vpop.f32.mrb[0].mxu0
    %v3757 = vadd.f32 0.0, %v3756
    %v3758 = vpop.f32.mrb[0].mxu0
    %3759 = vdwg.mxu0
    %3761 = vrot.lane.b32.xlu0 %v3757, 32
    %v3762 = vpop.permute.xlu0 %3761
    %3764 = vrot.lane.b32.xlu0 %v3372, 64
    %v3765 = vpop.permute.xlu0 %3764
    %v3767 = vsel %vm149, %v3606, %v3762
    %v3768 = vsel %vm1065, %v3767, %v3765
    %v3770 = vsel %vm1871, %v3768, 0
    %3772 = vmatprep.subr.mxu0 0.0
    %3773 = vmatpush1.msra.mxu0 %v1446
    %3774 = vmatprep.subr.mxu0 0.0
    %3775 = vmatpush1.msra.mxu0 %v1447
    %3776 = vmatprep.subr.mxu0 0.0
    %3777 = vmatpush1.msra.mxu0 %v1448
    %3778 = vmatprep.subr.mxu0 0.0
    %3779 = vmatpush1.msra.mxu0 %v1449
    %3780 = vmatprep.subr.mxu0 0.0
    %3781 = vmatpush1.msra.mxu0 %v1450
    %3782 = vmatprep.subr.mxu0 0.0
    %3783 = vmatpush1.msra.mxu0 %v1451
    %3784 = vmatprep.subr.mxu0 0.0
    %3785 = vmatpush1.msra.mxu0 %v1452
    %3786 = vmatprep.subr.mxu0 0.0
    %3787 = vmatpush1.msra.mxu0 %v1453
    %3788 = vmatprep.subr.mxu0 0.0
    %3789 = vmatpush1.msra.mxu0 %v1454
    %3790 = vmatprep.subr.mxu0 0.0
    %3791 = vmatpush1.msra.mxu0 %v1455
    %3792 = vmatprep.subr.mxu0 0.0
    %3793 = vmatpush1.msra.mxu0 %v1456
    %3794 = vmatprep.subr.mxu0 0.0
    %3795 = vmatpush1.msra.mxu0 %v1457
    %3796 = vmatprep.subr.mxu0 0.0
    %3797 = vmatpush1.msra.mxu0 0.0
    %3798 = vmatprep.subr.mxu0 0.0
    %3799 = vmatpush1.msra.mxu0 0.0
    %3800 = vmatprep.subr.mxu0 0.0
    %3801 = vmatpush1.msra.mxu0 0.0
    %3802 = vmatprep.subr.mxu0 0.0
    %3803 = vmatpush1.msra.mxu0 0.0
    %3804 = vmatprep.subr.mxu0 0.0
    %3805 = vmatpush1.msra.mxu0 0.0
    %3806 = vmatprep.subr.mxu0 0.0
    %3807 = vmatpush1.msra.mxu0 0.0
    %3808 = vmatprep.subr.mxu0 0.0
    %3809 = vmatpush1.msra.mxu0 0.0
    %3810 = vmatprep.subr.mxu0 0.0
    %3811 = vmatpush1.msra.mxu0 0.0
    %3812 = vmatprep.subr.mxu0 0.0
    %3813 = vmatpush1.msra.mxu0 0.0
    %3814 = vmatprep.subr.mxu0 0.0
    %3815 = vmatpush1.msra.mxu0 0.0
    %3816 = vmatprep.subr.mxu0 0.0
    %3817 = vmatpush1.msra.mxu0 0.0
    %3818 = vmatprep.subr.mxu0 0.0
    %3819 = vmatpush1.msra.mxu0 0.0
    %3820 = vmatprep.subr.mxu0 0.0
    %3821 = vmatpush1.msra.mxu0 0.0
    %3822 = vmatprep.subr.mxu0 0.0
    %3823 = vmatpush1.msra.mxu0 0.0
    %3824 = vmatprep.subr.mxu0 0.0
    %3825 = vmatpush1.msra.mxu0 0.0
    %3826 = vmatprep.subr.mxu0 0.0
    %3827 = vmatpush1.msra.mxu0 0.0
    %3828 = vmatprep.subr.mxu0 0.0
    %3829 = vmatpush1.msra.mxu0 0.0
    %3830 = vmatprep.subr.mxu0 0.0
    %3831 = vmatpush1.msra.mxu0 0.0
    %3832 = vmatprep.subr.mxu0 0.0
    %3833 = vmatpush1.msra.mxu0 0.0
    %3834 = vmatprep.subr.mxu0 0.0
    %3835 = vmatpush1.msra.mxu0 0.0
    %3836 = vmatprep.mubr.f32.mxu0 0.0
    %3837 = vmatmul.mubr.f32.gmra.mrb[0].mxu0 %v3770
    %v3838 = vpop.f32.mrb[0].mxu0
    %v3839 = vadd.f32 %v1870, %v3838
    %v3840 = vpop.f32.mrb[0].mxu0
    %3841 = vdwg.mxu0
    %v3842 = vtanh.pop %v3839
    %v3844 = vsel %vm149, %v3606, 0
    %3846 = vmatprep.subr.mxu0 0.0
    %3847 = vmatpush1.xpose.msra.mxu0 %v1465
    %3848 = vmatprep.subr.mxu0 0.0
    %3849 = vmatpush1.xpose.msra.mxu0 %v1468
    %3850 = vmatprep.subr.mxu0 0.0
    %3851 = vmatpush1.xpose.msra.mxu0 0.0
    %3852 = vmatprep.subr.mxu0 0.0
    %3853 = vmatpush1.xpose.msra.mxu0 0.0
    %3854 = vmatprep.subr.mxu0 0.0
    %3855 = vmatpush1.xpose.msra.mxu0 0.0
    %3856 = vmatprep.subr.mxu0 0.0
    %3857 = vmatpush1.xpose.msra.mxu0 0.0
    %3858 = vmatprep.subr.mxu0 0.0
    %3859 = vmatpush1.xpose.msra.mxu0 0.0
    %3860 = vmatprep.subr.mxu0 0.0
    %3861 = vmatpush1.xpose.msra.mxu0 0.0
    %3862 = vmatprep.subr.mxu0 0.0
    %3863 = vmatpush1.xpose.msra.mxu0 0.0
    %3864 = vmatprep.subr.mxu0 0.0
    %3865 = vmatpush1.xpose.msra.mxu0 0.0
    %3866 = vmatprep.subr.mxu0 0.0
    %3867 = vmatpush1.xpose.msra.mxu0 0.0
    %3868 = vmatprep.subr.mxu0 0.0
    %3869 = vmatpush1.xpose.msra.mxu0 0.0
    %3870 = vmatprep.subr.mxu0 0.0
    %3871 = vmatpush1.xpose.msra.mxu0 0.0
    %3872 = vmatprep.subr.mxu0 0.0
    %3873 = vmatpush1.xpose.msra.mxu0 0.0
    %3874 = vmatprep.subr.mxu0 0.0
    %3875 = vmatpush1.xpose.msra.mxu0 0.0
    %3876 = vmatprep.subr.mxu0 0.0
    %3877 = vmatpush1.xpose.msra.mxu0 0.0
    %3878 = vmatprep.subr.mxu0 0.0
    %3879 = vmatpush1.xpose.msra.mxu0 0.0
    %3880 = vmatprep.subr.mxu0 0.0
    %3881 = vmatpush1.xpose.msra.mxu0 0.0
    %3882 = vmatprep.subr.mxu0 0.0
    %3883 = vmatpush1.xpose.msra.mxu0 0.0
    %3884 = vmatprep.subr.mxu0 0.0
    %3885 = vmatpush1.xpose.msra.mxu0 0.0
    %3886 = vmatprep.subr.mxu0 0.0
    %3887 = vmatpush1.xpose.msra.mxu0 0.0
    %3888 = vmatprep.subr.mxu0 0.0
    %3889 = vmatpush1.xpose.msra.mxu0 0.0
    %3890 = vmatprep.subr.mxu0 0.0
    %3891 = vmatpush1.xpose.msra.mxu0 0.0
    %3892 = vmatprep.subr.mxu0 0.0
    %3893 = vmatpush1.xpose.msra.mxu0 0.0
    %3894 = vmatprep.subr.mxu0 0.0
    %3895 = vmatpush1.xpose.msra.mxu0 0.0
    %3896 = vmatprep.subr.mxu0 0.0
    %3897 = vmatpush1.xpose.msra.mxu0 0.0
    %3898 = vmatprep.subr.mxu0 0.0
    %3899 = vmatpush1.xpose.msra.mxu0 0.0
    %3900 = vmatprep.subr.mxu0 0.0
    %3901 = vmatpush1.xpose.msra.mxu0 0.0
    %3902 = vmatprep.subr.mxu0 0.0
    %3903 = vmatpush1.xpose.msra.mxu0 0.0
    %3904 = vmatprep.subr.mxu0 0.0
    %3905 = vmatpush1.xpose.msra.mxu0 0.0
    %3906 = vmatprep.subr.mxu0 0.0
    %3907 = vmatpush1.xpose.msra.mxu0 0.0
    %3908 = vmatprep.subr.mxu0 0.0
    %3909 = vmatpush1.xpose.msra.mxu0 0.0
    %3910 = vmatprep.mubr.f32.mxu0 0.0
    %3911 = vmatmul.mubr.f32.gmra.mrb[0].mxu0 %v3844
    %v3912 = vpop.f32.mrb[0].mxu0
    %v3913 = vadd.f32 %v1460, %v3912
    %v3914 = vpop.f32.mrb[0].mxu0
    %3915 = vdwg.mxu0
    %v3916 = vmul.f32 %v3913, 1.442695
    %v3917 = vpow.pop %v3916
    %v3918 = vsel %vm1542, %v3917, 0.0
    %3919 = vadd.xlane.f32.xlu0 %v3918
    %v3920 = vpop.xlane.xlu0 %3919
    %v3921 = vrcp.pop %v3920
    %v3922 = vmul.f32 %v3917, %v3921
    %v3924 = vsel %vm895, %v3922, 0
    %3926 = vmatprep.subr.mxu0 0.0
    %3927 = vmatpush1.msra.mxu0 %v881
    %3928 = vmatprep.subr.mxu0 0.0
    %3929 = vmatpush1.msra.mxu0 %v884
    %3930 = vmatprep.subr.mxu0 0.0
    %3931 = vmatpush1.msra.mxu0 0.0
    %3932 = vmatprep.subr.mxu0 0.0
    %3933 = vmatpush1.msra.mxu0 0.0
    %3934 = vmatprep.subr.mxu0 0.0
    %3935 = vmatpush1.msra.mxu0 0.0
    %3936 = vmatprep.subr.mxu0 0.0
    %3937 = vmatpush1.msra.mxu0 0.0
    %3938 = vmatprep.subr.mxu0 0.0
    %3939 = vmatpush1.msra.mxu0 0.0
    %3940 = vmatprep.subr.mxu0 0.0
    %3941 = vmatpush1.msra.mxu0 0.0
    %3942 = vmatprep.subr.mxu0 0.0
    %3943 = vmatpush1.msra.mxu0 0.0
    %3944 = vmatprep.subr.mxu0 0.0
    %3945 = vmatpush1.msra.mxu0 0.0
    %3946 = vmatprep.subr.mxu0 0.0
    %3947 = vmatpush1.msra.mxu0 0.0
    %3948 = vmatprep.subr.mxu0 0.0
    %3949 = vmatpush1.msra.mxu0 0.0
    %3950 = vmatprep.subr.mxu0 0.0
    %3951 = vmatpush1.msra.mxu0 0.0
    %3952 = vmatprep.subr.mxu0 0.0
    %3953 = vmatpush1.msra.mxu0 0.0
    %3954 = vmatprep.subr.mxu0 0.0
    %3955 = vmatpush1.msra.mxu0 0.0
    %3956 = vmatprep.subr.mxu0 0.0
    %3957 = vmatpush1.msra.mxu0 0.0
    %3958 = vmatprep.subr.mxu0 0.0
    %3959 = vmatpush1.msra.mxu0 0.0
    %3960 = vmatprep.subr.mxu0 0.0
    %3961 = vmatpush1.msra.mxu0 0.0
    %3962 = vmatprep.subr.mxu0 0.0
    %3963 = vmatpush1.msra.mxu0 0.0
    %3964 = vmatprep.subr.mxu0 0.0
    %3965 = vmatpush1.msra.mxu0 0.0
    %3966 = vmatprep.subr.mxu0 0.0
    %3967 = vmatpush1.msra.mxu0 0.0
    %3968 = vmatprep.subr.mxu0 0.0
    %3969 = vmatpush1.msra.mxu0 0.0
    %3970 = vmatprep.subr.mxu0 0.0
    %3971 = vmatpush1.msra.mxu0 0.0
    %3972 = vmatprep.subr.mxu0 0.0
    %3973 = vmatpush1.msra.mxu0 0.0
    %3974 = vmatprep.subr.mxu0 0.0
    %3975 = vmatpush1.msra.mxu0 0.0
    %3976 = vmatprep.subr.mxu0 0.0
    %3977 = vmatpush1.msra.mxu0 0.0
    %3978 = vmatprep.subr.mxu0 0.0
    %3979 = vmatpush1.msra.mxu0 0.0
    %3980 = vmatprep.subr.mxu0 0.0
    %3981 = vmatpush1.msra.mxu0 0.0
    %3982 = vmatprep.subr.mxu0 0.0
    %3983 = vmatpush1.msra.mxu0 0.0
    %3984 = vmatprep.subr.mxu0 0.0
    %3985 = vmatpush1.msra.mxu0 0.0
    %3986 = vmatprep.subr.mxu0 0.0
    %3987 = vmatpush1.msra.mxu0 0.0
    %3988 = vmatprep.subr.mxu0 0.0
    %3989 = vmatpush1.msra.mxu0 0.0
    %3990 = vmatprep.mubr.f32.mxu0 0.0
    %3991 = vmatmul.mubr.f32.gmra.mrb[0].mxu0 %v3924
    %v3992 = vpop.f32.mrb[0].mxu0
    %v3993 = vadd.f32 0.0, %v3992
    %v3994 = vpop.f32.mrb[0].mxu0
    %3995 = vdwg.mxu0
    %3996 = vrot.lane.b32.xlu0 %v3606, 32
    %v3997 = vpop.permute.xlu0 %3996
    %v3999 = vsel %vm149, %v3993, %v3997
    %v4001 = vsel %vm1065, %v3999, 0
    %4003 = vmatprep.subr.mxu0 0.0
    %4004 = vmatpush1.msra.mxu0 %v1438
    %4005 = vmatprep.subr.mxu0 0.0
    %4006 = vmatpush1.msra.mxu0 %v1439
    %4007 = vmatprep.subr.mxu0 0.0
    %4008 = vmatpush1.msra.mxu0 %v1440
    %4009 = vmatprep.subr.mxu0 0.0
    %4010 = vmatpush1.msra.mxu0 %v1441
    %4011 = vmatprep.subr.mxu0 0.0
    %4012 = vmatpush1.msra.mxu0 %v1442
    %4013 = vmatprep.subr.mxu0 0.0
    %4014 = vmatpush1.msra.mxu0 %v1443
    %4015 = vmatprep.subr.mxu0 0.0
    %4016 = vmatpush1.msra.mxu0 %v1444
    %4017 = vmatprep.subr.mxu0 0.0
    %4018 = vmatpush1.msra.mxu0 %v1445
    %4019 = vmatprep.subr.mxu0 0.0
    %4020 = vmatpush1.msra.mxu0 0.0
    %4021 = vmatprep.subr.mxu0 0.0
    %4022 = vmatpush1.msra.mxu0 0.0
    %4023 = vmatprep.subr.mxu0 0.0
    %4024 = vmatpush1.msra.mxu0 0.0
    %4025 = vmatprep.subr.mxu0 0.0
    %4026 = vmatpush1.msra.mxu0 0.0
    %4027 = vmatprep.subr.mxu0 0.0
    %4028 = vmatpush1.msra.mxu0 0.0
    %4029 = vmatprep.subr.mxu0 0.0
    %4030 = vmatpush1.msra.mxu0 0.0
    %4031 = vmatprep.subr.mxu0 0.0
    %4032 = vmatpush1.msra.mxu0 0.0
    %4033 = vmatprep.subr.mxu0 0.0
    %4034 = vmatpush1.msra.mxu0 0.0
    %4035 = vmatprep.subr.mxu0 0.0
    %4036 = vmatpush1.msra.mxu0 0.0
    %4037 = vmatprep.subr.mxu0 0.0
    %4038 = vmatpush1.msra.mxu0 0.0
    %4039 = vmatprep.subr.mxu0 0.0
    %4040 = vmatpush1.msra.mxu0 0.0
    %4041 = vmatprep.subr.mxu0 0.0
    %4042 = vmatpush1.msra.mxu0 0.0
    %4043 = vmatprep.subr.mxu0 0.0
    %4044 = vmatpush1.msra.mxu0 0.0
    %4045 = vmatprep.subr.mxu0 0.0
    %4046 = vmatpush1.msra.mxu0 0.0
    %4047 = vmatprep.subr.mxu0 0.0
    %4048 = vmatpush1.msra.mxu0 0.0
    %4049 = vmatprep.subr.mxu0 0.0
    %4050 = vmatpush1.msra.mxu0 0.0
    %4051 = vmatprep.subr.mxu0 0.0
    %4052 = vmatpush1.msra.mxu0 0.0
    %4053 = vmatprep.subr.mxu0 0.0
    %4054 = vmatpush1.msra.mxu0 0.0
    %4055 = vmatprep.subr.mxu0 0.0
    %4056 = vmatpush1.msra.mxu0 0.0
    %4057 = vmatprep.subr.mxu0 0.0
    %4058 = vmatpush1.msra.mxu0 0.0
    %4059 = vmatprep.subr.mxu0 0.0
    %4060 = vmatpush1.msra.mxu0 0.0
    %4061 = vmatprep.subr.mxu0 0.0
    %4062 = vmatpush1.msra.mxu0 0.0
    %4063 = vmatprep.subr.mxu0 0.0
    %4064 = vmatpush1.msra.mxu0 0.0
    %4065 = vmatprep.subr.mxu0 0.0
    %4066 = vmatpush1.msra.mxu0 0.0
    %4067 = vmatprep.mubr.f32.mxu0 0.0
    %4068 = vmatmul.mubr.f32.gmra.mrb[0].mxu0 %v4001
    %v4069 = vpop.f32.mrb[0].mxu0
    %v4070 = vadd.f32 0.0, %v4069
    %v4071 = vpop.f32.mrb[0].mxu0
    %4072 = vdwg.mxu0
    %v4074 = vrot.slane %v4070, 6
    %v4076 = vadd.f32 %v1435, %v4074
    %v4077 = vadd.f32 %v4076, %v1702
    %v4078 = vtanh.pop %v4077
    %v4080 = vsel %vm149, %v3842, 0
    %4082 = vmatprep.subr.mxu0 0.0
    %4083 = vmatpush1.xpose.msra.mxu0 %v1465
    %4084 = vmatprep.subr.mxu0 0.0
    %4085 = vmatpush1.xpose.msra.mxu0 %v1468
    %4086 = vmatprep.subr.mxu0 0.0
    %4087 = vmatpush1.xpose.msra.mxu0 0.0
    %4088 = vmatprep.subr.mxu0 0.0
    %4089 = vmatpush1.xpose.msra.mxu0 0.0
    %4090 = vmatprep.subr.mxu0 0.0
    %4091 = vmatpush1.xpose.msra.mxu0 0.0
    %4092 = vmatprep.subr.mxu0 0.0
    %4093 = vmatpush1.xpose.msra.mxu0 0.0
    %4094 = vmatprep.subr.mxu0 0.0
    %4095 = vmatpush1.xpose.msra.mxu0 0.0
    %4096 = vmatprep.subr.mxu0 0.0
    %4097 = vmatpush1.xpose.msra.mxu0 0.0
    %4098 = vmatprep.subr.mxu0 0.0
    %4099 = vmatpush1.xpose.msra.mxu0 0.0
    %4100 = vmatprep.subr.mxu0 0.0
    %4101 = vmatpush1.xpose.msra.mxu0 0.0
    %4102 = vmatprep.subr.mxu0 0.0
    %4103 = vmatpush1.xpose.msra.mxu0 0.0
    %4104 = vmatprep.subr.mxu0 0.0
    %4105 = vmatpush1.xpose.msra.mxu0 0.0
    %4106 = vmatprep.subr.mxu0 0.0
    %4107 = vmatpush1.xpose.msra.mxu0 0.0
    %4108 = vmatprep.subr.mxu0 0.0
    %4109 = vmatpush1.xpose.msra.mxu0 0.0
    %4110 = vmatprep.subr.mxu0 0.0
    %4111 = vmatpush1.xpose.msra.mxu0 0.0
    %4112 = vmatprep.subr.mxu0 0.0
    %4113 = vmatpush1.xpose.msra.mxu0 0.0
    %4114 = vmatprep.subr.mxu0 0.0
    %4115 = vmatpush1.xpose.msra.mxu0 0.0
    %4116 = vmatprep.subr.mxu0 0.0
    %4117 = vmatpush1.xpose.msra.mxu0 0.0
    %4118 = vmatprep.subr.mxu0 0.0
    %4119 = vmatpush1.xpose.msra.mxu0 0.0
    %4120 = vmatprep.subr.mxu0 0.0
    %4121 = vmatpush1.xpose.msra.mxu0 0.0
    %4122 = vmatprep.subr.mxu0 0.0
    %4123 = vmatpush1.xpose.msra.mxu0 0.0
    %4124 = vmatprep.subr.mxu0 0.0
    %4125 = vmatpush1.xpose.msra.mxu0 0.0
    %4126 = vmatprep.subr.mxu0 0.0
    %4127 = vmatpush1.xpose.msra.mxu0 0.0
    %4128 = vmatprep.subr.mxu0 0.0
    %4129 = vmatpush1.xpose.msra.mxu0 0.0
    %4130 = vmatprep.subr.mxu0 0.0
    %4131 = vmatpush1.xpose.msra.mxu0 0.0
    %4132 = vmatprep.subr.mxu0 0.0
    %4133 = vmatpush1.xpose.msra.mxu0 0.0
    %4134 = vmatprep.subr.mxu0 0.0
    %4135 = vmatpush1.xpose.msra.mxu0 0.0
    %4136 = vmatprep.subr.mxu0 0.0
    %4137 = vmatpush1.xpose.msra.mxu0 0.0
    %4138 = vmatprep.subr.mxu0 0.0
    %4139 = vmatpush1.xpose.msra.mxu0 0.0
    %4140 = vmatprep.subr.mxu0 0.0
    %4141 = vmatpush1.xpose.msra.mxu0 0.0
    %4142 = vmatprep.subr.mxu0 0.0
    %4143 = vmatpush1.xpose.msra.mxu0 0.0
    %4144 = vmatprep.subr.mxu0 0.0
    %4145 = vmatpush1.xpose.msra.mxu0 0.0
    %4146 = vmatprep.mubr.f32.mxu0 0.0
    %4147 = vmatmul.mubr.f32.gmra.mrb[0].mxu0 %v4080
    %v4148 = vpop.f32.mrb[0].mxu0
    %v4149 = vadd.f32 %v1460, %v4148
    %v4150 = vpop.f32.mrb[0].mxu0
    %4151 = vdwg.mxu0
    %v4152 = vmul.f32 %v4149, 1.442695
    %v4153 = vpow.pop %v4152
    %v4154 = vsel %vm1542, %v4153, 0.0
    %4155 = vadd.xlane.f32.xlu0 %v4154
    %v4156 = vpop.xlane.xlu0 %4155
    %v4157 = vrcp.pop %v4156
    %v4158 = vmul.f32 %v4153, %v4157
    %v4160 = vsel %vm895, %v4158, 0
    %4162 = vmatprep.subr.mxu0 0.0
    %4163 = vmatpush1.msra.mxu0 %v881
    %4164 = vmatprep.subr.mxu0 0.0
    %4165 = vmatpush1.msra.mxu0 %v884
    %4166 = vmatprep.subr.mxu0 0.0
    %4167 = vmatpush1.msra.mxu0 0.0
    %4168 = vmatprep.subr.mxu0 0.0
    %4169 = vmatpush1.msra.mxu0 0.0
    %4170 = vmatprep.subr.mxu0 0.0
    %4171 = vmatpush1.msra.mxu0 0.0
    %4172 = vmatprep.subr.mxu0 0.0
    %4173 = vmatpush1.msra.mxu0 0.0
    %4174 = vmatprep.subr.mxu0 0.0
    %4175 = vmatpush1.msra.mxu0 0.0
    %4176 = vmatprep.subr.mxu0 0.0
    %4177 = vmatpush1.msra.mxu0 0.0
    %4178 = vmatprep.subr.mxu0 0.0
    %4179 = vmatpush1.msra.mxu0 0.0
    %4180 = vmatprep.subr.mxu0 0.0
    %4181 = vmatpush1.msra.mxu0 0.0
    %4182 = vmatprep.subr.mxu0 0.0
    %4183 = vmatpush1.msra.mxu0 0.0
    %4184 = vmatprep.subr.mxu0 0.0
    %4185 = vmatpush1.msra.mxu0 0.0
    %4186 = vmatprep.subr.mxu0 0.0
    %4187 = vmatpush1.msra.mxu0 0.0
    %4188 = vmatprep.subr.mxu0 0.0
    %4189 = vmatpush1.msra.mxu0 0.0
    %4190 = vmatprep.subr.mxu0 0.0
    %4191 = vmatpush1.msra.mxu0 0.0
    %4192 = vmatprep.subr.mxu0 0.0
    %4193 = vmatpush1.msra.mxu0 0.0
    %4194 = vmatprep.subr.mxu0 0.0
    %4195 = vmatpush1.msra.mxu0 0.0
    %4196 = vmatprep.subr.mxu0 0.0
    %4197 = vmatpush1.msra.mxu0 0.0
    %4198 = vmatprep.subr.mxu0 0.0
    %4199 = vmatpush1.msra.mxu0 0.0
    %4200 = vmatprep.subr.mxu0 0.0
    %4201 = vmatpush1.msra.mxu0 0.0
    %4202 = vmatprep.subr.mxu0 0.0
    %4203 = vmatpush1.msra.mxu0 0.0
    %4204 = vmatprep.subr.mxu0 0.0
    %4205 = vmatpush1.msra.mxu0 0.0
    %4206 = vmatprep.subr.mxu0 0.0
    %4207 = vmatpush1.msra.mxu0 0.0
    %4208 = vmatprep.subr.mxu0 0.0
    %4209 = vmatpush1.msra.mxu0 0.0
    %4210 = vmatprep.subr.mxu0 0.0
    %4211 = vmatpush1.msra.mxu0 0.0
    %4212 = vmatprep.subr.mxu0 0.0
    %4213 = vmatpush1.msra.mxu0 0.0
    %4214 = vmatprep.subr.mxu0 0.0
    %4215 = vmatpush1.msra.mxu0 0.0
    %4216 = vmatprep.subr.mxu0 0.0
    %4217 = vmatpush1.msra.mxu0 0.0
    %4218 = vmatprep.subr.mxu0 0.0
    %4219 = vmatpush1.msra.mxu0 0.0
    %4220 = vmatprep.subr.mxu0 0.0
    %4221 = vmatpush1.msra.mxu0 0.0
    %4222 = vmatprep.subr.mxu0 0.0
    %4223 = vmatpush1.msra.mxu0 0.0
    %4224 = vmatprep.subr.mxu0 0.0
    %4225 = vmatpush1.msra.mxu0 0.0
    %4226 = vmatprep.mubr.f32.mxu0 0.0
    %4227 = vmatmul.mubr.f32.gmra.mrb[0].mxu0 %v4160
    %v4228 = vpop.f32.mrb[0].mxu0
    %v4229 = vadd.f32 0.0, %v4228
    %v4230 = vpop.f32.mrb[0].mxu0
    %4231 = vdwg.mxu0
    %v4233 = vrot.slane %v4229, 6
    %4234 = vrot.lane.b32.xlu0 %v4233, 32
    %v4235 = vpop.permute.xlu0 %4234
    %v4237 = vrot.slane %v3842, 6
    %4238 = vrot.lane.b32.xlu0 %v4237, 64
    %v4239 = vpop.permute.xlu0 %4238
    %v4241 = vsel %vm149, %v4078, %v4235
    %v4242 = vsel %vm1065, %v4241, %v4239
    %v4244 = vrot.slane %v4242, 2
    %v4245 = vsel %vm1871, %v4244, 0
    %4247 = vmatprep.subr.mxu0 0.0
    %4248 = vmatpush1.msra.mxu0 %v1446
    %4249 = vmatprep.subr.mxu0 0.0
    %4250 = vmatpush1.msra.mxu0 %v1447
    %4251 = vmatprep.subr.mxu0 0.0
    %4252 = vmatpush1.msra.mxu0 %v1448
    %4253 = vmatprep.subr.mxu0 0.0
    %4254 = vmatpush1.msra.mxu0 %v1449
    %4255 = vmatprep.subr.mxu0 0.0
    %4256 = vmatpush1.msra.mxu0 %v1450
    %4257 = vmatprep.subr.mxu0 0.0
    %4258 = vmatpush1.msra.mxu0 %v1451
    %4259 = vmatprep.subr.mxu0 0.0
    %4260 = vmatpush1.msra.mxu0 %v1452
    %4261 = vmatprep.subr.mxu0 0.0
    %4262 = vmatpush1.msra.mxu0 %v1453
    %4263 = vmatprep.subr.mxu0 0.0
    %4264 = vmatpush1.msra.mxu0 %v1454
    %4265 = vmatprep.subr.mxu0 0.0
    %4266 = vmatpush1.msra.mxu0 %v1455
    %4267 = vmatprep.subr.mxu0 0.0
    %4268 = vmatpush1.msra.mxu0 %v1456
    %4269 = vmatprep.subr.mxu0 0.0
    %4270 = vmatpush1.msra.mxu0 %v1457
    %4271 = vmatprep.subr.mxu0 0.0
    %4272 = vmatpush1.msra.mxu0 0.0
    %4273 = vmatprep.subr.mxu0 0.0
    %4274 = vmatpush1.msra.mxu0 0.0
    %4275 = vmatprep.subr.mxu0 0.0
    %4276 = vmatpush1.msra.mxu0 0.0
    %4277 = vmatprep.subr.mxu0 0.0
    %4278 = vmatpush1.msra.mxu0 0.0
    %4279 = vmatprep.subr.mxu0 0.0
    %4280 = vmatpush1.msra.mxu0 0.0
    %4281 = vmatprep.subr.mxu0 0.0
    %4282 = vmatpush1.msra.mxu0 0.0
    %4283 = vmatprep.subr.mxu0 0.0
    %4284 = vmatpush1.msra.mxu0 0.0
    %4285 = vmatprep.subr.mxu0 0.0
    %4286 = vmatpush1.msra.mxu0 0.0
    %4287 = vmatprep.subr.mxu0 0.0
    %4288 = vmatpush1.msra.mxu0 0.0
    %4289 = vmatprep.subr.mxu0 0.0
    %4290 = vmatpush1.msra.mxu0 0.0
    %4291 = vmatprep.subr.mxu0 0.0
    %4292 = vmatpush1.msra.mxu0 0.0
    %4293 = vmatprep.subr.mxu0 0.0
    %4294 = vmatpush1.msra.mxu0 0.0
    %4295 = vmatprep.subr.mxu0 0.0
    %4296 = vmatpush1.msra.mxu0 0.0
    %4297 = vmatprep.subr.mxu0 0.0
    %4298 = vmatpush1.msra.mxu0 0.0
    %4299 = vmatprep.subr.mxu0 0.0
    %4300 = vmatpush1.msra.mxu0 0.0
    %4301 = vmatprep.subr.mxu0 0.0
    %4302 = vmatpush1.msra.mxu0 0.0
    %4303 = vmatprep.subr.mxu0 0.0
    %4304 = vmatpush1.msra.mxu0 0.0
    %4305 = vmatprep.subr.mxu0 0.0
    %4306 = vmatpush1.msra.mxu0 0.0
    %4307 = vmatprep.subr.mxu0 0.0
    %4308 = vmatpush1.msra.mxu0 0.0
    %4309 = vmatprep.subr.mxu0 0.0
    %4310 = vmatpush1.msra.mxu0 0.0
    %4311 = vmatprep.mubr.f32.mxu0 0.0
    %4312 = vmatmul.mubr.f32.gmra.mrb[0].mxu0 %v4245
    %v4313 = vpop.f32.mrb[0].mxu0
    %v4314 = vadd.f32 %v1870, %v4313
    %v4315 = vpop.f32.mrb[0].mxu0
    %4316 = vdwg.mxu0
    %v4317 = vtanh.pop %v4314
    %v4319 = vrot.slane %v4078, 2
    %v4320 = vsel %vm149, %v4319, 0
    %4322 = vmatprep.subr.mxu0 0.0
    %4323 = vmatpush1.xpose.msra.mxu0 %v1465
    %4324 = vmatprep.subr.mxu0 0.0
    %4325 = vmatpush1.xpose.msra.mxu0 %v1468
    %4326 = vmatprep.subr.mxu0 0.0
    %4327 = vmatpush1.xpose.msra.mxu0 0.0
    %4328 = vmatprep.subr.mxu0 0.0
    %4329 = vmatpush1.xpose.msra.mxu0 0.0
    %4330 = vmatprep.subr.mxu0 0.0
    %4331 = vmatpush1.xpose.msra.mxu0 0.0
    %4332 = vmatprep.subr.mxu0 0.0
    %4333 = vmatpush1.xpose.msra.mxu0 0.0
    %4334 = vmatprep.subr.mxu0 0.0
    %4335 = vmatpush1.xpose.msra.mxu0 0.0
    %4336 = vmatprep.subr.mxu0 0.0
    %4337 = vmatpush1.xpose.msra.mxu0 0.0
    %4338 = vmatprep.subr.mxu0 0.0
    %4339 = vmatpush1.xpose.msra.mxu0 0.0
    %4340 = vmatprep.subr.mxu0 0.0
    %4341 = vmatpush1.xpose.msra.mxu0 0.0
    %4342 = vmatprep.subr.mxu0 0.0
    %4343 = vmatpush1.xpose.msra.mxu0 0.0
    %4344 = vmatprep.subr.mxu0 0.0
    %4345 = vmatpush1.xpose.msra.mxu0 0.0
    %4346 = vmatprep.subr.mxu0 0.0
    %4347 = vmatpush1.xpose.msra.mxu0 0.0
    %4348 = vmatprep.subr.mxu0 0.0
    %4349 = vmatpush1.xpose.msra.mxu0 0.0
    %4350 = vmatprep.subr.mxu0 0.0
    %4351 = vmatpush1.xpose.msra.mxu0 0.0
    %4352 = vmatprep.subr.mxu0 0.0
    %4353 = vmatpush1.xpose.msra.mxu0 0.0
    %4354 = vmatprep.subr.mxu0 0.0
    %4355 = vmatpush1.xpose.msra.mxu0 0.0
    %4356 = vmatprep.subr.mxu0 0.0
    %4357 = vmatpush1.xpose.msra.mxu0 0.0
    %4358 = vmatprep.subr.mxu0 0.0
    %4359 = vmatpush1.xpose.msra.mxu0 0.0
    %4360 = vmatprep.subr.mxu0 0.0
    %4361 = vmatpush1.xpose.msra.mxu0 0.0
    %4362 = vmatprep.subr.mxu0 0.0
    %4363 = vmatpush1.xpose.msra.mxu0 0.0
    %4364 = vmatprep.subr.mxu0 0.0
    %4365 = vmatpush1.xpose.msra.mxu0 0.0
    %4366 = vmatprep.subr.mxu0 0.0
    %4367 = vmatpush1.xpose.msra.mxu0 0.0
    %4368 = vmatprep.subr.mxu0 0.0
    %4369 = vmatpush1.xpose.msra.mxu0 0.0
    %4370 = vmatprep.subr.mxu0 0.0
    %4371 = vmatpush1.xpose.msra.mxu0 0.0
    %4372 = vmatprep.subr.mxu0 0.0
    %4373 = vmatpush1.xpose.msra.mxu0 0.0
    %4374 = vmatprep.subr.mxu0 0.0
    %4375 = vmatpush1.xpose.msra.mxu0 0.0
    %4376 = vmatprep.subr.mxu0 0.0
    %4377 = vmatpush1.xpose.msra.mxu0 0.0
    %4378 = vmatprep.subr.mxu0 0.0
    %4379 = vmatpush1.xpose.msra.mxu0 0.0
    %4380 = vmatprep.subr.mxu0 0.0
    %4381 = vmatpush1.xpose.msra.mxu0 0.0
    %4382 = vmatprep.subr.mxu0 0.0
    %4383 = vmatpush1.xpose.msra.mxu0 0.0
    %4384 = vmatprep.subr.mxu0 0.0
    %4385 = vmatpush1.xpose.msra.mxu0 0.0
    %4386 = vmatprep.mubr.f32.mxu0 0.0
    %4387 = vmatmul.mubr.f32.gmra.mrb[0].mxu0 %v4320
    %v4388 = vpop.f32.mrb[0].mxu0
    %v4389 = vadd.f32 %v1460, %v4388
    %v4390 = vpop.f32.mrb[0].mxu0
    %4391 = vdwg.mxu0
    %v4392 = vmul.f32 %v4389, 1.442695
    %v4393 = vpow.pop %v4392
    %v4394 = vsel %vm1542, %v4393, 0.0
    %4395 = vadd.xlane.f32.xlu0 %v4394
    %v4396 = vpop.xlane.xlu0 %4395
    %v4397 = vrcp.pop %v4396
    %v4398 = vmul.f32 %v4393, %v4397
    %v4400 = vsel %vm895, %v4398, 0
    %4402 = vmatprep.subr.mxu0 0.0
    %4403 = vmatpush1.msra.mxu0 %v881
    %4404 = vmatprep.subr.mxu0 0.0
    %4405 = vmatpush1.msra.mxu0 %v884
    %4406 = vmatprep.subr.mxu0 0.0
    %4407 = vmatpush1.msra.mxu0 0.0
    %4408 = vmatprep.subr.mxu0 0.0
    %4409 = vmatpush1.msra.mxu0 0.0
    %4410 = vmatprep.subr.mxu0 0.0
    %4411 = vmatpush1.msra.mxu0 0.0
    %4412 = vmatprep.subr.mxu0 0.0
    %4413 = vmatpush1.msra.mxu0 0.0
    %4414 = vmatprep.subr.mxu0 0.0
    %4415 = vmatpush1.msra.mxu0 0.0
    %4416 = vmatprep.subr.mxu0 0.0
    %4417 = vmatpush1.msra.mxu0 0.0
    %4418 = vmatprep.subr.mxu0 0.0
    %4419 = vmatpush1.msra.mxu0 0.0
    %4420 = vmatprep.subr.mxu0 0.0
    %4421 = vmatpush1.msra.mxu0 0.0
    %4422 = vmatprep.subr.mxu0 0.0
    %4423 = vmatpush1.msra.mxu0 0.0
    %4424 = vmatprep.subr.mxu0 0.0
    %4425 = vmatpush1.msra.mxu0 0.0
    %4426 = vmatprep.subr.mxu0 0.0
    %4427 = vmatpush1.msra.mxu0 0.0
    %4428 = vmatprep.subr.mxu0 0.0
    %4429 = vmatpush1.msra.mxu0 0.0
    %4430 = vmatprep.subr.mxu0 0.0
    %4431 = vmatpush1.msra.mxu0 0.0
    %4432 = vmatprep.subr.mxu0 0.0
    %4433 = vmatpush1.msra.mxu0 0.0
    %4434 = vmatprep.subr.mxu0 0.0
    %4435 = vmatpush1.msra.mxu0 0.0
    %4436 = vmatprep.subr.mxu0 0.0
    %4437 = vmatpush1.msra.mxu0 0.0
    %4438 = vmatprep.subr.mxu0 0.0
    %4439 = vmatpush1.msra.mxu0 0.0
    %4440 = vmatprep.subr.mxu0 0.0
    %4441 = vmatpush1.msra.mxu0 0.0
    %4442 = vmatprep.subr.mxu0 0.0
    %4443 = vmatpush1.msra.mxu0 0.0
    %4444 = vmatprep.subr.mxu0 0.0
    %4445 = vmatpush1.msra.mxu0 0.0
    %4446 = vmatprep.subr.mxu0 0.0
    %4447 = vmatpush1.msra.mxu0 0.0
    %4448 = vmatprep.subr.mxu0 0.0
    %4449 = vmatpush1.msra.mxu0 0.0
    %4450 = vmatprep.subr.mxu0 0.0
    %4451 = vmatpush1.msra.mxu0 0.0
    %4452 = vmatprep.subr.mxu0 0.0
    %4453 = vmatpush1.msra.mxu0 0.0
    %4454 = vmatprep.subr.mxu0 0.0
    %4455 = vmatpush1.msra.mxu0 0.0
    %4456 = vmatprep.subr.mxu0 0.0
    %4457 = vmatpush1.msra.mxu0 0.0
    %4458 = vmatprep.subr.mxu0 0.0
    %4459 = vmatpush1.msra.mxu0 0.0
    %4460 = vmatprep.subr.mxu0 0.0
    %4461 = vmatpush1.msra.mxu0 0.0
    %4462 = vmatprep.subr.mxu0 0.0
    %4463 = vmatpush1.msra.mxu0 0.0
    %4464 = vmatprep.subr.mxu0 0.0
    %4465 = vmatpush1.msra.mxu0 0.0
    %4466 = vmatprep.mubr.f32.mxu0 0.0
    %4467 = vmatmul.mubr.f32.gmra.mrb[0].mxu0 %v4400
    %v4468 = vpop.f32.mrb[0].mxu0
    %v4469 = vadd.f32 0.0, %v4468
    %v4470 = vpop.f32.mrb[0].mxu0
    %4471 = vdwg.mxu0
    %4472 = vrot.lane.b32.xlu0 %v4319, 32
    %v4473 = vpop.permute.xlu0 %4472
    %v4475 = vsel %vm149, %v4469, %v4473
    %v4477 = vsel %vm1065, %v4475, 0
    %4479 = vmatprep.subr.mxu0 0.0
    %4480 = vmatpush1.msra.mxu0 %v1438
    %4481 = vmatprep.subr.mxu0 0.0
    %4482 = vmatpush1.msra.mxu0 %v1439
    %4483 = vmatprep.subr.mxu0 0.0
    %4484 = vmatpush1.msra.mxu0 %v1440
    %4485 = vmatprep.subr.mxu0 0.0
    %4486 = vmatpush1.msra.mxu0 %v1441
    %4487 = vmatprep.subr.mxu0 0.0
    %4488 = vmatpush1.msra.mxu0 %v1442
    %4489 = vmatprep.subr.mxu0 0.0
    %4490 = vmatpush1.msra.mxu0 %v1443
    %4491 = vmatprep.subr.mxu0 0.0
    %4492 = vmatpush1.msra.mxu0 %v1444
    %4493 = vmatprep.subr.mxu0 0.0
    %4494 = vmatpush1.msra.mxu0 %v1445
    %4495 = vmatprep.subr.mxu0 0.0
    %4496 = vmatpush1.msra.mxu0 0.0
    %4497 = vmatprep.subr.mxu0 0.0
    %4498 = vmatpush1.msra.mxu0 0.0
    %4499 = vmatprep.subr.mxu0 0.0
    %4500 = vmatpush1.msra.mxu0 0.0
    %4501 = vmatprep.subr.mxu0 0.0
    %4502 = vmatpush1.msra.mxu0 0.0
    %4503 = vmatprep.subr.mxu0 0.0
    %4504 = vmatpush1.msra.mxu0 0.0
    %4505 = vmatprep.subr.mxu0 0.0
    %4506 = vmatpush1.msra.mxu0 0.0
    %4507 = vmatprep.subr.mxu0 0.0
    %4508 = vmatpush1.msra.mxu0 0.0
    %4509 = vmatprep.subr.mxu0 0.0
    %4510 = vmatpush1.msra.mxu0 0.0
    %4511 = vmatprep.subr.mxu0 0.0
    %4512 = vmatpush1.msra.mxu0 0.0
    %4513 = vmatprep.subr.mxu0 0.0
    %4514 = vmatpush1.msra.mxu0 0.0
    %4515 = vmatprep.subr.mxu0 0.0
    %4516 = vmatpush1.msra.mxu0 0.0
    %4517 = vmatprep.subr.mxu0 0.0
    %4518 = vmatpush1.msra.mxu0 0.0
    %4519 = vmatprep.subr.mxu0 0.0
    %4520 = vmatpush1.msra.mxu0 0.0
    %4521 = vmatprep.subr.mxu0 0.0
    %4522 = vmatpush1.msra.mxu0 0.0
    %4523 = vmatprep.subr.mxu0 0.0
    %4524 = vmatpush1.msra.mxu0 0.0
    %4525 = vmatprep.subr.mxu0 0.0
    %4526 = vmatpush1.msra.mxu0 0.0
    %4527 = vmatprep.subr.mxu0 0.0
    %4528 = vmatpush1.msra.mxu0 0.0
    %4529 = vmatprep.subr.mxu0 0.0
    %4530 = vmatpush1.msra.mxu0 0.0
    %4531 = vmatprep.subr.mxu0 0.0
    %4532 = vmatpush1.msra.mxu0 0.0
    %4533 = vmatprep.subr.mxu0 0.0
    %4534 = vmatpush1.msra.mxu0 0.0
    %4535 = vmatprep.subr.mxu0 0.0
    %4536 = vmatpush1.msra.mxu0 0.0
    %4537 = vmatprep.subr.mxu0 0.0
    %4538 = vmatpush1.msra.mxu0 0.0
    %4539 = vmatprep.subr.mxu0 0.0
    %4540 = vmatpush1.msra.mxu0 0.0
    %4541 = vmatprep.subr.mxu0 0.0
    %4542 = vmatpush1.msra.mxu0 0.0
    %4543 = vmatprep.mubr.f32.mxu0 0.0
    %4544 = vmatmul.mubr.f32.gmra.mrb[0].mxu0 %v4477
    %v4545 = vpop.f32.mrb[0].mxu0
    %v4546 = vadd.f32 0.0, %v4545
    %v4547 = vpop.f32.mrb[0].mxu0
    %4548 = vdwg.mxu0
    %v4550 = vrot.slane %v4546, 4
    %v4552 = vadd.f32 %v1435, %v4550
    %v4553 = vadd.f32 %v4552, %v1702
    %v4554 = vtanh.pop %v4553
    %v4556 = vsel %vm149, %v4317, 0
    %4558 = vmatprep.subr.mxu0 0.0
    %4559 = vmatpush1.xpose.msra.mxu0 %v1465
    %4560 = vmatprep.subr.mxu0 0.0
    %4561 = vmatpush1.xpose.msra.mxu0 %v1468
    %4562 = vmatprep.subr.mxu0 0.0
    %4563 = vmatpush1.xpose.msra.mxu0 0.0
    %4564 = vmatprep.subr.mxu0 0.0
    %4565 = vmatpush1.xpose.msra.mxu0 0.0
    %4566 = vmatprep.subr.mxu0 0.0
    %4567 = vmatpush1.xpose.msra.mxu0 0.0
    %4568 = vmatprep.subr.mxu0 0.0
    %4569 = vmatpush1.xpose.msra.mxu0 0.0
    %4570 = vmatprep.subr.mxu0 0.0
    %4571 = vmatpush1.xpose.msra.mxu0 0.0
    %4572 = vmatprep.subr.mxu0 0.0
    %4573 = vmatpush1.xpose.msra.mxu0 0.0
    %4574 = vmatprep.subr.mxu0 0.0
    %4575 = vmatpush1.xpose.msra.mxu0 0.0
    %4576 = vmatprep.subr.mxu0 0.0
    %4577 = vmatpush1.xpose.msra.mxu0 0.0
    %4578 = vmatprep.subr.mxu0 0.0
    %4579 = vmatpush1.xpose.msra.mxu0 0.0
    %4580 = vmatprep.subr.mxu0 0.0
    %4581 = vmatpush1.xpose.msra.mxu0 0.0
    %4582 = vmatprep.subr.mxu0 0.0
    %4583 = vmatpush1.xpose.msra.mxu0 0.0
    %4584 = vmatprep.subr.mxu0 0.0
    %4585 = vmatpush1.xpose.msra.mxu0 0.0
    %4586 = vmatprep.subr.mxu0 0.0
    %4587 = vmatpush1.xpose.msra.mxu0 0.0
    %4588 = vmatprep.subr.mxu0 0.0
    %4589 = vmatpush1.xpose.msra.mxu0 0.0
    %4590 = vmatprep.subr.mxu0 0.0
    %4591 = vmatpush1.xpose.msra.mxu0 0.0
    %4592 = vmatprep.subr.mxu0 0.0
    %4593 = vmatpush1.xpose.msra.mxu0 0.0
    %4594 = vmatprep.subr.mxu0 0.0
    %4595 = vmatpush1.xpose.msra.mxu0 0.0
    %4596 = vmatprep.subr.mxu0 0.0
    %4597 = vmatpush1.xpose.msra.mxu0 0.0
    %4598 = vmatprep.subr.mxu0 0.0
    %4599 = vmatpush1.xpose.msra.mxu0 0.0
    %4600 = vmatprep.subr.mxu0 0.0
    %4601 = vmatpush1.xpose.msra.mxu0 0.0
    %4602 = vmatprep.subr.mxu0 0.0
    %4603 = vmatpush1.xpose.msra.mxu0 0.0
    %4604 = vmatprep.subr.mxu0 0.0
    %4605 = vmatpush1.xpose.msra.mxu0 0.0
    %4606 = vmatprep.subr.mxu0 0.0
    %4607 = vmatpush1.xpose.msra.mxu0 0.0
    %4608 = vmatprep.subr.mxu0 0.0
    %4609 = vmatpush1.xpose.msra.mxu0 0.0
    %4610 = vmatprep.subr.mxu0 0.0
    %4611 = vmatpush1.xpose.msra.mxu0 0.0
    %4612 = vmatprep.subr.mxu0 0.0
    %4613 = vmatpush1.xpose.msra.mxu0 0.0
    %4614 = vmatprep.subr.mxu0 0.0
    %4615 = vmatpush1.xpose.msra.mxu0 0.0
    %4616 = vmatprep.subr.mxu0 0.0
    %4617 = vmatpush1.xpose.msra.mxu0 0.0
    %4618 = vmatprep.subr.mxu0 0.0
    %4619 = vmatpush1.xpose.msra.mxu0 0.0
    %4620 = vmatprep.subr.mxu0 0.0
    %4621 = vmatpush1.xpose.msra.mxu0 0.0
    %4622 = vmatprep.mubr.f32.mxu0 0.0
    %4623 = vmatmul.mubr.f32.gmra.mrb[0].mxu0 %v4556
    %v4624 = vpop.f32.mrb[0].mxu0
    %v4625 = vadd.f32 %v1460, %v4624
    %v4626 = vpop.f32.mrb[0].mxu0
    %4627 = vdwg.mxu0
    %v4628 = vmul.f32 %v4625, 1.442695
    %v4629 = vpow.pop %v4628
    %v4630 = vsel %vm1542, %v4629, 0.0
    %4631 = vadd.xlane.f32.xlu0 %v4630
    %v4632 = vpop.xlane.xlu0 %4631
    %v4633 = vrcp.pop %v4632
    %v4634 = vmul.f32 %v4629, %v4633
    %v4636 = vsel %vm895, %v4634, 0
    %4638 = vmatprep.subr.mxu0 0.0
    %4639 = vmatpush1.msra.mxu0 %v881
    %4640 = vmatprep.subr.mxu0 0.0
    %4641 = vmatpush1.msra.mxu0 %v884
    %4642 = vmatprep.subr.mxu0 0.0
    %4643 = vmatpush1.msra.mxu0 0.0
    %4644 = vmatprep.subr.mxu0 0.0
    %4645 = vmatpush1.msra.mxu0 0.0
    %4646 = vmatprep.subr.mxu0 0.0
    %4647 = vmatpush1.msra.mxu0 0.0
    %4648 = vmatprep.subr.mxu0 0.0
    %4649 = vmatpush1.msra.mxu0 0.0
    %4650 = vmatprep.subr.mxu0 0.0
    %4651 = vmatpush1.msra.mxu0 0.0
    %4652 = vmatprep.subr.mxu0 0.0
    %4653 = vmatpush1.msra.mxu0 0.0
    %4654 = vmatprep.subr.mxu0 0.0
    %4655 = vmatpush1.msra.mxu0 0.0
    %4656 = vmatprep.subr.mxu0 0.0
    %4657 = vmatpush1.msra.mxu0 0.0
    %4658 = vmatprep.subr.mxu0 0.0
    %4659 = vmatpush1.msra.mxu0 0.0
    %4660 = vmatprep.subr.mxu0 0.0
    %4661 = vmatpush1.msra.mxu0 0.0
    %4662 = vmatprep.subr.mxu0 0.0
    %4663 = vmatpush1.msra.mxu0 0.0
    %4664 = vmatprep.subr.mxu0 0.0
    %4665 = vmatpush1.msra.mxu0 0.0
    %4666 = vmatprep.subr.mxu0 0.0
    %4667 = vmatpush1.msra.mxu0 0.0
    %4668 = vmatprep.subr.mxu0 0.0
    %4669 = vmatpush1.msra.mxu0 0.0
    %4670 = vmatprep.subr.mxu0 0.0
    %4671 = vmatpush1.msra.mxu0 0.0
    %4672 = vmatprep.subr.mxu0 0.0
    %4673 = vmatpush1.msra.mxu0 0.0
    %4674 = vmatprep.subr.mxu0 0.0
    %4675 = vmatpush1.msra.mxu0 0.0
    %4676 = vmatprep.subr.mxu0 0.0
    %4677 = vmatpush1.msra.mxu0 0.0
    %4678 = vmatprep.subr.mxu0 0.0
    %4679 = vmatpush1.msra.mxu0 0.0
    %4680 = vmatprep.subr.mxu0 0.0
    %4681 = vmatpush1.msra.mxu0 0.0
    %4682 = vmatprep.subr.mxu0 0.0
    %4683 = vmatpush1.msra.mxu0 0.0
    %4684 = vmatprep.subr.mxu0 0.0
    %4685 = vmatpush1.msra.mxu0 0.0
    %4686 = vmatprep.subr.mxu0 0.0
    %4687 = vmatpush1.msra.mxu0 0.0
    %4688 = vmatprep.subr.mxu0 0.0
    %4689 = vmatpush1.msra.mxu0 0.0
    %4690 = vmatprep.subr.mxu0 0.0
    %4691 = vmatpush1.msra.mxu0 0.0
    %4692 = vmatprep.subr.mxu0 0.0
    %4693 = vmatpush1.msra.mxu0 0.0
    %4694 = vmatprep.subr.mxu0 0.0
    %4695 = vmatpush1.msra.mxu0 0.0
    %4696 = vmatprep.subr.mxu0 0.0
    %4697 = vmatpush1.msra.mxu0 0.0
    %4698 = vmatprep.subr.mxu0 0.0
    %4699 = vmatpush1.msra.mxu0 0.0
    %4700 = vmatprep.subr.mxu0 0.0
    %4701 = vmatpush1.msra.mxu0 0.0
    %4702 = vmatprep.mubr.f32.mxu0 0.0
    %4703 = vmatmul.mubr.f32.gmra.mrb[0].mxu0 %v4636
    %v4704 = vpop.f32.mrb[0].mxu0
    %v4705 = vadd.f32 0.0, %v4704
    %v4706 = vpop.f32.mrb[0].mxu0
    %4707 = vdwg.mxu0
    %v4709 = vrot.slane %v4705, 4
    %4710 = vrot.lane.b32.xlu0 %v4709, 32
    %v4711 = vpop.permute.xlu0 %4710
    %v4713 = vrot.slane %v4317, 4
    %4714 = vrot.lane.b32.xlu0 %v4713, 64
    %v4715 = vpop.permute.xlu0 %4714
    %v4717 = vsel %vm149, %v4554, %v4711
    %v4718 = vsel %vm1065, %v4717, %v4715
    %v4720 = vrot.slane %v4718, 4
    %v4721 = vsel %vm1871, %v4720, 0
    %4723 = vmatprep.subr.mxu0 0.0
    %4724 = vmatpush1.msra.mxu0 %v1446
    %4725 = vmatprep.subr.mxu0 0.0
    %4726 = vmatpush1.msra.mxu0 %v1447
    %4727 = vmatprep.subr.mxu0 0.0
    %4728 = vmatpush1.msra.mxu0 %v1448
    %4729 = vmatprep.subr.mxu0 0.0
    %4730 = vmatpush1.msra.mxu0 %v1449
    %4731 = vmatprep.subr.mxu0 0.0
    %4732 = vmatpush1.msra.mxu0 %v1450
    %4733 = vmatprep.subr.mxu0 0.0
    %4734 = vmatpush1.msra.mxu0 %v1451
    %4735 = vmatprep.subr.mxu0 0.0
    %4736 = vmatpush1.msra.mxu0 %v1452
    %4737 = vmatprep.subr.mxu0 0.0
    %4738 = vmatpush1.msra.mxu0 %v1453
    %4739 = vmatprep.subr.mxu0 0.0
    %4740 = vmatpush1.msra.mxu0 %v1454
    %4741 = vmatprep.subr.mxu0 0.0
    %4742 = vmatpush1.msra.mxu0 %v1455
    %4743 = vmatprep.subr.mxu0 0.0
    %4744 = vmatpush1.msra.mxu0 %v1456
    %4745 = vmatprep.subr.mxu0 0.0
    %4746 = vmatpush1.msra.mxu0 %v1457
    %4747 = vmatprep.subr.mxu0 0.0
    %4748 = vmatpush1.msra.mxu0 0.0
    %4749 = vmatprep.subr.mxu0 0.0
    %4750 = vmatpush1.msra.mxu0 0.0
    %4751 = vmatprep.subr.mxu0 0.0
    %4752 = vmatpush1.msra.mxu0 0.0
    %4753 = vmatprep.subr.mxu0 0.0
    %4754 = vmatpush1.msra.mxu0 0.0
    %4755 = vmatprep.subr.mxu0 0.0
    %4756 = vmatpush1.msra.mxu0 0.0
    %4757 = vmatprep.subr.mxu0 0.0
    %4758 = vmatpush1.msra.mxu0 0.0
    %4759 = vmatprep.subr.mxu0 0.0
    %4760 = vmatpush1.msra.mxu0 0.0
    %4761 = vmatprep.subr.mxu0 0.0
    %4762 = vmatpush1.msra.mxu0 0.0
    %4763 = vmatprep.subr.mxu0 0.0
    %4764 = vmatpush1.msra.mxu0 0.0
    %4765 = vmatprep.subr.mxu0 0.0
    %4766 = vmatpush1.msra.mxu0 0.0
    %4767 = vmatprep.subr.mxu0 0.0
    %4768 = vmatpush1.msra.mxu0 0.0
    %4769 = vmatprep.subr.mxu0 0.0
    %4770 = vmatpush1.msra.mxu0 0.0
    %4771 = vmatprep.subr.mxu0 0.0
    %4772 = vmatpush1.msra.mxu0 0.0
    %4773 = vmatprep.subr.mxu0 0.0
    %4774 = vmatpush1.msra.mxu0 0.0
    %4775 = vmatprep.subr.mxu0 0.0
    %4776 = vmatpush1.msra.mxu0 0.0
    %4777 = vmatprep.subr.mxu0 0.0
    %4778 = vmatpush1.msra.mxu0 0.0
    %4779 = vmatprep.subr.mxu0 0.0
    %4780 = vmatpush1.msra.mxu0 0.0
    %4781 = vmatprep.subr.mxu0 0.0
    %4782 = vmatpush1.msra.mxu0 0.0
    %4783 = vmatprep.subr.mxu0 0.0
    %4784 = vmatpush1.msra.mxu0 0.0
    %4785 = vmatprep.subr.mxu0 0.0
    %4786 = vmatpush1.msra.mxu0 0.0
    %4787 = vmatprep.mubr.f32.mxu0 0.0
    %4788 = vmatmul.mubr.f32.gmra.mrb[0].mxu0 %v4721
    %v4789 = vpop.f32.mrb[0].mxu0
    %v4790 = vadd.f32 %v1870, %v4789
    %v4791 = vpop.f32.mrb[0].mxu0
    %4792 = vdwg.mxu0
    %v4793 = vtanh.pop %v4790
    %v4795 = vrot.slane %v4554, 4
    %v4796 = vsel %vm149, %v4795, 0
    %4798 = vmatprep.subr.mxu0 0.0
    %4799 = vmatpush1.xpose.msra.mxu0 %v1465
    %4800 = vmatprep.subr.mxu0 0.0
    %4801 = vmatpush1.xpose.msra.mxu0 %v1468
    %4802 = vmatprep.subr.mxu0 0.0
    %4803 = vmatpush1.xpose.msra.mxu0 0.0
    %4804 = vmatprep.subr.mxu0 0.0
    %4805 = vmatpush1.xpose.msra.mxu0 0.0
    %4806 = vmatprep.subr.mxu0 0.0
    %4807 = vmatpush1.xpose.msra.mxu0 0.0
    %4808 = vmatprep.subr.mxu0 0.0
    %4809 = vmatpush1.xpose.msra.mxu0 0.0
    %4810 = vmatprep.subr.mxu0 0.0
    %4811 = vmatpush1.xpose.msra.mxu0 0.0
    %4812 = vmatprep.subr.mxu0 0.0
    %4813 = vmatpush1.xpose.msra.mxu0 0.0
    %4814 = vmatprep.subr.mxu0 0.0
    %4815 = vmatpush1.xpose.msra.mxu0 0.0
    %4816 = vmatprep.subr.mxu0 0.0
    %4817 = vmatpush1.xpose.msra.mxu0 0.0
    %4818 = vmatprep.subr.mxu0 0.0
    %4819 = vmatpush1.xpose.msra.mxu0 0.0
    %4820 = vmatprep.subr.mxu0 0.0
    %4821 = vmatpush1.xpose.msra.mxu0 0.0
    %4822 = vmatprep.subr.mxu0 0.0
    %4823 = vmatpush1.xpose.msra.mxu0 0.0
    %4824 = vmatprep.subr.mxu0 0.0
    %4825 = vmatpush1.xpose.msra.mxu0 0.0
    %4826 = vmatprep.subr.mxu0 0.0
    %4827 = vmatpush1.xpose.msra.mxu0 0.0
    %4828 = vmatprep.subr.mxu0 0.0
    %4829 = vmatpush1.xpose.msra.mxu0 0.0
    %4830 = vmatprep.subr.mxu0 0.0
    %4831 = vmatpush1.xpose.msra.mxu0 0.0
    %4832 = vmatprep.subr.mxu0 0.0
    %4833 = vmatpush1.xpose.msra.mxu0 0.0
    %4834 = vmatprep.subr.mxu0 0.0
    %4835 = vmatpush1.xpose.msra.mxu0 0.0
    %4836 = vmatprep.subr.mxu0 0.0
    %4837 = vmatpush1.xpose.msra.mxu0 0.0
    %4838 = vmatprep.subr.mxu0 0.0
    %4839 = vmatpush1.xpose.msra.mxu0 0.0
    %4840 = vmatprep.subr.mxu0 0.0
    %4841 = vmatpush1.xpose.msra.mxu0 0.0
    %4842 = vmatprep.subr.mxu0 0.0
    %4843 = vmatpush1.xpose.msra.mxu0 0.0
    %4844 = vmatprep.subr.mxu0 0.0
    %4845 = vmatpush1.xpose.msra.mxu0 0.0
    %4846 = vmatprep.subr.mxu0 0.0
    %4847 = vmatpush1.xpose.msra.mxu0 0.0
    %4848 = vmatprep.subr.mxu0 0.0
    %4849 = vmatpush1.xpose.msra.mxu0 0.0
    %4850 = vmatprep.subr.mxu0 0.0
    %4851 = vmatpush1.xpose.msra.mxu0 0.0
    %4852 = vmatprep.subr.mxu0 0.0
    %4853 = vmatpush1.xpose.msra.mxu0 0.0
    %4854 = vmatprep.subr.mxu0 0.0
    %4855 = vmatpush1.xpose.msra.mxu0 0.0
    %4856 = vmatprep.subr.mxu0 0.0
    %4857 = vmatpush1.xpose.msra.mxu0 0.0
    %4858 = vmatprep.subr.mxu0 0.0
    %4859 = vmatpush1.xpose.msra.mxu0 0.0
    %4860 = vmatprep.subr.mxu0 0.0
    %4861 = vmatpush1.xpose.msra.mxu0 0.0
    %4862 = vmatprep.mubr.f32.mxu0 0.0
    %4863 = vmatmul.mubr.f32.gmra.mrb[0].mxu0 %v4796
    %v4864 = vpop.f32.mrb[0].mxu0
    %v4865 = vadd.f32 %v1460, %v4864
    %v4866 = vpop.f32.mrb[0].mxu0
    %4867 = vdwg.mxu0
    %v4868 = vmul.f32 %v4865, 1.442695
    %v4869 = vpow.pop %v4868
    %v4870 = vsel %vm1542, %v4869, 0.0
    %4871 = vadd.xlane.f32.xlu0 %v4870
    %v4872 = vpop.xlane.xlu0 %4871
    %v4873 = vrcp.pop %v4872
    %v4874 = vmul.f32 %v4869, %v4873
    %v4876 = vsel %vm895, %v4874, 0
    %4878 = vmatprep.subr.mxu0 0.0
    %4879 = vmatpush1.msra.mxu0 %v881
    %4880 = vmatprep.subr.mxu0 0.0
    %4881 = vmatpush1.msra.mxu0 %v884
    %4882 = vmatprep.subr.mxu0 0.0
    %4883 = vmatpush1.msra.mxu0 0.0
    %4884 = vmatprep.subr.mxu0 0.0
    %4885 = vmatpush1.msra.mxu0 0.0
    %4886 = vmatprep.subr.mxu0 0.0
    %4887 = vmatpush1.msra.mxu0 0.0
    %4888 = vmatprep.subr.mxu0 0.0
    %4889 = vmatpush1.msra.mxu0 0.0
    %4890 = vmatprep.subr.mxu0 0.0
    %4891 = vmatpush1.msra.mxu0 0.0
    %4892 = vmatprep.subr.mxu0 0.0
    %4893 = vmatpush1.msra.mxu0 0.0
    %4894 = vmatprep.subr.mxu0 0.0
    %4895 = vmatpush1.msra.mxu0 0.0
    %4896 = vmatprep.subr.mxu0 0.0
    %4897 = vmatpush1.msra.mxu0 0.0
    %4898 = vmatprep.subr.mxu0 0.0
    %4899 = vmatpush1.msra.mxu0 0.0
    %4900 = vmatprep.subr.mxu0 0.0
    %4901 = vmatpush1.msra.mxu0 0.0
    %4902 = vmatprep.subr.mxu0 0.0
    %4903 = vmatpush1.msra.mxu0 0.0
    %4904 = vmatprep.subr.mxu0 0.0
    %4905 = vmatpush1.msra.mxu0 0.0
    %4906 = vmatprep.subr.mxu0 0.0
    %4907 = vmatpush1.msra.mxu0 0.0
    %4908 = vmatprep.subr.mxu0 0.0
    %4909 = vmatpush1.msra.mxu0 0.0
    %4910 = vmatprep.subr.mxu0 0.0
    %4911 = vmatpush1.msra.mxu0 0.0
    %4912 = vmatprep.subr.mxu0 0.0
    %4913 = vmatpush1.msra.mxu0 0.0
    %4914 = vmatprep.subr.mxu0 0.0
    %4915 = vmatpush1.msra.mxu0 0.0
    %4916 = vmatprep.subr.mxu0 0.0
    %4917 = vmatpush1.msra.mxu0 0.0
    %4918 = vmatprep.subr.mxu0 0.0
    %4919 = vmatpush1.msra.mxu0 0.0
    %4920 = vmatprep.subr.mxu0 0.0
    %4921 = vmatpush1.msra.mxu0 0.0
    %4922 = vmatprep.subr.mxu0 0.0
    %4923 = vmatpush1.msra.mxu0 0.0
    %4924 = vmatprep.subr.mxu0 0.0
    %4925 = vmatpush1.msra.mxu0 0.0
    %4926 = vmatprep.subr.mxu0 0.0
    %4927 = vmatpush1.msra.mxu0 0.0
    %4928 = vmatprep.subr.mxu0 0.0
    %4929 = vmatpush1.msra.mxu0 0.0
    %4930 = vmatprep.subr.mxu0 0.0
    %4931 = vmatpush1.msra.mxu0 0.0
    %4932 = vmatprep.subr.mxu0 0.0
    %4933 = vmatpush1.msra.mxu0 0.0
    %4934 = vmatprep.subr.mxu0 0.0
    %4935 = vmatpush1.msra.mxu0 0.0
    %4936 = vmatprep.subr.mxu0 0.0
    %4937 = vmatpush1.msra.mxu0 0.0
    %4938 = vmatprep.subr.mxu0 0.0
    %4939 = vmatpush1.msra.mxu0 0.0
    %4940 = vmatprep.subr.mxu0 0.0
    %4941 = vmatpush1.msra.mxu0 0.0
    %4942 = vmatprep.mubr.f32.mxu0 0.0
    %4943 = vmatmul.mubr.f32.gmra.mrb[0].mxu0 %v4876
    %v4944 = vpop.f32.mrb[0].mxu0
    %v4945 = vadd.f32 0.0, %v4944
    %v4946 = vpop.f32.mrb[0].mxu0
    %4947 = vdwg.mxu0
    %4948 = vrot.lane.b32.xlu0 %v4795, 32
    %v4949 = vpop.permute.xlu0 %4948
    %v4951 = vsel %vm149, %v4945, %v4949
    %v4953 = vsel %vm1065, %v4951, 0
    %4955 = vmatprep.subr.mxu0 0.0
    %4956 = vmatpush1.msra.mxu0 %v1438
    %4957 = vmatprep.subr.mxu0 0.0
    %4958 = vmatpush1.msra.mxu0 %v1439
    %4959 = vmatprep.subr.mxu0 0.0
    %4960 = vmatpush1.msra.mxu0 %v1440
    %4961 = vmatprep.subr.mxu0 0.0
    %4962 = vmatpush1.msra.mxu0 %v1441
    %4963 = vmatprep.subr.mxu0 0.0
    %4964 = vmatpush1.msra.mxu0 %v1442
    %4965 = vmatprep.subr.mxu0 0.0
    %4966 = vmatpush1.msra.mxu0 %v1443
    %4967 = vmatprep.subr.mxu0 0.0
    %4968 = vmatpush1.msra.mxu0 %v1444
    %4969 = vmatprep.subr.mxu0 0.0
    %4970 = vmatpush1.msra.mxu0 %v1445
    %4971 = vmatprep.subr.mxu0 0.0
    %4972 = vmatpush1.msra.mxu0 0.0
    %4973 = vmatprep.subr.mxu0 0.0
    %4974 = vmatpush1.msra.mxu0 0.0
    %4975 = vmatprep.subr.mxu0 0.0
    %4976 = vmatpush1.msra.mxu0 0.0
    %4977 = vmatprep.subr.mxu0 0.0
    %4978 = vmatpush1.msra.mxu0 0.0
    %4979 = vmatprep.subr.mxu0 0.0
    %4980 = vmatpush1.msra.mxu0 0.0
    %4981 = vmatprep.subr.mxu0 0.0
    %4982 = vmatpush1.msra.mxu0 0.0
    %4983 = vmatprep.subr.mxu0 0.0
    %4984 = vmatpush1.msra.mxu0 0.0
    %4985 = vmatprep.subr.mxu0 0.0
    %4986 = vmatpush1.msra.mxu0 0.0
    %4987 = vmatprep.subr.mxu0 0.0
    %4988 = vmatpush1.msra.mxu0 0.0
    %4989 = vmatprep.subr.mxu0 0.0
    %4990 = vmatpush1.msra.mxu0 0.0
    %4991 = vmatprep.subr.mxu0 0.0
    %4992 = vmatpush1.msra.mxu0 0.0
    %4993 = vmatprep.subr.mxu0 0.0
    %4994 = vmatpush1.msra.mxu0 0.0
    %4995 = vmatprep.subr.mxu0 0.0
    %4996 = vmatpush1.msra.mxu0 0.0
    %4997 = vmatprep.subr.mxu0 0.0
    %4998 = vmatpush1.msra.mxu0 0.0
    %4999 = vmatprep.subr.mxu0 0.0
    %5000 = vmatpush1.msra.mxu0 0.0
    %5001 = vmatprep.subr.mxu0 0.0
    %5002 = vmatpush1.msra.mxu0 0.0
    %5003 = vmatprep.subr.mxu0 0.0
    %5004 = vmatpush1.msra.mxu0 0.0
    %5005 = vmatprep.subr.mxu0 0.0
    %5006 = vmatpush1.msra.mxu0 0.0
    %5007 = vmatprep.subr.mxu0 0.0
    %5008 = vmatpush1.msra.mxu0 0.0
    %5009 = vmatprep.subr.mxu0 0.0
    %5010 = vmatpush1.msra.mxu0 0.0
    %5011 = vmatprep.subr.mxu0 0.0
    %5012 = vmatpush1.msra.mxu0 0.0
    %5013 = vmatprep.subr.mxu0 0.0
    %5014 = vmatpush1.msra.mxu0 0.0
    %5015 = vmatprep.subr.mxu0 0.0
    %5016 = vmatpush1.msra.mxu0 0.0
    %5017 = vmatprep.subr.mxu0 0.0
    %5018 = vmatpush1.msra.mxu0 0.0
    %5019 = vmatprep.mubr.f32.mxu0 0.0
    %5020 = vmatmul.mubr.f32.gmra.mrb[0].mxu0 %v4953
    %v5021 = vpop.f32.mrb[0].mxu0
    %v5022 = vadd.f32 0.0, %v5021
    %v5023 = vpop.f32.mrb[0].mxu0
    %5024 = vdwg.mxu0
    %v5026 = vrot.slane %v5022, 2
    %v5028 = vadd.f32 %v1435, %v5026
    %v5029 = vadd.f32 %v5028, %v1702
    %v5030 = vtanh.pop %v5029
    %v5032 = vsel %vm149, %v4793, 0
    %5034 = vmatprep.subr.mxu0 0.0
    %5035 = vmatpush1.xpose.msra.mxu0 %v1465
    %5036 = vmatprep.subr.mxu0 0.0
    %5037 = vmatpush1.xpose.msra.mxu0 %v1468
    %5038 = vmatprep.subr.mxu0 0.0
    %5039 = vmatpush1.xpose.msra.mxu0 0.0
    %5040 = vmatprep.subr.mxu0 0.0
    %5041 = vmatpush1.xpose.msra.mxu0 0.0
    %5042 = vmatprep.subr.mxu0 0.0
    %5043 = vmatpush1.xpose.msra.mxu0 0.0
    %5044 = vmatprep.subr.mxu0 0.0
    %5045 = vmatpush1.xpose.msra.mxu0 0.0
    %5046 = vmatprep.subr.mxu0 0.0
    %5047 = vmatpush1.xpose.msra.mxu0 0.0
    %5048 = vmatprep.subr.mxu0 0.0
    %5049 = vmatpush1.xpose.msra.mxu0 0.0
    %5050 = vmatprep.subr.mxu0 0.0
    %5051 = vmatpush1.xpose.msra.mxu0 0.0
    %5052 = vmatprep.subr.mxu0 0.0
    %5053 = vmatpush1.xpose.msra.mxu0 0.0
    %5054 = vmatprep.subr.mxu0 0.0
    %5055 = vmatpush1.xpose.msra.mxu0 0.0
    %5056 = vmatprep.subr.mxu0 0.0
    %5057 = vmatpush1.xpose.msra.mxu0 0.0
    %5058 = vmatprep.subr.mxu0 0.0
    %5059 = vmatpush1.xpose.msra.mxu0 0.0
    %5060 = vmatprep.subr.mxu0 0.0
    %5061 = vmatpush1.xpose.msra.mxu0 0.0
    %5062 = vmatprep.subr.mxu0 0.0
    %5063 = vmatpush1.xpose.msra.mxu0 0.0
    %5064 = vmatprep.subr.mxu0 0.0
    %5065 = vmatpush1.xpose.msra.mxu0 0.0
    %5066 = vmatprep.subr.mxu0 0.0
    %5067 = vmatpush1.xpose.msra.mxu0 0.0
    %5068 = vmatprep.subr.mxu0 0.0
    %5069 = vmatpush1.xpose.msra.mxu0 0.0
    %5070 = vmatprep.subr.mxu0 0.0
    %5071 = vmatpush1.xpose.msra.mxu0 0.0
    %5072 = vmatprep.subr.mxu0 0.0
    %5073 = vmatpush1.xpose.msra.mxu0 0.0
    %5074 = vmatprep.subr.mxu0 0.0
    %5075 = vmatpush1.xpose.msra.mxu0 0.0
    %5076 = vmatprep.subr.mxu0 0.0
    %5077 = vmatpush1.xpose.msra.mxu0 0.0
    %5078 = vmatprep.subr.mxu0 0.0
    %5079 = vmatpush1.xpose.msra.mxu0 0.0
    %5080 = vmatprep.subr.mxu0 0.0
    %5081 = vmatpush1.xpose.msra.mxu0 0.0
    %5082 = vmatprep.subr.mxu0 0.0
    %5083 = vmatpush1.xpose.msra.mxu0 0.0
    %5084 = vmatprep.subr.mxu0 0.0
    %5085 = vmatpush1.xpose.msra.mxu0 0.0
    %5086 = vmatprep.subr.mxu0 0.0
    %5087 = vmatpush1.xpose.msra.mxu0 0.0
    %5088 = vmatprep.subr.mxu0 0.0
    %5089 = vmatpush1.xpose.msra.mxu0 0.0
    %5090 = vmatprep.subr.mxu0 0.0
    %5091 = vmatpush1.xpose.msra.mxu0 0.0
    %5092 = vmatprep.subr.mxu0 0.0
    %5093 = vmatpush1.xpose.msra.mxu0 0.0
    %5094 = vmatprep.subr.mxu0 0.0
    %5095 = vmatpush1.xpose.msra.mxu0 0.0
    %5096 = vmatprep.subr.mxu0 0.0
    %5097 = vmatpush1.xpose.msra.mxu0 0.0
    %5098 = vmatprep.mubr.f32.mxu0 0.0
    %5099 = vmatmul.mubr.f32.gmra.mrb[0].mxu0 %v5032
    %v5100 = vpop.f32.mrb[0].mxu0
    %v5101 = vadd.f32 %v1460, %v5100
    %v5102 = vpop.f32.mrb[0].mxu0
    %5103 = vdwg.mxu0
    %v5104 = vmul.f32 %v5101, 1.442695
    %v5105 = vpow.pop %v5104
    %v5106 = vsel %vm1542, %v5105, 0.0
    %5107 = vadd.xlane.f32.xlu0 %v5106
    %v5108 = vpop.xlane.xlu0 %5107
    %v5109 = vrcp.pop %v5108
    %v5110 = vmul.f32 %v5105, %v5109
    %v5112 = vsel %vm895, %v5110, 0
    %5114 = vmatprep.subr.mxu0 0.0
    %5115 = vmatpush1.msra.mxu0 %v881
    %5116 = vmatprep.subr.mxu0 0.0
    %5117 = vmatpush1.msra.mxu0 %v884
    %5118 = vmatprep.subr.mxu0 0.0
    %5119 = vmatpush1.msra.mxu0 0.0
    %5120 = vmatprep.subr.mxu0 0.0
    %5121 = vmatpush1.msra.mxu0 0.0
    %5122 = vmatprep.subr.mxu0 0.0
    %5123 = vmatpush1.msra.mxu0 0.0
    %5124 = vmatprep.subr.mxu0 0.0
    %5125 = vmatpush1.msra.mxu0 0.0
    %5126 = vmatprep.subr.mxu0 0.0
    %5127 = vmatpush1.msra.mxu0 0.0
    %5128 = vmatprep.subr.mxu0 0.0
    %5129 = vmatpush1.msra.mxu0 0.0
    %5130 = vmatprep.subr.mxu0 0.0
    %5131 = vmatpush1.msra.mxu0 0.0
    %5132 = vmatprep.subr.mxu0 0.0
    %5133 = vmatpush1.msra.mxu0 0.0
    %5134 = vmatprep.subr.mxu0 0.0
    %5135 = vmatpush1.msra.mxu0 0.0
    %5136 = vmatprep.subr.mxu0 0.0
    %5137 = vmatpush1.msra.mxu0 0.0
    %5138 = vmatprep.subr.mxu0 0.0
    %5139 = vmatpush1.msra.mxu0 0.0
    %5140 = vmatprep.subr.mxu0 0.0
    %5141 = vmatpush1.msra.mxu0 0.0
    %5142 = vmatprep.subr.mxu0 0.0
    %5143 = vmatpush1.msra.mxu0 0.0
    %5144 = vmatprep.subr.mxu0 0.0
    %5145 = vmatpush1.msra.mxu0 0.0
    %5146 = vmatprep.subr.mxu0 0.0
    %5147 = vmatpush1.msra.mxu0 0.0
    %5148 = vmatprep.subr.mxu0 0.0
    %5149 = vmatpush1.msra.mxu0 0.0
    %5150 = vmatprep.subr.mxu0 0.0
    %5151 = vmatpush1.msra.mxu0 0.0
    %5152 = vmatprep.subr.mxu0 0.0
    %5153 = vmatpush1.msra.mxu0 0.0
    %5154 = vmatprep.subr.mxu0 0.0
    %5155 = vmatpush1.msra.mxu0 0.0
    %5156 = vmatprep.subr.mxu0 0.0
    %5157 = vmatpush1.msra.mxu0 0.0
    %5158 = vmatprep.subr.mxu0 0.0
    %5159 = vmatpush1.msra.mxu0 0.0
    %5160 = vmatprep.subr.mxu0 0.0
    %5161 = vmatpush1.msra.mxu0 0.0
    %5162 = vmatprep.subr.mxu0 0.0
    %5163 = vmatpush1.msra.mxu0 0.0
    %5164 = vmatprep.subr.mxu0 0.0
    %5165 = vmatpush1.msra.mxu0 0.0
    %5166 = vmatprep.subr.mxu0 0.0
    %5167 = vmatpush1.msra.mxu0 0.0
    %5168 = vmatprep.subr.mxu0 0.0
    %5169 = vmatpush1.msra.mxu0 0.0
    %5170 = vmatprep.subr.mxu0 0.0
    %5171 = vmatpush1.msra.mxu0 0.0
    %5172 = vmatprep.subr.mxu0 0.0
    %5173 = vmatpush1.msra.mxu0 0.0
    %5174 = vmatprep.subr.mxu0 0.0
    %5175 = vmatpush1.msra.mxu0 0.0
    %5176 = vmatprep.subr.mxu0 0.0
    %5177 = vmatpush1.msra.mxu0 0.0
    %5178 = vmatprep.mubr.f32.mxu0 0.0
    %5179 = vmatmul.mubr.f32.gmra.mrb[0].mxu0 %v5112
    %v5180 = vpop.f32.mrb[0].mxu0
    %v5181 = vadd.f32 0.0, %v5180
    %v5182 = vpop.f32.mrb[0].mxu0
    %5183 = vdwg.mxu0
    %v5185 = vrot.slane %v5181, 2
    %5186 = vrot.lane.b32.xlu0 %v5185, 32
    %v5187 = vpop.permute.xlu0 %5186
    %v5189 = vrot.slane %v4793, 2
    %5190 = vrot.lane.b32.xlu0 %v5189, 64
    %v5191 = vpop.permute.xlu0 %5190
    %v5193 = vsel %vm149, %v5030, %v5187
    %v5194 = vsel %vm1065, %v5193, %v5191
    %v5196 = vrot.slane %v5194, 6
    %v5197 = vsel %vm1871, %v5196, 0
    %5199 = vmatprep.subr.mxu0 0.0
    %5200 = vmatpush1.msra.mxu0 %v1446
    %5201 = vmatprep.subr.mxu0 0.0
    %5202 = vmatpush1.msra.mxu0 %v1447
    %5203 = vmatprep.subr.mxu0 0.0
    %5204 = vmatpush1.msra.mxu0 %v1448
    %5205 = vmatprep.subr.mxu0 0.0
    %5206 = vmatpush1.msra.mxu0 %v1449
    %5207 = vmatprep.subr.mxu0 0.0
    %5208 = vmatpush1.msra.mxu0 %v1450
    %5209 = vmatprep.subr.mxu0 0.0
    %5210 = vmatpush1.msra.mxu0 %v1451
    %5211 = vmatprep.subr.mxu0 0.0
    %5212 = vmatpush1.msra.mxu0 %v1452
    %5213 = vmatprep.subr.mxu0 0.0
    %5214 = vmatpush1.msra.mxu0 %v1453
    %5215 = vmatprep.subr.mxu0 0.0
    %5216 = vmatpush1.msra.mxu0 %v1454
    %5217 = vmatprep.subr.mxu0 0.0
    %5218 = vmatpush1.msra.mxu0 %v1455
    %5219 = vmatprep.subr.mxu0 0.0
    %5220 = vmatpush1.msra.mxu0 %v1456
    %5221 = vmatprep.subr.mxu0 0.0
    %5222 = vmatpush1.msra.mxu0 %v1457
    %5223 = vmatprep.subr.mxu0 0.0
    %5224 = vmatpush1.msra.mxu0 0.0
    %5225 = vmatprep.subr.mxu0 0.0
    %5226 = vmatpush1.msra.mxu0 0.0
    %5227 = vmatprep.subr.mxu0 0.0
    %5228 = vmatpush1.msra.mxu0 0.0
    %5229 = vmatprep.subr.mxu0 0.0
    %5230 = vmatpush1.msra.mxu0 0.0
    %5231 = vmatprep.subr.mxu0 0.0
    %5232 = vmatpush1.msra.mxu0 0.0
    %5233 = vmatprep.subr.mxu0 0.0
    %5234 = vmatpush1.msra.mxu0 0.0
    %5235 = vmatprep.subr.mxu0 0.0
    %5236 = vmatpush1.msra.mxu0 0.0
    %5237 = vmatprep.subr.mxu0 0.0
    %5238 = vmatpush1.msra.mxu0 0.0
    %5239 = vmatprep.subr.mxu0 0.0
    %5240 = vmatpush1.msra.mxu0 0.0
    %5241 = vmatprep.subr.mxu0 0.0
    %5242 = vmatpush1.msra.mxu0 0.0
    %5243 = vmatprep.subr.mxu0 0.0
    %5244 = vmatpush1.msra.mxu0 0.0
    %5245 = vmatprep.subr.mxu0 0.0
    %5246 = vmatpush1.msra.mxu0 0.0
    %5247 = vmatprep.subr.mxu0 0.0
    %5248 = vmatpush1.msra.mxu0 0.0
    %5249 = vmatprep.subr.mxu0 0.0
    %5250 = vmatpush1.msra.mxu0 0.0
    %5251 = vmatprep.subr.mxu0 0.0
    %5252 = vmatpush1.msra.mxu0 0.0
    %5253 = vmatprep.subr.mxu0 0.0
    %5254 = vmatpush1.msra.mxu0 0.0
    %5255 = vmatprep.subr.mxu0 0.0
    %5256 = vmatpush1.msra.mxu0 0.0
    %5257 = vmatprep.subr.mxu0 0.0
    %5258 = vmatpush1.msra.mxu0 0.0
    %5259 = vmatprep.subr.mxu0 0.0
    %5260 = vmatpush1.msra.mxu0 0.0
    %5261 = vmatprep.subr.mxu0 0.0
    %5262 = vmatpush1.msra.mxu0 0.0
    %5263 = vmatprep.mubr.f32.mxu0 0.0
    %5264 = vmatmul.mubr.f32.gmra.mrb[0].mxu0 %v5197
    %v5265 = vpop.f32.mrb[0].mxu0
    %v5266 = vadd.f32 %v1870, %v5265
    %v5267 = vpop.f32.mrb[0].mxu0
    %5268 = vdwg.mxu0
    %v5269 = vtanh.pop %v5266
    %v5270 = vrot.slane %v2420, 6
    %v5272 = vrot.slane %v2896, 4
    %v5274 = vrot.slane %v3372, 2
    %v5276 = vrot.slane %v4317, 6
    %v5278 = vrot.slane %v4793, 4
    %v5281 = vrot.slane %v5269, 2
    %v5283 = vsel %vm876, %v1945, %v5270
    %v5284 = vsel %vm878, %v5283, %v5272
    %v5285 = vsel %vm880, %v5284, %v5274
    %v5286 = vsel %vm876, %v3842, %v5276
    %v5287 = vsel %vm878, %v5286, %v5278
    %v5288 = vsel %vm880, %v5287, %v5281
    %v5289 = vld [vmem:[#allocation2 + $0x1f8] sm:$0xff]
    %v5290 = vld [vmem:[#allocation2 + $0x200] sm:$0xff]
    %v5291 = vld [vmem:[#allocation2 + $0x208] sm:$0xff]
    %v5292 = vld [vmem:[#allocation2 + $0x210] sm:$0xff]
    %v5293 = vld [vmem:[#allocation2 + $0x288] sm:$0x1]
    %v5294 = vlaneseq
    %v5295 = vshrl.u32 %v5294, 7
    %v5296 = vsub.s32 0, %v5295
    %v5297 = vrot.slane %v5293, %v5296
    %v5299 = vsel %vm149, %v5285, 0
    %v5302 = vsel %vm149, %v5288, 0
    %5304 = vmatprep.subr.mxu0 0.0
    %5305 = vmatpush1.msra.mxu0 %v5289
    %5306 = vmatprep.subr.mxu0 0.0
    %5307 = vmatpush1.msra.mxu0 %v5290
    %5308 = vmatprep.subr.mxu0 0.0
    %5309 = vmatpush1.msra.mxu0 %v5291
    %5310 = vmatprep.subr.mxu0 0.0
    %5311 = vmatpush1.msra.mxu0 %v5292
    %5312 = vmatprep.subr.mxu0 0.0
    %5313 = vmatpush1.msra.mxu0 0.0
    %5314 = vmatprep.subr.mxu0 0.0
    %5315 = vmatpush1.msra.mxu0 0.0
    %5316 = vmatprep.subr.mxu0 0.0
    %5317 = vmatpush1.msra.mxu0 0.0
    %5318 = vmatprep.subr.mxu0 0.0
    %5319 = vmatpush1.msra.mxu0 0.0
    %5320 = vmatprep.subr.mxu0 0.0
    %5321 = vmatpush1.msra.mxu0 0.0
    %5322 = vmatprep.subr.mxu0 0.0
    %5323 = vmatpush1.msra.mxu0 0.0
    %5324 = vmatprep.subr.mxu0 0.0
    %5325 = vmatpush1.msra.mxu0 0.0
    %5326 = vmatprep.subr.mxu0 0.0
    %5327 = vmatpush1.msra.mxu0 0.0
    %5328 = vmatprep.subr.mxu0 0.0
    %5329 = vmatpush1.msra.mxu0 0.0
    %5330 = vmatprep.subr.mxu0 0.0
    %5331 = vmatpush1.msra.mxu0 0.0
    %5332 = vmatprep.subr.mxu0 0.0
    %5333 = vmatpush1.msra.mxu0 0.0
    %5334 = vmatprep.subr.mxu0 0.0
    %5335 = vmatpush1.msra.mxu0 0.0
    %5336 = vmatprep.subr.mxu0 0.0
    %5337 = vmatpush1.msra.mxu0 0.0
    %5338 = vmatprep.subr.mxu0 0.0
    %5339 = vmatpush1.msra.mxu0 0.0
    %5340 = vmatprep.subr.mxu0 0.0
    %5341 = vmatpush1.msra.mxu0 0.0
    %5342 = vmatprep.subr.mxu0 0.0
    %5343 = vmatpush1.msra.mxu0 0.0
    %5344 = vmatprep.subr.mxu0 0.0
    %5345 = vmatpush1.msra.mxu0 0.0
    %5346 = vmatprep.subr.mxu0 0.0
    %5347 = vmatpush1.msra.mxu0 0.0
    %5348 = vmatprep.subr.mxu0 0.0
    %5349 = vmatpush1.msra.mxu0 0.0
    %5350 = vmatprep.subr.mxu0 0.0
    %5351 = vmatpush1.msra.mxu0 0.0
    %5352 = vmatprep.subr.mxu0 0.0
    %5353 = vmatpush1.msra.mxu0 0.0
    %5354 = vmatprep.subr.mxu0 0.0
    %5355 = vmatpush1.msra.mxu0 0.0
    %5356 = vmatprep.subr.mxu0 0.0
    %5357 = vmatpush1.msra.mxu0 0.0
    %5358 = vmatprep.subr.mxu0 0.0
    %5359 = vmatpush1.msra.mxu0 0.0
    %5360 = vmatprep.subr.mxu0 0.0
    %5361 = vmatpush1.msra.mxu0 0.0
    %5362 = vmatprep.subr.mxu0 0.0
    %5363 = vmatpush1.msra.mxu0 0.0
    %5364 = vmatprep.subr.mxu0 0.0
    %5365 = vmatpush1.msra.mxu0 0.0
    %5366 = vmatprep.subr.mxu0 0.0
    %5367 = vmatpush1.msra.mxu0 0.0
    %5368 = vmatprep.mubr.f32.mxu0 0.0
    %5369 = vmatmul.mubr.f32.gmra.mrb[0].mxu0 %v5299
    %v5370 = vpop.f32.mrb[0].mxu0
    %v5371 = vadd.f32 %v5297, %v5370
    %v5372 = vpop.f32.mrb[0].mxu0
    %5373 = vmatprep.mubr.f32.mxu0 0.0
    %5374 = vmatmul.mubr.f32.gmra.mrb[0].mxu0 %v5302
    %v5375 = vpop.f32.mrb[0].mxu0
    %v5376 = vadd.f32 %v5297, %v5375
    %v5377 = vpop.f32.mrb[0].mxu0
    %5378 = vdwg.mxu0
    %v5379 = vmax.f32 %v5371, 0.0
    %v5380 = vmax.f32 %v5376, 0.0
    %v5381 = vld [vmem:[#allocation2 + $0x218] sm:$0xff]
    %v5382 = vld [vmem:[#allocation2 + $0x220] sm:$0xff]
    %v5383 = vld [vmem:[#allocation2 + $0x228] sm:$0xff]
    %v5384 = vld [vmem:[#allocation2 + $0x230] sm:$0xff]
    %v5385 = vld [vmem:[#allocation2 + $0x290] sm:$0x1]
    %v5386 = vlaneseq
    %v5387 = vshrl.u32 %v5386, 7
    %v5388 = vsub.s32 0, %v5387
    %v5389 = vrot.slane %v5385, %v5388
    %v5391 = vsel %vm149, %v5379, 0
    %v5394 = vsel %vm149, %v5380, 0
    %5396 = vmatprep.subr.mxu0 0.0
    %5397 = vmatpush1.msra.mxu0 %v5381
    %5398 = vmatprep.subr.mxu0 0.0
    %5399 = vmatpush1.msra.mxu0 %v5382
    %5400 = vmatprep.subr.mxu0 0.0
    %5401 = vmatpush1.msra.mxu0 %v5383
    %5402 = vmatprep.subr.mxu0 0.0
    %5403 = vmatpush1.msra.mxu0 %v5384
    %5404 = vmatprep.subr.mxu0 0.0
    %5405 = vmatpush1.msra.mxu0 0.0
    %5406 = vmatprep.subr.mxu0 0.0
    %5407 = vmatpush1.msra.mxu0 0.0
    %5408 = vmatprep.subr.mxu0 0.0
    %5409 = vmatpush1.msra.mxu0 0.0
    %5410 = vmatprep.subr.mxu0 0.0
    %5411 = vmatpush1.msra.mxu0 0.0
    %5412 = vmatprep.subr.mxu0 0.0
    %5413 = vmatpush1.msra.mxu0 0.0
    %5414 = vmatprep.subr.mxu0 0.0
    %5415 = vmatpush1.msra.mxu0 0.0
    %5416 = vmatprep.subr.mxu0 0.0
    %5417 = vmatpush1.msra.mxu0 0.0
    %5418 = vmatprep.subr.mxu0 0.0
    %5419 = vmatpush1.msra.mxu0 0.0
    %5420 = vmatprep.subr.mxu0 0.0
    %5421 = vmatpush1.msra.mxu0 0.0
    %5422 = vmatprep.subr.mxu0 0.0
    %5423 = vmatpush1.msra.mxu0 0.0
    %5424 = vmatprep.subr.mxu0 0.0
    %5425 = vmatpush1.msra.mxu0 0.0
    %5426 = vmatprep.subr.mxu0 0.0
    %5427 = vmatpush1.msra.mxu0 0.0
    %5428 = vmatprep.subr.mxu0 0.0
    %5429 = vmatpush1.msra.mxu0 0.0
    %5430 = vmatprep.subr.mxu0 0.0
    %5431 = vmatpush1.msra.mxu0 0.0
    %5432 = vmatprep.subr.mxu0 0.0
    %5433 = vmatpush1.msra.mxu0 0.0
    %5434 = vmatprep.subr.mxu0 0.0
    %5435 = vmatpush1.msra.mxu0 0.0
    %5436 = vmatprep.subr.mxu0 0.0
    %5437 = vmatpush1.msra.mxu0 0.0
    %5438 = vmatprep.subr.mxu0 0.0
    %5439 = vmatpush1.msra.mxu0 0.0
    %5440 = vmatprep.subr.mxu0 0.0
    %5441 = vmatpush1.msra.mxu0 0.0
    %5442 = vmatprep.subr.mxu0 0.0
    %5443 = vmatpush1.msra.mxu0 0.0
    %5444 = vmatprep.subr.mxu0 0.0
    %5445 = vmatpush1.msra.mxu0 0.0
    %5446 = vmatprep.subr.mxu0 0.0
    %5447 = vmatpush1.msra.mxu0 0.0
    %5448 = vmatprep.subr.mxu0 0.0
    %5449 = vmatpush1.msra.mxu0 0.0
    %5450 = vmatprep.subr.mxu0 0.0
    %5451 = vmatpush1.msra.mxu0 0.0
    %5452 = vmatprep.subr.mxu0 0.0
    %5453 = vmatpush1.msra.mxu0 0.0
    %5454 = vmatprep.subr.mxu0 0.0
    %5455 = vmatpush1.msra.mxu0 0.0
    %5456 = vmatprep.subr.mxu0 0.0
    %5457 = vmatpush1.msra.mxu0 0.0
    %5458 = vmatprep.subr.mxu0 0.0
    %5459 = vmatpush1.msra.mxu0 0.0
    %5460 = vmatprep.mubr.f32.mxu0 0.0
    %5461 = vmatmul.mubr.f32.gmra.mrb[0].mxu0 %v5391
    %v5462 = vpop.f32.mrb[0].mxu0
    %v5463 = vadd.f32 %v5389, %v5462
    %v5464 = vpop.f32.mrb[0].mxu0
    %5465 = vmatprep.mubr.f32.mxu0 0.0
    %5466 = vmatmul.mubr.f32.gmra.mrb[0].mxu0 %v5394
    %v5467 = vpop.f32.mrb[0].mxu0
    %v5468 = vadd.f32 %v5389, %v5467
    %v5469 = vpop.f32.mrb[0].mxu0
    %5470 = vdwg.mxu0
    %5471 = vst [vmem:[%s2] sm:$0xff] %v5463
    %5472 = vst [vmem:[%s2 + $0x8] sm:$0xff] %v5468
    // Predicated region
    $region14: #{attn_rnn_model_forward.1} parent=1 // pred_check
      _
    $region15: #{attn_rnn_model_forward.1} parent=1 // pred_check_branch
      %5474 = sbr.rel (0) target = $region17
    $region16: #{attn_rnn_model_forward.1} parent=1 // pred_region
      _
    $region17: #{attn_rnn_model_forward.1} parent=1 // pred_fallthru
      _
    // Predicated region
    $region18: #{attn_rnn_model_forward.1} parent=1 // pred_check
      _
    $region19: #{attn_rnn_model_forward.1} parent=1 // pred_check_branch
      %5476 = sbr.rel (0) target = $region21
    $region20: #{attn_rnn_model_forward.1} parent=1 // pred_region
      _
    $region21: #{attn_rnn_model_forward.1} parent=1 // pred_fallthru
      _
    %5477 = vsyncpa [#allocation3], 1

</llo_original>
